<compile_context>
chip_gen: v7x
topology: tpu7x:2x2x1
jax: 0.10.0
libtpu: 0.0.40
codegen_flags: <defaults>
</compile_context>

<pallas_src>
import functools

import jax
import jax.numpy as jnp
import numpy as np
from jax.experimental import pallas as pl
from jax.experimental.pallas import tpu as pltpu


def _pick_time_tile(Lt):
    """Largest lane-dense time tile that still gives >= 2 grid steps."""
    for tt in (2048, 1024, 512, 256, 128):
        if pl.cdiv(Lt, tt) >= 2:
            return tt
    return 128          # tiny inputs: one zero-padded tile


def temporal_block(x, params, *, kernel_size, dilation, padding, stride=1):
    """x: (N, C, L) float32 (PyTorch NCL), params in torch shapes.
    Returns (N, C, Lt) with Lt = L + padding - dilation*(kernel_size-1)."""
    assert stride == 1  # TODO(synk): stride>1 + Chomp1d causality not implemented
    w_conv, b_conv, w_in, b_in, w_out, b_out, w_lin, b_lin, alpha = params
    N, C, L = x.shape
    Ks, dil, p = kernel_size, dilation, padding
    halo = dil * (Ks - 1)
    Lt = L + p - halo
    Cout = w_lin.shape[0]
    assert Lt > 0 and p >= 1 and w_conv.shape == (C, 1, Ks) and Cout == C

    # ---- trace-time parameter algebra (zero per-tile cost) ------------------
    wc = w_conv.reshape(C, Ks)                        # depthwise taps (C, Ks)
    wq, wk, wv = w_in[:C], w_in[C:2 * C], w_in[2 * C:]
    bq, bk, bv = b_in[:C], b_in[C:2 * C], b_in[2 * C:]
    # conv output only feeds the MHA -> fold its bias into the projections
    bq = bq + wq @ b_conv
    bk = bk + wk @ b_conv
    bv = bv + wv @ b_conv
    # no nonlinearity between MHA out_proj and nn.Linear -> fuse them
    wf = w_lin @ w_out
    bf = w_lin @ b_out + b_lin
    # two packed parameter operands instead of 12 tiny BlockSpec streams
    w_stack = jnp.concatenate([wq, wk, wv, wf], axis=0)            # (4C, C)
    p_stack = jnp.concatenate(
        [wc, bq[:, None], bk[:, None], bv[:, None], bf[:, None], alpha[:, None]],
        axis=1)                                                    # (C, Ks+5)

    # ---- time tiling ---------------------------------------------------------
    TH = 128                                          # halo block = one lane tile
    assert halo <= TH, "dilation*(kernel_size-1) must be <= 128"
    Tt = _pick_time_tile(Lt)
    G = pl.cdiv(Lt, Tt)
    r = Tt // TH
    Tpad = G * Tt + TH
    # single pad (causal left padding + right alignment zeros); no transposes.
    xp = jnp.pad(x, ((0, 0), (0, 0), (p, Tpad - p - L)))

    def kernel(xm_ref, xh_ref, w_ref, p_ref, out_ref):
        # Per-tile constants, hoisted so broadcasts are built once and reused
        # across all N batch rows (JAX does not CSE broadcast_in_dim).
        taps = [jnp.broadcast_to(p_ref[:, k:k + 1], (C, Tt)) for k in range(Ks)]
        bq_b = jnp.broadcast_to(p_ref[:, Ks + 0:Ks + 1], (C, Tt))
        bk_b = jnp.broadcast_to(p_ref[:, Ks + 1:Ks + 2], (C, Tt))
        bv_b = jnp.broadcast_to(p_ref[:, Ks + 2:Ks + 3], (C, Tt))
        bf_b = jnp.broadcast_to(p_ref[:, Ks + 3:Ks + 4], (Cout, Tt))
        al_b = jnp.broadcast_to(p_ref[:, Ks + 4:Ks + 5], (Cout, Tt))
        wq_m = w_ref[0 * C:1 * C, :]
        wk_m = w_ref[1 * C:2 * C, :]
        wv_m = w_ref[2 * C:3 * C, :]
        wf_m = w_ref[3 * C:4 * C, :]

        def mm(w, m):                                  # (C,C)@(C,Tt) on the MXU
            return jnp.dot(w, m, preferred_element_type=jnp.float32)

        # -- depthwise causal conv (+chomp folded into indexing) + q/k/v ------
        # All math stays in (channels-on-sublanes, time-on-lanes) layout:
        # no transposes anywhere in the kernel.  N is small -> static unroll.
        qs, ks, vs = [], [], []
        for n in range(N):
            xc = jnp.concatenate([xm_ref[n], xh_ref[n]], axis=-1)  # (C, Tt+TH)
            hn = taps[0] * xc[:, :Tt]
            for k in range(1, Ks):
                hn = hn + taps[k] * xc[:, k * dil:k * dil + Tt]
            qs.append(mm(wq_m, hn) + bq_b)
            ks.append(mm(wk_m, hn) + bk_b)
            vs.append(mm(wv_m, hn) + bv_b)

        # -- MHA: embed=C, heads=C => head_dim=1, scale=1; softmax over seq=N --
        # Online softmax over keys: intermediates are O(C*Tt), never (N,N,C,Tt).
        for nq in range(N):
            m = qs[nq] * ks[0]
            num = vs[0]                                # exp(0) == 1
            den = jnp.ones_like(m)
            for nk in range(1, N):
                s = qs[nq] * ks[nk]
                m_new = jnp.maximum(m, s)
                corr = jnp.exp(m - m_new)
                e = jnp.exp(s - m_new)
                den = den * corr + e
                num = num * corr + e * vs[nk]
                m = m_new
            attn = num / den                           # exact divide (parity)
            # fused out_proj∘linear + PReLU, stored lane-dense in NCL layout
            y = mm(wf_m, attn) + bf_b                  # (Cout, Tt)
            out_ref[nq] = jnp.where(y > 0.0, y, al_b * y)

    # ---- cost estimate & VMEM budget derived from the tile footprint --------
    Tproc = G * Tt
    cost = pl.CostEstimate(
        flops=int(N * Tproc * (2 * Ks * C + 8 * C * C + 8 * N * C)),
        transcendentals=int(2 * N * max(N - 1, 0) * C * Tproc),
        bytes_accessed=int(4 * (N * C * Tpad + N * C * TH * G + N * Cout * Tproc)
                           + 4 * (w_stack.size + p_stack.size)))
    block_bytes = 4 * (N * C * Tt + N * C * TH + N * Cout * Tt)
    work_bytes = 4 * C * Tt * (3 * N + 8)              # q/k/v slabs + temporaries
    vmem_limit = int(min(32 * 1024 * 1024,
                         max(8 * 1024 * 1024,
                             2 * block_bytes + work_bytes + (1 << 20))))

    out = pl.pallas_call(
        kernel,
        out_shape=jax.ShapeDtypeStruct((N, Cout, G * Tt), jnp.float32),
        grid=(G,),
        in_specs=[
            pl.BlockSpec((N, C, Tt), lambda i: (0, 0, i)),              # main tile
            pl.BlockSpec((N, C, TH), lambda i: (0, 0, (i + 1) * r)),    # right halo
            pl.BlockSpec(w_stack.shape, lambda i: (0, 0)),              # weights
            pl.BlockSpec(p_stack.shape, lambda i: (0, 0)),              # taps/biases
        ],
        out_specs=pl.BlockSpec((N, Cout, Tt), lambda i: (0, 0, i)),
        compiler_params=pltpu.CompilerParams(
            dimension_semantics=("parallel",),
            vmem_limit_bytes=vmem_limit),
        cost_estimate=cost,
    )(xp, xp, w_stack, p_stack)

    return out if G * Tt == Lt else out[:, :, :Lt]


def temporal_block_ref(x, params, *, kernel_size, dilation, padding):
    """Pure-JAX reference mirroring the PyTorch math (torch param shapes)."""
    w_conv, b_conv, w_in, b_in, w_out, b_out, w_lin, b_lin, alpha = params
    N, C, L = x.shape
    Ks, d, p = kernel_size, dilation, padding
    Lt = L + p - d * (Ks - 1)
    xp = jnp.pad(x, ((0, 0), (0, 0), (p, p)))
    w = w_conv.reshape(C, Ks)
    h = sum(w[:, k][None, :, None] * xp[:, :, k * d:k * d + Lt] for k in range(Ks))
    h = h + b_conv[None, :, None]
    ht = jnp.transpose(h, (0, 2, 1))                   # (seq=N, batch=Lt, embed=C)
    qkv = jnp.einsum('nlc,dc->nld', ht, w_in) + b_in
    q, k, v = qkv[..., :C], qkv[..., C:2 * C], qkv[..., 2 * C:]
    s = q[:, None] * k[None]                           # (N, N, Lt, C); scale=1 (head_dim=1)
    pr = jax.nn.softmax(s, axis=1)
    o = jnp.sum(pr * v[None], axis=1)                  # (N, Lt, C)
    o = jnp.einsum('nlc,dc->nld', o, w_out) + b_out    # MHA out_proj
    y = jnp.einsum('nlc,dc->nld', o, w_lin) + b_lin    # nn.Linear
    y = jnp.where(y > 0, y, alpha * y)                 # PReLU per channel
    return jnp.transpose(y, (0, 2, 1))                 # back to (N, C, Lt)


def _make_params(key, C, Ks):
    ks = jax.random.split(key, 8)
    return (
        0.1 * jax.random.normal(ks[0], (C, 1, Ks), jnp.float32),   # conv1.weight
        0.1 * jax.random.normal(ks[1], (C,), jnp.float32),         # conv1.bias
        0.1 * jax.random.normal(ks[2], (3 * C, C), jnp.float32),   # MHA in_proj_weight
        0.1 * jax.random.normal(ks[3], (3 * C,), jnp.float32),     # MHA in_proj_bias
        0.1 * jax.random.normal(ks[4], (C, C), jnp.float32),       # MHA out_proj.weight
        jnp.zeros((C,), jnp.float32),                              # MHA out_proj.bias (torch init 0)
        0.1 * jax.random.normal(ks[5], (C, C), jnp.float32),       # linear.weight ~ N(0, 0.1)
        0.1 * jax.random.normal(ks[6], (C,), jnp.float32),         # linear.bias
        jnp.full((C,), 0.25, jnp.float32),                         # PReLU weight (init 0.25)
    )


if __name__ == "__main__":
    key = jax.random.PRNGKey(0)
    kp, kx1, kx2 = jax.random.split(key, 3)

    # n_inputs == n_outputs is required for the torch module's forward to be
    # shape-consistent (attention embed dim / PReLU channel count).
    C = 8
    Ks, stride, dilation = 3, 1, 2
    padding = dilation * (Ks - 1)                  # canonical causal setting
    params = _make_params(kp, C, Ks)

    fwd = jax.jit(functools.partial(
        temporal_block, kernel_size=Ks, dilation=dilation,
        padding=padding, stride=stride))
    ref = functools.partial(
        temporal_block_ref, kernel_size=Ks, dilation=dilation, padding=padding)

    # case 1: longer sequence -> Tt=512, G=2 pipelined / megacore-parallel tiles
    x1 = jax.random.normal(kx1, (4, C, 1024), jnp.float32)
    # case 2: tiny sequence -> single (zero-padded) 128-lane tile fallback path
    x2 = jax.random.normal(kx2, (2, C, 16), jnp.float32)

    for x in (x1, x2):
        out = jax.block_until_ready(fwd(x, params))
        expect = ref(x, params)
        assert out.shape == expect.shape
        # exact softmax divide now -> tighter tolerance than the approx-recip version
        np.testing.assert_allclose(np.asarray(out), np.asarray(expect),
                                   atol=1e-3, rtol=1e-3)

    print("KERNEL_OK")
</pallas_src>

<mosaic_0001>
module attributes {stable_mosaic.version = 11 : i64} {
  func.func @kernel(%arg0: i32, %arg1: memref<4x8x512xf32, #tpu.memory_space<vmem>>, %arg2: memref<4x8x128xf32, #tpu.memory_space<vmem>>, %arg3: memref<32x8xf32, #tpu.memory_space<vmem>>, %arg4: memref<8x8xf32, #tpu.memory_space<vmem>>, %arg5: memref<4x8x512xf32, #tpu.memory_space<vmem>>) attributes {dimension_semantics = [#tpu.dimension_semantics<parallel>], iteration_bounds = array<i64: 2>, scalar_prefetch = 0 : i64, scratch_operands = 0 : i64, tpu.core_type = #tpu.core_type<tc>, window_params = [{transform_indices = @transform_0, window_bounds = array<i64: 4, 8, 512>}, {transform_indices = @transform_1, window_bounds = array<i64: 4, 8, 128>}, {pipeline_mode = #tpu.pipeline_mode<synchronous>, transform_indices = @transform_2, window_bounds = array<i64: 32, 8>}, {pipeline_mode = #tpu.pipeline_mode<synchronous>, transform_indices = @transform_3, window_bounds = array<i64: 8, 8>}, {transform_indices = @transform_4, window_bounds = array<i64: 4, 8, 512>}]} {
    %c0 = arith.constant 0 : index
    %c0_0 = arith.constant 0 : index
    %0 = vector.load %arg4[%c0, %c0_0] : memref<8x8xf32, #tpu.memory_space<vmem>>, vector<8x1xf32>
    %1 = vector.shape_cast %0 : vector<8x1xf32> to vector<8x1xf32>
    %2 = vector.broadcast %1 : vector<8x1xf32> to vector<8x512xf32>
    %c0_1 = arith.constant 0 : index
    %c1 = arith.constant 1 : index
    %3 = vector.load %arg4[%c0_1, %c1] : memref<8x8xf32, #tpu.memory_space<vmem>>, vector<8x1xf32>
    %4 = vector.shape_cast %3 : vector<8x1xf32> to vector<8x1xf32>
    %5 = vector.broadcast %4 : vector<8x1xf32> to vector<8x512xf32>
    %c0_2 = arith.constant 0 : index
    %c2 = arith.constant 2 : index
    %6 = vector.load %arg4[%c0_2, %c2] : memref<8x8xf32, #tpu.memory_space<vmem>>, vector<8x1xf32>
    %7 = vector.shape_cast %6 : vector<8x1xf32> to vector<8x1xf32>
    %8 = vector.broadcast %7 : vector<8x1xf32> to vector<8x512xf32>
    %c0_3 = arith.constant 0 : index
    %c3 = arith.constant 3 : index
    %9 = vector.load %arg4[%c0_3, %c3] : memref<8x8xf32, #tpu.memory_space<vmem>>, vector<8x1xf32>
    %10 = vector.shape_cast %9 : vector<8x1xf32> to vector<8x1xf32>
    %11 = vector.broadcast %10 : vector<8x1xf32> to vector<8x512xf32>
    %c0_4 = arith.constant 0 : index
    %c4 = arith.constant 4 : index
    %12 = vector.load %arg4[%c0_4, %c4] : memref<8x8xf32, #tpu.memory_space<vmem>>, vector<8x1xf32>
    %13 = vector.shape_cast %12 : vector<8x1xf32> to vector<8x1xf32>
    %14 = vector.broadcast %13 : vector<8x1xf32> to vector<8x512xf32>
    %c0_5 = arith.constant 0 : index
    %c5 = arith.constant 5 : index
    %15 = vector.load %arg4[%c0_5, %c5] : memref<8x8xf32, #tpu.memory_space<vmem>>, vector<8x1xf32>
    %16 = vector.shape_cast %15 : vector<8x1xf32> to vector<8x1xf32>
    %17 = vector.broadcast %16 : vector<8x1xf32> to vector<8x512xf32>
    %c0_6 = arith.constant 0 : index
    %c6 = arith.constant 6 : index
    %18 = vector.load %arg4[%c0_6, %c6] : memref<8x8xf32, #tpu.memory_space<vmem>>, vector<8x1xf32>
    %19 = vector.shape_cast %18 : vector<8x1xf32> to vector<8x1xf32>
    %20 = vector.broadcast %19 : vector<8x1xf32> to vector<8x512xf32>
    %c0_7 = arith.constant 0 : index
    %c7 = arith.constant 7 : index
    %21 = vector.load %arg4[%c0_7, %c7] : memref<8x8xf32, #tpu.memory_space<vmem>>, vector<8x1xf32>
    %22 = vector.shape_cast %21 : vector<8x1xf32> to vector<8x1xf32>
    %23 = vector.broadcast %22 : vector<8x1xf32> to vector<8x512xf32>
    %c0_8 = arith.constant 0 : index
    %c0_9 = arith.constant 0 : index
    %24 = vector.load %arg3[%c0_8, %c0_9] : memref<32x8xf32, #tpu.memory_space<vmem>>, vector<8x8xf32>
    %c8 = arith.constant 8 : index
    %c0_10 = arith.constant 0 : index
    %25 = vector.load %arg3[%c8, %c0_10] : memref<32x8xf32, #tpu.memory_space<vmem>>, vector<8x8xf32>
    %c16 = arith.constant 16 : index
    %c0_11 = arith.constant 0 : index
    %26 = vector.load %arg3[%c16, %c0_11] : memref<32x8xf32, #tpu.memory_space<vmem>>, vector<8x8xf32>
    %c24 = arith.constant 24 : index
    %c0_12 = arith.constant 0 : index
    %27 = vector.load %arg3[%c24, %c0_12] : memref<32x8xf32, #tpu.memory_space<vmem>>, vector<8x8xf32>
    %c0_13 = arith.constant 0 : index
    %c0_14 = arith.constant 0 : index
    %c0_15 = arith.constant 0 : index
    %28 = vector.load %arg1[%c0_13, %c0_14, %c0_15] : memref<4x8x512xf32, #tpu.memory_space<vmem>>, vector<1x8x512xf32>
    %29 = vector.shape_cast %28 : vector<1x8x512xf32> to vector<8x512xf32>
    %c0_16 = arith.constant 0 : index
    %c0_17 = arith.constant 0 : index
    %c0_18 = arith.constant 0 : index
    %30 = vector.load %arg2[%c0_16, %c0_17, %c0_18] : memref<4x8x128xf32, #tpu.memory_space<vmem>>, vector<1x8x128xf32>
    %31 = vector.shape_cast %30 : vector<1x8x128xf32> to vector<8x128xf32>
    %32 = tpu.concatenate %29, %31 in 1 : vector<8x512xf32>, vector<8x128xf32> -> vector<8x640xf32>
    %33 = vector.extract_strided_slice %32 {offsets = [0, 0], sizes = [8, 512], strides = [1, 1]} : vector<8x640xf32> to vector<8x512xf32>
    %34 = arith.mulf %2, %33 : vector<8x512xf32>
    %35 = vector.extract_strided_slice %32 {offsets = [0, 2], sizes = [8, 512], strides = [1, 1]} : vector<8x640xf32> to vector<8x512xf32>
    %36 = arith.mulf %5, %35 : vector<8x512xf32>
    %37 = arith.addf %34, %36 : vector<8x512xf32>
    %38 = vector.extract_strided_slice %32 {offsets = [0, 4], sizes = [8, 512], strides = [1, 1]} : vector<8x640xf32> to vector<8x512xf32>
    %39 = arith.mulf %8, %38 : vector<8x512xf32>
    %40 = arith.addf %37, %39 : vector<8x512xf32>
    %cst = arith.constant dense<0.000000e+00> : vector<8x512xf32>
    %41 = tpu.matmul %24, %40, %cst {dimension_numbers = #tpu.dot_dimension_numbers<[1], [0], [0], [1], [0, 0, 1, 1], [], []>} : vector<8x8xf32>, vector<8x512xf32>, vector<8x512xf32> -> vector<8x512xf32>
    %42 = arith.addf %41, %11 : vector<8x512xf32>
    %cst_19 = arith.constant dense<0.000000e+00> : vector<8x512xf32>
    %43 = tpu.matmul %25, %40, %cst_19 {dimension_numbers = #tpu.dot_dimension_numbers<[1], [0], [0], [1], [0, 0, 1, 1], [], []>} : vector<8x8xf32>, vector<8x512xf32>, vector<8x512xf32> -> vector<8x512xf32>
    %44 = arith.addf %43, %14 : vector<8x512xf32>
    %cst_20 = arith.constant dense<0.000000e+00> : vector<8x512xf32>
    %45 = tpu.matmul %26, %40, %cst_20 {dimension_numbers = #tpu.dot_dimension_numbers<[1], [0], [0], [1], [0, 0, 1, 1], [], []>} : vector<8x8xf32>, vector<8x512xf32>, vector<8x512xf32> -> vector<8x512xf32>
    %46 = arith.addf %45, %17 : vector<8x512xf32>
    %c1_21 = arith.constant 1 : index
    %c0_22 = arith.constant 0 : index
    %c0_23 = arith.constant 0 : index
    %47 = vector.load %arg1[%c1_21, %c0_22, %c0_23] : memref<4x8x512xf32, #tpu.memory_space<vmem>>, vector<1x8x512xf32>
    %48 = vector.shape_cast %47 : vector<1x8x512xf32> to vector<8x512xf32>
    %c1_24 = arith.constant 1 : index
    %c0_25 = arith.constant 0 : index
    %c0_26 = arith.constant 0 : index
    %49 = vector.load %arg2[%c1_24, %c0_25, %c0_26] : memref<4x8x128xf32, #tpu.memory_space<vmem>>, vector<1x8x128xf32>
    %50 = vector.shape_cast %49 : vector<1x8x128xf32> to vector<8x128xf32>
    %51 = tpu.concatenate %48, %50 in 1 : vector<8x512xf32>, vector<8x128xf32> -> vector<8x640xf32>
    %52 = vector.extract_strided_slice %51 {offsets = [0, 0], sizes = [8, 512], strides = [1, 1]} : vector<8x640xf32> to vector<8x512xf32>
    %53 = arith.mulf %2, %52 : vector<8x512xf32>
    %54 = vector.extract_strided_slice %51 {offsets = [0, 2], sizes = [8, 512], strides = [1, 1]} : vector<8x640xf32> to vector<8x512xf32>
    %55 = arith.mulf %5, %54 : vector<8x512xf32>
    %56 = arith.addf %53, %55 : vector<8x512xf32>
    %57 = vector.extract_strided_slice %51 {offsets = [0, 4], sizes = [8, 512], strides = [1, 1]} : vector<8x640xf32> to vector<8x512xf32>
    %58 = arith.mulf %8, %57 : vector<8x512xf32>
    %59 = arith.addf %56, %58 : vector<8x512xf32>
    %cst_27 = arith.constant dense<0.000000e+00> : vector<8x512xf32>
    %60 = tpu.matmul %24, %59, %cst_27 {dimension_numbers = #tpu.dot_dimension_numbers<[1], [0], [0], [1], [0, 0, 1, 1], [], []>} : vector<8x8xf32>, vector<8x512xf32>, vector<8x512xf32> -> vector<8x512xf32>
    %61 = arith.addf %60, %11 : vector<8x512xf32>
    %cst_28 = arith.constant dense<0.000000e+00> : vector<8x512xf32>
    %62 = tpu.matmul %25, %59, %cst_28 {dimension_numbers = #tpu.dot_dimension_numbers<[1], [0], [0], [1], [0, 0, 1, 1], [], []>} : vector<8x8xf32>, vector<8x512xf32>, vector<8x512xf32> -> vector<8x512xf32>
    %63 = arith.addf %62, %14 : vector<8x512xf32>
    %cst_29 = arith.constant dense<0.000000e+00> : vector<8x512xf32>
    %64 = tpu.matmul %26, %59, %cst_29 {dimension_numbers = #tpu.dot_dimension_numbers<[1], [0], [0], [1], [0, 0, 1, 1], [], []>} : vector<8x8xf32>, vector<8x512xf32>, vector<8x512xf32> -> vector<8x512xf32>
    %65 = arith.addf %64, %17 : vector<8x512xf32>
    %c2_30 = arith.constant 2 : index
    %c0_31 = arith.constant 0 : index
    %c0_32 = arith.constant 0 : index
    %66 = vector.load %arg1[%c2_30, %c0_31, %c0_32] : memref<4x8x512xf32, #tpu.memory_space<vmem>>, vector<1x8x512xf32>
    %67 = vector.shape_cast %66 : vector<1x8x512xf32> to vector<8x512xf32>
    %c2_33 = arith.constant 2 : index
    %c0_34 = arith.constant 0 : index
    %c0_35 = arith.constant 0 : index
    %68 = vector.load %arg2[%c2_33, %c0_34, %c0_35] : memref<4x8x128xf32, #tpu.memory_space<vmem>>, vector<1x8x128xf32>
    %69 = vector.shape_cast %68 : vector<1x8x128xf32> to vector<8x128xf32>
    %70 = tpu.concatenate %67, %69 in 1 : vector<8x512xf32>, vector<8x128xf32> -> vector<8x640xf32>
    %71 = vector.extract_strided_slice %70 {offsets = [0, 0], sizes = [8, 512], strides = [1, 1]} : vector<8x640xf32> to vector<8x512xf32>
    %72 = arith.mulf %2, %71 : vector<8x512xf32>
    %73 = vector.extract_strided_slice %70 {offsets = [0, 2], sizes = [8, 512], strides = [1, 1]} : vector<8x640xf32> to vector<8x512xf32>
    %74 = arith.mulf %5, %73 : vector<8x512xf32>
    %75 = arith.addf %72, %74 : vector<8x512xf32>
    %76 = vector.extract_strided_slice %70 {offsets = [0, 4], sizes = [8, 512], strides = [1, 1]} : vector<8x640xf32> to vector<8x512xf32>
    %77 = arith.mulf %8, %76 : vector<8x512xf32>
    %78 = arith.addf %75, %77 : vector<8x512xf32>
    %cst_36 = arith.constant dense<0.000000e+00> : vector<8x512xf32>
    %79 = tpu.matmul %24, %78, %cst_36 {dimension_numbers = #tpu.dot_dimension_numbers<[1], [0], [0], [1], [0, 0, 1, 1], [], []>} : vector<8x8xf32>, vector<8x512xf32>, vector<8x512xf32> -> vector<8x512xf32>
    %80 = arith.addf %79, %11 : vector<8x512xf32>
    %cst_37 = arith.constant dense<0.000000e+00> : vector<8x512xf32>
    %81 = tpu.matmul %25, %78, %cst_37 {dimension_numbers = #tpu.dot_dimension_numbers<[1], [0], [0], [1], [0, 0, 1, 1], [], []>} : vector<8x8xf32>, vector<8x512xf32>, vector<8x512xf32> -> vector<8x512xf32>
    %82 = arith.addf %81, %14 : vector<8x512xf32>
    %cst_38 = arith.constant dense<0.000000e+00> : vector<8x512xf32>
    %83 = tpu.matmul %26, %78, %cst_38 {dimension_numbers = #tpu.dot_dimension_numbers<[1], [0], [0], [1], [0, 0, 1, 1], [], []>} : vector<8x8xf32>, vector<8x512xf32>, vector<8x512xf32> -> vector<8x512xf32>
    %84 = arith.addf %83, %17 : vector<8x512xf32>
    %c3_39 = arith.constant 3 : index
    %c0_40 = arith.constant 0 : index
    %c0_41 = arith.constant 0 : index
    %85 = vector.load %arg1[%c3_39, %c0_40, %c0_41] : memref<4x8x512xf32, #tpu.memory_space<vmem>>, vector<1x8x512xf32>
    %86 = vector.shape_cast %85 : vector<1x8x512xf32> to vector<8x512xf32>
    %c3_42 = arith.constant 3 : index
    %c0_43 = arith.constant 0 : index
    %c0_44 = arith.constant 0 : index
    %87 = vector.load %arg2[%c3_42, %c0_43, %c0_44] : memref<4x8x128xf32, #tpu.memory_space<vmem>>, vector<1x8x128xf32>
    %88 = vector.shape_cast %87 : vector<1x8x128xf32> to vector<8x128xf32>
    %89 = tpu.concatenate %86, %88 in 1 : vector<8x512xf32>, vector<8x128xf32> -> vector<8x640xf32>
    %90 = vector.extract_strided_slice %89 {offsets = [0, 0], sizes = [8, 512], strides = [1, 1]} : vector<8x640xf32> to vector<8x512xf32>
    %91 = arith.mulf %2, %90 : vector<8x512xf32>
    %92 = vector.extract_strided_slice %89 {offsets = [0, 2], sizes = [8, 512], strides = [1, 1]} : vector<8x640xf32> to vector<8x512xf32>
    %93 = arith.mulf %5, %92 : vector<8x512xf32>
    %94 = arith.addf %91, %93 : vector<8x512xf32>
    %95 = vector.extract_strided_slice %89 {offsets = [0, 4], sizes = [8, 512], strides = [1, 1]} : vector<8x640xf32> to vector<8x512xf32>
    %96 = arith.mulf %8, %95 : vector<8x512xf32>
    %97 = arith.addf %94, %96 : vector<8x512xf32>
    %cst_45 = arith.constant dense<0.000000e+00> : vector<8x512xf32>
    %98 = tpu.matmul %24, %97, %cst_45 {dimension_numbers = #tpu.dot_dimension_numbers<[1], [0], [0], [1], [0, 0, 1, 1], [], []>} : vector<8x8xf32>, vector<8x512xf32>, vector<8x512xf32> -> vector<8x512xf32>
    %99 = arith.addf %98, %11 : vector<8x512xf32>
    %cst_46 = arith.constant dense<0.000000e+00> : vector<8x512xf32>
    %100 = tpu.matmul %25, %97, %cst_46 {dimension_numbers = #tpu.dot_dimension_numbers<[1], [0], [0], [1], [0, 0, 1, 1], [], []>} : vector<8x8xf32>, vector<8x512xf32>, vector<8x512xf32> -> vector<8x512xf32>
    %101 = arith.addf %100, %14 : vector<8x512xf32>
    %cst_47 = arith.constant dense<0.000000e+00> : vector<8x512xf32>
    %102 = tpu.matmul %26, %97, %cst_47 {dimension_numbers = #tpu.dot_dimension_numbers<[1], [0], [0], [1], [0, 0, 1, 1], [], []>} : vector<8x8xf32>, vector<8x512xf32>, vector<8x512xf32> -> vector<8x512xf32>
    %103 = arith.addf %102, %17 : vector<8x512xf32>
    %104 = arith.mulf %42, %44 : vector<8x512xf32>
    %cst_48 = arith.constant 1.000000e+00 : f32
    %105 = vector.broadcast %cst_48 : f32 to vector<8x512xf32>
    %106 = arith.mulf %42, %63 : vector<8x512xf32>
    %107 = arith.maximumf %104, %106 : vector<8x512xf32>
    %108 = arith.subf %104, %107 : vector<8x512xf32>
    %109 = math.exp %108 : vector<8x512xf32>
    %110 = arith.subf %106, %107 : vector<8x512xf32>
    %111 = math.exp %110 : vector<8x512xf32>
    %112 = arith.mulf %105, %109 : vector<8x512xf32>
    %113 = arith.addf %112, %111 : vector<8x512xf32>
    %114 = arith.mulf %46, %109 : vector<8x512xf32>
    %115 = arith.mulf %111, %65 : vector<8x512xf32>
    %116 = arith.addf %114, %115 : vector<8x512xf32>
    %117 = arith.mulf %42, %82 : vector<8x512xf32>
    %118 = arith.maximumf %107, %117 : vector<8x512xf32>
    %119 = arith.subf %107, %118 : vector<8x512xf32>
    %120 = math.exp %119 : vector<8x512xf32>
    %121 = arith.subf %117, %118 : vector<8x512xf32>
    %122 = math.exp %121 : vector<8x512xf32>
    %123 = arith.mulf %113, %120 : vector<8x512xf32>
    %124 = arith.addf %123, %122 : vector<8x512xf32>
    %125 = arith.mulf %116, %120 : vector<8x512xf32>
    %126 = arith.mulf %122, %84 : vector<8x512xf32>
    %127 = arith.addf %125, %126 : vector<8x512xf32>
    %128 = arith.mulf %42, %101 : vector<8x512xf32>
    %129 = arith.maximumf %118, %128 : vector<8x512xf32>
    %130 = arith.subf %118, %129 : vector<8x512xf32>
    %131 = math.exp %130 : vector<8x512xf32>
    %132 = arith.subf %128, %129 : vector<8x512xf32>
    %133 = math.exp %132 : vector<8x512xf32>
    %134 = arith.mulf %124, %131 : vector<8x512xf32>
    %135 = arith.addf %134, %133 : vector<8x512xf32>
    %136 = arith.mulf %127, %131 : vector<8x512xf32>
    %137 = arith.mulf %133, %103 : vector<8x512xf32>
    %138 = arith.addf %136, %137 : vector<8x512xf32>
    %139 = arith.divf %138, %135 : vector<8x512xf32>
    %cst_49 = arith.constant dense<0.000000e+00> : vector<8x512xf32>
    %140 = tpu.matmul %27, %139, %cst_49 {dimension_numbers = #tpu.dot_dimension_numbers<[1], [0], [0], [1], [0, 0, 1, 1], [], []>} : vector<8x8xf32>, vector<8x512xf32>, vector<8x512xf32> -> vector<8x512xf32>
    %141 = arith.addf %140, %20 : vector<8x512xf32>
    %cst_50 = arith.constant 0.000000e+00 : f32
    %142 = vector.broadcast %cst_50 : f32 to vector<8x512xf32>
    %143 = arith.cmpf ogt, %141, %142 : vector<8x512xf32>
    %144 = arith.mulf %23, %141 : vector<8x512xf32>
    %145 = arith.select %143, %141, %144 : vector<8x512xi1>, vector<8x512xf32>
    %c0_51 = arith.constant 0 : index
    %c0_52 = arith.constant 0 : index
    %c0_53 = arith.constant 0 : index
    %146 = vector.load %arg5[%c0_51, %c0_52, %c0_53] : memref<4x8x512xf32, #tpu.memory_space<vmem>>, vector<1x8x512xf32>
    %147 = vector.shape_cast %146 : vector<1x8x512xf32> to vector<8x512xf32>
    %148 = vector.shape_cast %145 : vector<8x512xf32> to vector<1x8x512xf32>
    tpu.vector_store %arg5[%c0_51, %c0_52, %c0_53], %148 {strides = array<i32>} : memref<4x8x512xf32, #tpu.memory_space<vmem>>, vector<1x8x512xf32>,
    %149 = arith.mulf %61, %44 : vector<8x512xf32>
    %cst_54 = arith.constant 1.000000e+00 : f32
    %150 = vector.broadcast %cst_54 : f32 to vector<8x512xf32>
    %151 = arith.mulf %61, %63 : vector<8x512xf32>
    %152 = arith.maximumf %149, %151 : vector<8x512xf32>
    %153 = arith.subf %149, %152 : vector<8x512xf32>
    %154 = math.exp %153 : vector<8x512xf32>
    %155 = arith.subf %151, %152 : vector<8x512xf32>
    %156 = math.exp %155 : vector<8x512xf32>
    %157 = arith.mulf %150, %154 : vector<8x512xf32>
    %158 = arith.addf %157, %156 : vector<8x512xf32>
    %159 = arith.mulf %46, %154 : vector<8x512xf32>
    %160 = arith.mulf %156, %65 : vector<8x512xf32>
    %161 = arith.addf %159, %160 : vector<8x512xf32>
    %162 = arith.mulf %61, %82 : vector<8x512xf32>
    %163 = arith.maximumf %152, %162 : vector<8x512xf32>
    %164 = arith.subf %152, %163 : vector<8x512xf32>
    %165 = math.exp %164 : vector<8x512xf32>
    %166 = arith.subf %162, %163 : vector<8x512xf32>
    %167 = math.exp %166 : vector<8x512xf32>
    %168 = arith.mulf %158, %165 : vector<8x512xf32>
    %169 = arith.addf %168, %167 : vector<8x512xf32>
    %170 = arith.mulf %161, %165 : vector<8x512xf32>
    %171 = arith.mulf %167, %84 : vector<8x512xf32>
    %172 = arith.addf %170, %171 : vector<8x512xf32>
    %173 = arith.mulf %61, %101 : vector<8x512xf32>
    %174 = arith.maximumf %163, %173 : vector<8x512xf32>
    %175 = arith.subf %163, %174 : vector<8x512xf32>
    %176 = math.exp %175 : vector<8x512xf32>
    %177 = arith.subf %173, %174 : vector<8x512xf32>
    %178 = math.exp %177 : vector<8x512xf32>
    %179 = arith.mulf %169, %176 : vector<8x512xf32>
    %180 = arith.addf %179, %178 : vector<8x512xf32>
    %181 = arith.mulf %172, %176 : vector<8x512xf32>
    %182 = arith.mulf %178, %103 : vector<8x512xf32>
    %183 = arith.addf %181, %182 : vector<8x512xf32>
    %184 = arith.divf %183, %180 : vector<8x512xf32>
    %cst_55 = arith.constant dense<0.000000e+00> : vector<8x512xf32>
    %185 = tpu.matmul %27, %184, %cst_55 {dimension_numbers = #tpu.dot_dimension_numbers<[1], [0], [0], [1], [0, 0, 1, 1], [], []>} : vector<8x8xf32>, vector<8x512xf32>, vector<8x512xf32> -> vector<8x512xf32>
    %186 = arith.addf %185, %20 : vector<8x512xf32>
    %cst_56 = arith.constant 0.000000e+00 : f32
    %187 = vector.broadcast %cst_56 : f32 to vector<8x512xf32>
    %188 = arith.cmpf ogt, %186, %187 : vector<8x512xf32>
    %189 = arith.mulf %23, %186 : vector<8x512xf32>
    %190 = arith.select %188, %186, %189 : vector<8x512xi1>, vector<8x512xf32>
    %c1_57 = arith.constant 1 : index
    %c0_58 = arith.constant 0 : index
    %c0_59 = arith.constant 0 : index
    %191 = vector.load %arg5[%c1_57, %c0_58, %c0_59] : memref<4x8x512xf32, #tpu.memory_space<vmem>>, vector<1x8x512xf32>
    %192 = vector.shape_cast %191 : vector<1x8x512xf32> to vector<8x512xf32>
    %193 = vector.shape_cast %190 : vector<8x512xf32> to vector<1x8x512xf32>
    tpu.vector_store %arg5[%c1_57, %c0_58, %c0_59], %193 {strides = array<i32>} : memref<4x8x512xf32, #tpu.memory_space<vmem>>, vector<1x8x512xf32>,
    %194 = arith.mulf %80, %44 : vector<8x512xf32>
    %cst_60 = arith.constant 1.000000e+00 : f32
    %195 = vector.broadcast %cst_60 : f32 to vector<8x512xf32>
    %196 = arith.mulf %80, %63 : vector<8x512xf32>
    %197 = arith.maximumf %194, %196 : vector<8x512xf32>
    %198 = arith.subf %194, %197 : vector<8x512xf32>
    %199 = math.exp %198 : vector<8x512xf32>
    %200 = arith.subf %196, %197 : vector<8x512xf32>
    %201 = math.exp %200 : vector<8x512xf32>
    %202 = arith.mulf %195, %199 : vector<8x512xf32>
    %203 = arith.addf %202, %201 : vector<8x512xf32>
    %204 = arith.mulf %46, %199 : vector<8x512xf32>
    %205 = arith.mulf %201, %65 : vector<8x512xf32>
    %206 = arith.addf %204, %205 : vector<8x512xf32>
    %207 = arith.mulf %80, %82 : vector<8x512xf32>
    %208 = arith.maximumf %197, %207 : vector<8x512xf32>
    %209 = arith.subf %197, %208 : vector<8x512xf32>
    %210 = math.exp %209 : vector<8x512xf32>
    %211 = arith.subf %207, %208 : vector<8x512xf32>
    %212 = math.exp %211 : vector<8x512xf32>
    %213 = arith.mulf %203, %210 : vector<8x512xf32>
    %214 = arith.addf %213, %212 : vector<8x512xf32>
    %215 = arith.mulf %206, %210 : vector<8x512xf32>
    %216 = arith.mulf %212, %84 : vector<8x512xf32>
    %217 = arith.addf %215, %216 : vector<8x512xf32>
    %218 = arith.mulf %80, %101 : vector<8x512xf32>
    %219 = arith.maximumf %208, %218 : vector<8x512xf32>
    %220 = arith.subf %208, %219 : vector<8x512xf32>
    %221 = math.exp %220 : vector<8x512xf32>
    %222 = arith.subf %218, %219 : vector<8x512xf32>
    %223 = math.exp %222 : vector<8x512xf32>
    %224 = arith.mulf %214, %221 : vector<8x512xf32>
    %225 = arith.addf %224, %223 : vector<8x512xf32>
    %226 = arith.mulf %217, %221 : vector<8x512xf32>
    %227 = arith.mulf %223, %103 : vector<8x512xf32>
    %228 = arith.addf %226, %227 : vector<8x512xf32>
    %229 = arith.divf %228, %225 : vector<8x512xf32>
    %cst_61 = arith.constant dense<0.000000e+00> : vector<8x512xf32>
    %230 = tpu.matmul %27, %229, %cst_61 {dimension_numbers = #tpu.dot_dimension_numbers<[1], [0], [0], [1], [0, 0, 1, 1], [], []>} : vector<8x8xf32>, vector<8x512xf32>, vector<8x512xf32> -> vector<8x512xf32>
    %231 = arith.addf %230, %20 : vector<8x512xf32>
    %cst_62 = arith.constant 0.000000e+00 : f32
    %232 = vector.broadcast %cst_62 : f32 to vector<8x512xf32>
    %233 = arith.cmpf ogt, %231, %232 : vector<8x512xf32>
    %234 = arith.mulf %23, %231 : vector<8x512xf32>
    %235 = arith.select %233, %231, %234 : vector<8x512xi1>, vector<8x512xf32>
    %c2_63 = arith.constant 2 : index
    %c0_64 = arith.constant 0 : index
    %c0_65 = arith.constant 0 : index
    %236 = vector.load %arg5[%c2_63, %c0_64, %c0_65] : memref<4x8x512xf32, #tpu.memory_space<vmem>>, vector<1x8x512xf32>
    %237 = vector.shape_cast %236 : vector<1x8x512xf32> to vector<8x512xf32>
    %238 = vector.shape_cast %235 : vector<8x512xf32> to vector<1x8x512xf32>
    tpu.vector_store %arg5[%c2_63, %c0_64, %c0_65], %238 {strides = array<i32>} : memref<4x8x512xf32, #tpu.memory_space<vmem>>, vector<1x8x512xf32>,
    %239 = arith.mulf %99, %44 : vector<8x512xf32>
    %cst_66 = arith.constant 1.000000e+00 : f32
    %240 = vector.broadcast %cst_66 : f32 to vector<8x512xf32>
    %241 = arith.mulf %99, %63 : vector<8x512xf32>
    %242 = arith.maximumf %239, %241 : vector<8x512xf32>
    %243 = arith.subf %239, %242 : vector<8x512xf32>
    %244 = math.exp %243 : vector<8x512xf32>
    %245 = arith.subf %241, %242 : vector<8x512xf32>
    %246 = math.exp %245 : vector<8x512xf32>
    %247 = arith.mulf %240, %244 : vector<8x512xf32>
    %248 = arith.addf %247, %246 : vector<8x512xf32>
    %249 = arith.mulf %46, %244 : vector<8x512xf32>
    %250 = arith.mulf %246, %65 : vector<8x512xf32>
    %251 = arith.addf %249, %250 : vector<8x512xf32>
    %252 = arith.mulf %99, %82 : vector<8x512xf32>
    %253 = arith.maximumf %242, %252 : vector<8x512xf32>
    %254 = arith.subf %242, %253 : vector<8x512xf32>
    %255 = math.exp %254 : vector<8x512xf32>
    %256 = arith.subf %252, %253 : vector<8x512xf32>
    %257 = math.exp %256 : vector<8x512xf32>
    %258 = arith.mulf %248, %255 : vector<8x512xf32>
    %259 = arith.addf %258, %257 : vector<8x512xf32>
    %260 = arith.mulf %251, %255 : vector<8x512xf32>
    %261 = arith.mulf %257, %84 : vector<8x512xf32>
    %262 = arith.addf %260, %261 : vector<8x512xf32>
    %263 = arith.mulf %99, %101 : vector<8x512xf32>
    %264 = arith.maximumf %253, %263 : vector<8x512xf32>
    %265 = arith.subf %253, %264 : vector<8x512xf32>
    %266 = math.exp %265 : vector<8x512xf32>
    %267 = arith.subf %263, %264 : vector<8x512xf32>
    %268 = math.exp %267 : vector<8x512xf32>
    %269 = arith.mulf %259, %266 : vector<8x512xf32>
    %270 = arith.addf %269, %268 : vector<8x512xf32>
    %271 = arith.mulf %262, %266 : vector<8x512xf32>
    %272 = arith.mulf %268, %103 : vector<8x512xf32>
    %273 = arith.addf %271, %272 : vector<8x512xf32>
    %274 = arith.divf %273, %270 : vector<8x512xf32>
    %cst_67 = arith.constant dense<0.000000e+00> : vector<8x512xf32>
    %275 = tpu.matmul %27, %274, %cst_67 {dimension_numbers = #tpu.dot_dimension_numbers<[1], [0], [0], [1], [0, 0, 1, 1], [], []>} : vector<8x8xf32>, vector<8x512xf32>, vector<8x512xf32> -> vector<8x512xf32>
    %276 = arith.addf %275, %20 : vector<8x512xf32>
    %cst_68 = arith.constant 0.000000e+00 : f32
    %277 = vector.broadcast %cst_68 : f32 to vector<8x512xf32>
    %278 = arith.cmpf ogt, %276, %277 : vector<8x512xf32>
    %279 = arith.mulf %23, %276 : vector<8x512xf32>
    %280 = arith.select %278, %276, %279 : vector<8x512xi1>, vector<8x512xf32>
    %c3_69 = arith.constant 3 : index
    %c0_70 = arith.constant 0 : index
    %c0_71 = arith.constant 0 : index
    %281 = vector.load %arg5[%c3_69, %c0_70, %c0_71] : memref<4x8x512xf32, #tpu.memory_space<vmem>>, vector<1x8x512xf32>
    %282 = vector.shape_cast %281 : vector<1x8x512xf32> to vector<8x512xf32>
    %283 = vector.shape_cast %280 : vector<8x512xf32> to vector<1x8x512xf32>
    tpu.vector_store %arg5[%c3_69, %c0_70, %c0_71], %283 {strides = array<i32>} : memref<4x8x512xf32, #tpu.memory_space<vmem>>, vector<1x8x512xf32>,
    return
  }
  func.func @transform_0(%arg0: i32) -> (i32, i32, i32) {
    %c0_i32 = arith.constant 0 : i32
    %c0_i32_0 = arith.constant 0 : i32
    %c0_i32_1 = arith.constant 0 : i32
    return %c0_i32, %c0_i32_0, %arg0 : i32, i32, i32
  }
  func.func @transform_1(%arg0: i32) -> (i32, i32, i32) {
    %c1_i32 = arith.constant 1 : i32
    %0 = arith.addi %arg0, %c1_i32 : i32
    %c4_i32 = arith.constant 4 : i32
    %1 = arith.muli %0, %c4_i32 : i32
    %c0_i32 = arith.constant 0 : i32
    %c0_i32_0 = arith.constant 0 : i32
    %c0_i32_1 = arith.constant 0 : i32
    return %c0_i32, %c0_i32_0, %1 : i32, i32, i32
  }
  func.func @transform_2(%arg0: i32) -> (i32, i32) {
    %c0_i32 = arith.constant 0 : i32
    %c0_i32_0 = arith.constant 0 : i32
    %c0_i32_1 = arith.constant 0 : i32
    return %c0_i32, %c0_i32_0 : i32, i32
  }
  func.func @transform_3(%arg0: i32) -> (i32, i32) {
    %c0_i32 = arith.constant 0 : i32
    %c0_i32_0 = arith.constant 0 : i32
    %c0_i32_1 = arith.constant 0 : i32
    return %c0_i32, %c0_i32_0 : i32, i32
  }
  func.func @transform_4(%arg0: i32) -> (i32, i32, i32) {
    %c0_i32 = arith.constant 0 : i32
    %c0_i32_0 = arith.constant 0 : i32
    %c0_i32_1 = arith.constant 0 : i32
    return %c0_i32, %c0_i32_0, %arg0 : i32, i32, i32
  }
}

</mosaic_0001>

<llo_original>
// kernel: temporal_block.1
$region0: #{temporal_block.1}
  #allocation0 [shape = 'u32[]', space=smem, size = 0x4, offset = 0x4, fixed_abs, tag = 'smem constant byte address 0x4 - core index']
  #allocation1 [shape = 'u32[144,128]{1,0:T(1,128)}', space=vmem, size = 0x12000, scoped, tag = 'internal scratch']
  %s0 = inlined_call_operand.vmem [shape: f32[4,8,1152], index: 0, kind: input, shape index: {}, may-alias: {0,1}]
  %s1 = inlined_call_operand.vmem [shape: f32[4,8,1152], index: 1, kind: input, shape index: {}, may-alias: {0,1}]
  %s2 = inlined_call_operand.vmem [shape: f32[32,8], index: 2, kind: input, shape index: {}]
  %s3 = inlined_call_operand.vmem [shape: f32[8,8], index: 3, kind: input, shape index: {}]
  %s4 = inlined_call_operand.hbm [shape: f32[4,8,1024], index: 4, kind: output, shape index: {}]
  %s5 = sld [smem:[#allocation0]]
  $region153: #{temporal_block.1} parent=0
    _
  %s7 = ssub.s32 1, %s5
  %s8 = scalar_select 0, %s7, %s5
  $region1: #{temporal_block.1} parent=0
    #allocation2 [shape = 'u8[131072]{0}', space=vmem, size = 0x20000, scoped, tag = 'input window, operand 0']
    #allocation3 [shape = 'u8[32768]{0}', space=vmem, size = 0x8000, scoped, tag = 'input window, operand 1']
    #allocation4 [shape = 'u8[131072]{0}', space=vmem, size = 0x20000, scoped, tag = 'output window, operand 0']
    #allocation5 [shape = 's32[2]{0}', space=sflag, size = 0x8, scoped, tag = 'scoped memory for temporal_block.1']
    %9 = vsyncpa [#allocation5], 0
    %s10 = scalar_lea.sflag [#allocation5], 1
    %11 = vsyncpa %s10, 0
    loop: start=0, step=1, limit=4
    $region2: #{temporal_block.1} parent=1 // loop_pre_header
      _
    $region3: #{temporal_block.1} parent=1 // loop_header
      %s13 = sphi 0, %s17
      %p14 = scmp.ge.s32.totalorder %s13, 4
      %s23 = sphi 0, %s25
      %s26 = sphi 0, %s23
      %s27 = sphi 0, %s26
      %s43 = sphi 0, %s27
      %s53 = sphi 0, %s55
      %s56 = sphi 0, %s53
      %s57 = sphi 0, %s56
      %s73 = sphi 0, %s57
      %s77 = sphi 0, %s77
      %s79 = sphi 0, %s77
      %s80 = sphi 0, %s79
      %s94 = sphi 0, %s80
      %s98 = sphi 0, %s98
      %s100 = sphi 0, %s98
      %s101 = sphi 0, %s100
      %s115 = sphi 0, %s101
      %s121 = sphi 0, %s123
      %s124 = sphi 0, %s121
      %s125 = sphi 0, %s124
      %s141 = sphi 0, %s125
    $region4: #{temporal_block.1} parent=1 // loop_header_branch
      %16 = sbr.rel (%p14) target = $region8
    $region5: #{temporal_block.1} parent=1 // loop_body
      %s18 = ssub.s32 %s13, 1
      %s19 = ssub.s32 %s13, 2
      %s20 = sadd.s32 %s13, 1
      %s21 = ssub.s32 %s13, %s20
      %p22 = scmp.eq.s32.totalorder %s21, 0
      %s24 = sadd.s32 %s23, 1
      %s25 = scalar_select %p22, %s23, %s24
      %p28 = pneg %p22
      %p29 = scmp.eq.s32.totalorder %s13, 1
      %p30 = por %p28, %p29
      %p31 = scmp.ne.s32.totalorder %s23, %s26
      %p32 = scmp.eq.s32.totalorder %s13, 0
      %p33 = por %p31, %p32
      %p34 = scmp.ne.s32.totalorder %s23, %s26
      %p35 = scmp.eq.s32.totalorder %s18, 1
      %p36 = por %p34, %p35
      %p37 = scmp.ne.s32.totalorder %s26, %s27
      %p38 = scmp.eq.s32.totalorder %s18, 0
      %p39 = por %p37, %p38
      %p40 = scmp.ne.s32.totalorder %s26, %s27
      %p41 = scmp.eq.s32.totalorder %s19, 1
      %p42 = por %p40, %p41
      %p44 = scmp.ne.s32.totalorder %s27, %s43
      %p45 = scmp.eq.s32.totalorder %s19, 0
      %p46 = por %p44, %p45
      %s47 = sadd.s32 %s13, 1
      %s48 = smul.u32 %s47, 4
      %s49 = sadd.s32 %s20, 1
      %s50 = smul.u32 %s49, 4
      %s51 = ssub.s32 %s48, %s50
      %p52 = scmp.eq.s32.totalorder %s51, 0
      %s54 = sadd.s32 %s53, 1
      %s55 = scalar_select %p52, %s53, %s54
      %p58 = pneg %p52
      %p59 = scmp.eq.s32.totalorder %s13, 1
      %p60 = por %p58, %p59
      %p61 = scmp.ne.s32.totalorder %s53, %s56
      %p62 = scmp.eq.s32.totalorder %s13, 0
      %p63 = por %p61, %p62
      %p64 = scmp.ne.s32.totalorder %s53, %s56
      %p65 = scmp.eq.s32.totalorder %s18, 1
      %p66 = por %p64, %p65
      %p67 = scmp.ne.s32.totalorder %s56, %s57
      %p68 = scmp.eq.s32.totalorder %s18, 0
      %p69 = por %p67, %p68
      %p70 = scmp.ne.s32.totalorder %s56, %s57
      %p71 = scmp.eq.s32.totalorder %s19, 1
      %p72 = por %p70, %p71
      %p74 = scmp.ne.s32.totalorder %s57, %s73
      %p75 = scmp.eq.s32.totalorder %s19, 0
      %p76 = por %p74, %p75
      %s78 = sadd.s32 %s77, 1
      %p81 = scmp.eq.s32.totalorder %s13, 1
      %p82 = scmp.ne.s32.totalorder %s77, %s79
      %p83 = scmp.eq.s32.totalorder %s13, 0
      %p84 = por %p82, %p83
      %p85 = scmp.ne.s32.totalorder %s77, %s79
      %p86 = scmp.eq.s32.totalorder %s18, 1
      %p87 = por %p85, %p86
      %p88 = scmp.ne.s32.totalorder %s79, %s80
      %p89 = scmp.eq.s32.totalorder %s18, 0
      %p90 = por %p88, %p89
      %p91 = scmp.ne.s32.totalorder %s79, %s80
      %p92 = scmp.eq.s32.totalorder %s19, 1
      %p93 = por %p91, %p92
      %p95 = scmp.ne.s32.totalorder %s80, %s94
      %p96 = scmp.eq.s32.totalorder %s19, 0
      %p97 = por %p95, %p96
      %s99 = sadd.s32 %s98, 1
      %p102 = scmp.eq.s32.totalorder %s13, 1
      %p103 = scmp.ne.s32.totalorder %s98, %s100
      %p104 = scmp.eq.s32.totalorder %s13, 0
      %p105 = por %p103, %p104
      %p106 = scmp.ne.s32.totalorder %s98, %s100
      %p107 = scmp.eq.s32.totalorder %s18, 1
      %p108 = por %p106, %p107
      %p109 = scmp.ne.s32.totalorder %s100, %s101
      %p110 = scmp.eq.s32.totalorder %s18, 0
      %p111 = por %p109, %p110
      %p112 = scmp.ne.s32.totalorder %s100, %s101
      %p113 = scmp.eq.s32.totalorder %s19, 1
      %p114 = por %p112, %p113
      %p116 = scmp.ne.s32.totalorder %s101, %s115
      %p117 = scmp.eq.s32.totalorder %s19, 0
      %p118 = por %p116, %p117
      %s119 = ssub.s32 %s13, %s20
      %p120 = scmp.eq.s32.totalorder %s119, 0
      %s122 = sadd.s32 %s121, 1
      %s123 = scalar_select %p120, %s121, %s122
      %p126 = pneg %p120
      %p127 = scmp.eq.s32.totalorder %s13, 1
      %p128 = por %p126, %p127
      %p129 = scmp.ne.s32.totalorder %s121, %s124
      %p130 = scmp.eq.s32.totalorder %s13, 0
      %p131 = por %p129, %p130
      %p132 = scmp.ne.s32.totalorder %s121, %s124
      %p133 = scmp.eq.s32.totalorder %s18, 1
      %p134 = por %p132, %p133
      %p135 = scmp.ne.s32.totalorder %s124, %s125
      %p136 = scmp.eq.s32.totalorder %s18, 0
      %p137 = por %p135, %p136
      %p138 = scmp.ne.s32.totalorder %s124, %s125
      %p139 = scmp.eq.s32.totalorder %s19, 1
      %p140 = por %p138, %p139
      %p142 = scmp.ne.s32.totalorder %s125, %s141
      %p143 = scmp.eq.s32.totalorder %s19, 0
      %p144 = por %p142, %p143
      %p145 = scmp.le.s32.totalorder 1, %s13
      %p146 = scmp.lt.s32.totalorder %s13, 3
      %p147 = pnand %p145, %p146
      %p148 = pneg %p147
      // Predicated region
      $region9: #{temporal_block.1} parent=5 // pred_check
        _
      $region10: #{temporal_block.1} parent=5 // pred_check_branch
        %150 = sbr.rel (%p147) target = $region12
      $region11: #{temporal_block.1} parent=5 // pred_region
        %s151 = ssub.s32 %s13, 1
        // Predicated region
        $region13: #{temporal_block.1} parent=11 // pred_check
          %p152 = pneg %p90
        $region14: #{temporal_block.1} parent=11 // pred_check_branch
          %154 = sbr.rel (%p152) target = $region16
        $region15: #{temporal_block.1} parent=11 // pred_region
          _
        $region16: #{temporal_block.1} parent=11 // pred_fallthru
          _
        // Predicated region
        $region17: #{temporal_block.1} parent=11 // pred_check
          %p155 = pneg %p111
        $region18: #{temporal_block.1} parent=11 // pred_check_branch
          %157 = sbr.rel (%p155) target = $region20
        $region19: #{temporal_block.1} parent=11 // pred_region
          _
        $region20: #{temporal_block.1} parent=11 // pred_fallthru
          _
      $region12: #{temporal_block.1} parent=5 // pred_fallthru
        _
      %p158 = scmp.lt.s32.totalorder %s13, 2
      // Predicated region
      $region21: #{temporal_block.1} parent=5 // pred_check
        %p159 = pneg %p158
      $region22: #{temporal_block.1} parent=5 // pred_check_branch
        %161 = sbr.rel (%p159) target = $region24
      $region23: #{temporal_block.1} parent=5 // pred_region
        // Predicated region
        $region25: #{temporal_block.1} parent=23 // pred_check
          %p162 = pneg %p33
        $region26: #{temporal_block.1} parent=23 // pred_check_branch
          %164 = sbr.rel (%p162) target = $region28
        $region27: #{temporal_block.1} parent=23 // pred_region
          %s165 = sand.u32 %s23, 1
          %s166 = sand.u32 %s23, 1
          %s167 = smul.addr %s166, 128
          %s168 = scalar_lea.vmem [#allocation2], %s167
          %s169 = smul.u32 4, %s13
          %s170 = ssub.s32 9, %s169
          %p171 = scmp.lt.s32.totalorder %s170, 4
          %s172 = scalar_select %p171, %s170, 4
          %s173 = smul.u32 512, %s172
          %p174 = scmp.ne.s32.totalorder 0, %s173
          %s175 = smul.addr %s169, 8
          %s176 = scalar_lea.vmem %s0, %s175
          %s177 = smul.u32 %s172, 8
          // Predicated region
          $region29: #{temporal_block.1} parent=27 // pred_check
            %p178 = pneg %p174
          $region30: #{temporal_block.1} parent=27 // pred_check_branch
            %180 = sbr.rel (%p178) target = $region32
          $region31: #{temporal_block.1} parent=27 // pred_region
            %p181 = scmp.lt.u32.totalorder %s177, 8
            %p182 = pneg %p181
            // Predicated region
            $region33: #{temporal_block.1} parent=31 // pred_check
              _
            $region34: #{temporal_block.1} parent=31 // pred_check_branch
              %184 = sbr.rel (%p181) target = $region36
            $region35: #{temporal_block.1} parent=31 // pred_region
              %s205 = sand.u32 %s177, 7
              %p206 = scmp.eq.s32.totalorder %s205, 0
              // Predicated region
              $region48: #{temporal_block.1} parent=35 // pred_check
                %p207 = pneg %p206
              $region49: #{temporal_block.1} parent=35 // pred_check_branch
                %209 = sbr.rel (%p207) target = $region51
              $region50: #{temporal_block.1} parent=35 // pred_region
                %s210 = sshrl.u32 %s177, 3
                %s211 = sshrl.u32 %s210, 4
                // While loop
                $region52: #{temporal_block.1} parent=50 // loop_pre_header
                  _
                $region53: #{temporal_block.1} parent=50 // loop_header
                  %s215 = sphi 0, %s217
                  %p216 = scmp.ge.s32.totalorder %s215, %s211
                  %s220 = sphi 0, %s353
                  %s221 = sphi %s176, %s356
                  %s222 = sphi %s168, %s357
                $region54: #{temporal_block.1} parent=50 // loop_header_branch
                  %219 = sbr.rel (%p216) target = $region58
                $region55: #{temporal_block.1} parent=50 // loop_body
                  %v223 = vld [vmem:[%s221] sm:$0xff]
                  %224 = vst [vmem:[%s222] sm:$0xff] %v223
                  %v225 = vld [vmem:[%s221 + $0x8] sm:$0xff]
                  %226 = vst [vmem:[%s222 + $0x8] sm:$0xff] %v225
                  %v227 = vld [vmem:[%s221 + $0x10] sm:$0xff]
                  %228 = vst [vmem:[%s222 + $0x10] sm:$0xff] %v227
                  %v229 = vld [vmem:[%s221 + $0x18] sm:$0xff]
                  %230 = vst [vmem:[%s222 + $0x18] sm:$0xff] %v229
                  %v231 = vld [vmem:[%s221 + $0x20] sm:$0xff]
                  %232 = vst [vmem:[%s222 + $0x20] sm:$0xff] %v231
                  %v233 = vld [vmem:[%s221 + $0x28] sm:$0xff]
                  %234 = vst [vmem:[%s222 + $0x28] sm:$0xff] %v233
                  %v235 = vld [vmem:[%s221 + $0x30] sm:$0xff]
                  %236 = vst [vmem:[%s222 + $0x30] sm:$0xff] %v235
                  %v237 = vld [vmem:[%s221 + $0x38] sm:$0xff]
                  %238 = vst [vmem:[%s222 + $0x38] sm:$0xff] %v237
                  %v239 = vld [vmem:[%s221 + $0x40] sm:$0xff]
                  %240 = vst [vmem:[%s222 + $0x40] sm:$0xff] %v239
                  %v241 = vld [vmem:[%s221 + $0x48] sm:$0xff]
                  %242 = vst [vmem:[%s222 + $0x48] sm:$0xff] %v241
                  %v243 = vld [vmem:[%s221 + $0x50] sm:$0xff]
                  %244 = vst [vmem:[%s222 + $0x50] sm:$0xff] %v243
                  %v245 = vld [vmem:[%s221 + $0x58] sm:$0xff]
                  %246 = vst [vmem:[%s222 + $0x58] sm:$0xff] %v245
                  %v247 = vld [vmem:[%s221 + $0x60] sm:$0xff]
                  %248 = vst [vmem:[%s222 + $0x60] sm:$0xff] %v247
                  %v249 = vld [vmem:[%s221 + $0x68] sm:$0xff]
                  %250 = vst [vmem:[%s222 + $0x68] sm:$0xff] %v249
                  %v251 = vld [vmem:[%s221 + $0x70] sm:$0xff]
                  %252 = vst [vmem:[%s222 + $0x70] sm:$0xff] %v251
                  %v253 = vld [vmem:[%s221 + $0x78] sm:$0xff]
                  %254 = vst [vmem:[%s222 + $0x78] sm:$0xff] %v253
                  %v255 = vld [vmem:[%s221 + $0x48] sm:$0xff]
                  %256 = vst [vmem:[%s222 + $0x20] sm:$0xff] %v255
                  %v257 = vld [vmem:[%s221 + $0x50] sm:$0xff]
                  %258 = vst [vmem:[%s222 + $0x28] sm:$0xff] %v257
                  %v259 = vld [vmem:[%s221 + $0x58] sm:$0xff]
                  %260 = vst [vmem:[%s222 + $0x30] sm:$0xff] %v259
                  %v261 = vld [vmem:[%s221 + $0x60] sm:$0xff]
                  %262 = vst [vmem:[%s222 + $0x38] sm:$0xff] %v261
                  %v263 = vld [vmem:[%s221 + $0x68] sm:$0xff]
                  %264 = vst [vmem:[%s222 + $0x40] sm:$0xff] %v263
                  %v265 = vld [vmem:[%s221 + $0x70] sm:$0xff]
                  %266 = vst [vmem:[%s222 + $0x48] sm:$0xff] %v265
                  %v267 = vld [vmem:[%s221 + $0x78] sm:$0xff]
                  %268 = vst [vmem:[%s222 + $0x50] sm:$0xff] %v267
                  %v269 = vld [vmem:[%s221 + $0x80] sm:$0xff]
                  %270 = vst [vmem:[%s222 + $0x58] sm:$0xff] %v269
                  %v271 = vld [vmem:[%s221 + $0x88] sm:$0xff]
                  %272 = vst [vmem:[%s222 + $0x60] sm:$0xff] %v271
                  %v273 = vld [vmem:[%s221 + $0x90] sm:$0xff]
                  %274 = vst [vmem:[%s222 + $0x68] sm:$0xff] %v273
                  %v275 = vld [vmem:[%s221 + $0x98] sm:$0xff]
                  %276 = vst [vmem:[%s222 + $0x70] sm:$0xff] %v275
                  %v277 = vld [vmem:[%s221 + $0xa0] sm:$0xff]
                  %278 = vst [vmem:[%s222 + $0x78] sm:$0xff] %v277
                  %v279 = vld [vmem:[%s221 + $0xa8] sm:$0xff]
                  %280 = vst [vmem:[%s222 + $0x80] sm:$0xff] %v279
                  %v281 = vld [vmem:[%s221 + $0xb0] sm:$0xff]
                  %282 = vst [vmem:[%s222 + $0x88] sm:$0xff] %v281
                  %v283 = vld [vmem:[%s221 + $0xb8] sm:$0xff]
                  %284 = vst [vmem:[%s222 + $0x90] sm:$0xff] %v283
                  %v285 = vld [vmem:[%s221 + $0xc0] sm:$0xff]
                  %286 = vst [vmem:[%s222 + $0x98] sm:$0xff] %v285
                  %v287 = vld [vmem:[%s221 + $0x90] sm:$0xff]
                  %288 = vst [vmem:[%s222 + $0x40] sm:$0xff] %v287
                  %v289 = vld [vmem:[%s221 + $0x98] sm:$0xff]
                  %290 = vst [vmem:[%s222 + $0x48] sm:$0xff] %v289
                  %v291 = vld [vmem:[%s221 + $0xa0] sm:$0xff]
                  %292 = vst [vmem:[%s222 + $0x50] sm:$0xff] %v291
                  %v293 = vld [vmem:[%s221 + $0xa8] sm:$0xff]
                  %294 = vst [vmem:[%s222 + $0x58] sm:$0xff] %v293
                  %v295 = vld [vmem:[%s221 + $0xb0] sm:$0xff]
                  %296 = vst [vmem:[%s222 + $0x60] sm:$0xff] %v295
                  %v297 = vld [vmem:[%s221 + $0xb8] sm:$0xff]
                  %298 = vst [vmem:[%s222 + $0x68] sm:$0xff] %v297
                  %v299 = vld [vmem:[%s221 + $0xc0] sm:$0xff]
                  %300 = vst [vmem:[%s222 + $0x70] sm:$0xff] %v299
                  %v301 = vld [vmem:[%s221 + $0xc8] sm:$0xff]
                  %302 = vst [vmem:[%s222 + $0x78] sm:$0xff] %v301
                  %v303 = vld [vmem:[%s221 + $0xd0] sm:$0xff]
                  %304 = vst [vmem:[%s222 + $0x80] sm:$0xff] %v303
                  %v305 = vld [vmem:[%s221 + $0xd8] sm:$0xff]
                  %306 = vst [vmem:[%s222 + $0x88] sm:$0xff] %v305
                  %v307 = vld [vmem:[%s221 + $0xe0] sm:$0xff]
                  %308 = vst [vmem:[%s222 + $0x90] sm:$0xff] %v307
                  %v309 = vld [vmem:[%s221 + $0xe8] sm:$0xff]
                  %310 = vst [vmem:[%s222 + $0x98] sm:$0xff] %v309
                  %v311 = vld [vmem:[%s221 + $0xf0] sm:$0xff]
                  %312 = vst [vmem:[%s222 + $0xa0] sm:$0xff] %v311
                  %v313 = vld [vmem:[%s221 + $0xf8] sm:$0xff]
                  %314 = vst [vmem:[%s222 + $0xa8] sm:$0xff] %v313
                  %v315 = vld [vmem:[%s221 + $0x100] sm:$0xff]
                  %316 = vst [vmem:[%s222 + $0xb0] sm:$0xff] %v315
                  %v317 = vld [vmem:[%s221 + $0x108] sm:$0xff]
                  %318 = vst [vmem:[%s222 + $0xb8] sm:$0xff] %v317
                  %v319 = vld [vmem:[%s221 + $0xd8] sm:$0xff]
                  %320 = vst [vmem:[%s222 + $0x60] sm:$0xff] %v319
                  %v321 = vld [vmem:[%s221 + $0xe0] sm:$0xff]
                  %322 = vst [vmem:[%s222 + $0x68] sm:$0xff] %v321
                  %v323 = vld [vmem:[%s221 + $0xe8] sm:$0xff]
                  %324 = vst [vmem:[%s222 + $0x70] sm:$0xff] %v323
                  %v325 = vld [vmem:[%s221 + $0xf0] sm:$0xff]
                  %326 = vst [vmem:[%s222 + $0x78] sm:$0xff] %v325
                  %v327 = vld [vmem:[%s221 + $0xf8] sm:$0xff]
                  %328 = vst [vmem:[%s222 + $0x80] sm:$0xff] %v327
                  %v329 = vld [vmem:[%s221 + $0x100] sm:$0xff]
                  %330 = vst [vmem:[%s222 + $0x88] sm:$0xff] %v329
                  %v331 = vld [vmem:[%s221 + $0x108] sm:$0xff]
                  %332 = vst [vmem:[%s222 + $0x90] sm:$0xff] %v331
                  %v333 = vld [vmem:[%s221 + $0x110] sm:$0xff]
                  %334 = vst [vmem:[%s222 + $0x98] sm:$0xff] %v333
                  %v335 = vld [vmem:[%s221 + $0x118] sm:$0xff]
                  %336 = vst [vmem:[%s222 + $0xa0] sm:$0xff] %v335
                  %v337 = vld [vmem:[%s221 + $0x120] sm:$0xff]
                  %338 = vst [vmem:[%s222 + $0xa8] sm:$0xff] %v337
                  %v339 = vld [vmem:[%s221 + $0x128] sm:$0xff]
                  %340 = vst [vmem:[%s222 + $0xb0] sm:$0xff] %v339
                  %v341 = vld [vmem:[%s221 + $0x130] sm:$0xff]
                  %342 = vst [vmem:[%s222 + $0xb8] sm:$0xff] %v341
                  %v343 = vld [vmem:[%s221 + $0x138] sm:$0xff]
                  %344 = vst [vmem:[%s222 + $0xc0] sm:$0xff] %v343
                  %v345 = vld [vmem:[%s221 + $0x140] sm:$0xff]
                  %346 = vst [vmem:[%s222 + $0xc8] sm:$0xff] %v345
                  %v347 = vld [vmem:[%s221 + $0x148] sm:$0xff]
                  %348 = vst [vmem:[%s222 + $0xd0] sm:$0xff] %v347
                  %v349 = vld [vmem:[%s221 + $0x150] sm:$0xff]
                  %350 = vst [vmem:[%s222 + $0xd8] sm:$0xff] %v349
                  %s351 = sadd.s32 1, %s220
                  %p352 = scmp.ge.s32.totalorder %s351, %s211
                  %s353 = scalar_select %p352, 0, %s351
                  %s354 = smul.u32 %s353, 128
                  %s355 = smul.u32 %s353, 128
                  %s356 = scalar_lea.vmem %s176, %s354
                  %s357 = scalar_lea.vmem %s168, %s355 [#allocation2]
                $region56: #{temporal_block.1} parent=50 // loop_footer
                  %s217 = sadd.s32 %s215, 1
                $region57: #{temporal_block.1} parent=50 // loop_footer_branch
                  %214 = sbr.rel target = $region53
                $region58: #{temporal_block.1} parent=50 // loop_exit
                  _
                %s358 = sshrl.u32 %s210, 4
                %s359 = sand.u32 %s210, 15
                %s360 = smul.u32 %s358, 16
                %s361 = smul.u32 128, %s360
                %s362 = sshra.s32 %s361, 4
                %s363 = scalar_lea.vmem %s176, %s362
                %s364 = smul.u32 128, %s360
                %s365 = sshra.s32 %s364, 4
                %s366 = scalar_lea.vmem %s168, %s365 [#allocation2]
                // While loop
                $region59: #{temporal_block.1} parent=50 // loop_pre_header
                  _
                $region60: #{temporal_block.1} parent=50 // loop_header
                  %s370 = sphi 0, %s372
                  %p371 = scmp.ge.s32.totalorder %s370, %s359
                  %s375 = sphi 0, %s388
                  %s376 = sphi %s363, %s391
                  %s377 = sphi %s366, %s392
                $region61: #{temporal_block.1} parent=50 // loop_header_branch
                  %374 = sbr.rel (%p371) target = $region65
                $region62: #{temporal_block.1} parent=50 // loop_body
                  %v378 = vld [vmem:[%s376] sm:$0xff]
                  %379 = vst [vmem:[%s377] sm:$0xff] %v378
                  %v380 = vld [vmem:[%s376 + $0x48] sm:$0xff]
                  %381 = vst [vmem:[%s377 + $0x20] sm:$0xff] %v380
                  %v382 = vld [vmem:[%s376 + $0x90] sm:$0xff]
                  %383 = vst [vmem:[%s377 + $0x40] sm:$0xff] %v382
                  %v384 = vld [vmem:[%s376 + $0xd8] sm:$0xff]
                  %385 = vst [vmem:[%s377 + $0x60] sm:$0xff] %v384
                  %s386 = sadd.s32 1, %s375
                  %p387 = scmp.ge.s32.totalorder %s386, %s359
                  %s388 = scalar_select %p387, 0, %s386
                  %s389 = smul.u32 %s388, 8
                  %s390 = smul.u32 %s388, 8
                  %s391 = scalar_lea.vmem %s363, %s389
                  %s392 = scalar_lea.vmem %s366, %s390 [#allocation2]
                $region63: #{temporal_block.1} parent=50 // loop_footer
                  %s372 = sadd.s32 %s370, 1
                $region64: #{temporal_block.1} parent=50 // loop_footer_branch
                  %369 = sbr.rel target = $region60
                $region65: #{temporal_block.1} parent=50 // loop_exit
                  _
              $region51: #{temporal_block.1} parent=35 // pred_fallthru
                _
              %p393 = pneg %p206
              // Predicated region
              $region66: #{temporal_block.1} parent=35 // pred_check
                _
              $region67: #{temporal_block.1} parent=35 // pred_check_branch
                %395 = sbr.rel (%p206) target = $region69
              $region68: #{temporal_block.1} parent=35 // pred_region
                %s396 = sand.u32 %s177, 7
                %s397 = ssub.s32 %s177, %s396
                %s398 = scalar_lea.vmem %s176, %s397
                %s399 = ssub.s32 %s177, %s396
                %s400 = scalar_lea.vmem %s168, %s399 [#allocation2]
                %s401 = sshrl.u32 %s177, 3
                %s402 = sshrl.u32 %s401, 4
                // While loop
                $region70: #{temporal_block.1} parent=68 // loop_pre_header
                  _
                $region71: #{temporal_block.1} parent=68 // loop_header
                  %s406 = sphi 0, %s408
                  %p407 = scmp.ge.s32.totalorder %s406, %s402
                  %s411 = sphi 0, %s544
                  %s412 = sphi %s176, %s547
                  %s413 = sphi %s168, %s548
                $region72: #{temporal_block.1} parent=68 // loop_header_branch
                  %410 = sbr.rel (%p407) target = $region76
                $region73: #{temporal_block.1} parent=68 // loop_body
                  %v414 = vld [vmem:[%s412] sm:$0xff]
                  %415 = vst [vmem:[%s413] sm:$0xff] %v414
                  %v416 = vld [vmem:[%s412 + $0x8] sm:$0xff]
                  %417 = vst [vmem:[%s413 + $0x8] sm:$0xff] %v416
                  %v418 = vld [vmem:[%s412 + $0x10] sm:$0xff]
                  %419 = vst [vmem:[%s413 + $0x10] sm:$0xff] %v418
                  %v420 = vld [vmem:[%s412 + $0x18] sm:$0xff]
                  %421 = vst [vmem:[%s413 + $0x18] sm:$0xff] %v420
                  %v422 = vld [vmem:[%s412 + $0x20] sm:$0xff]
                  %423 = vst [vmem:[%s413 + $0x20] sm:$0xff] %v422
                  %v424 = vld [vmem:[%s412 + $0x28] sm:$0xff]
                  %425 = vst [vmem:[%s413 + $0x28] sm:$0xff] %v424
                  %v426 = vld [vmem:[%s412 + $0x30] sm:$0xff]
                  %427 = vst [vmem:[%s413 + $0x30] sm:$0xff] %v426
                  %v428 = vld [vmem:[%s412 + $0x38] sm:$0xff]
                  %429 = vst [vmem:[%s413 + $0x38] sm:$0xff] %v428
                  %v430 = vld [vmem:[%s412 + $0x40] sm:$0xff]
                  %431 = vst [vmem:[%s413 + $0x40] sm:$0xff] %v430
                  %v432 = vld [vmem:[%s412 + $0x48] sm:$0xff]
                  %433 = vst [vmem:[%s413 + $0x48] sm:$0xff] %v432
                  %v434 = vld [vmem:[%s412 + $0x50] sm:$0xff]
                  %435 = vst [vmem:[%s413 + $0x50] sm:$0xff] %v434
                  %v436 = vld [vmem:[%s412 + $0x58] sm:$0xff]
                  %437 = vst [vmem:[%s413 + $0x58] sm:$0xff] %v436
                  %v438 = vld [vmem:[%s412 + $0x60] sm:$0xff]
                  %439 = vst [vmem:[%s413 + $0x60] sm:$0xff] %v438
                  %v440 = vld [vmem:[%s412 + $0x68] sm:$0xff]
                  %441 = vst [vmem:[%s413 + $0x68] sm:$0xff] %v440
                  %v442 = vld [vmem:[%s412 + $0x70] sm:$0xff]
                  %443 = vst [vmem:[%s413 + $0x70] sm:$0xff] %v442
                  %v444 = vld [vmem:[%s412 + $0x78] sm:$0xff]
                  %445 = vst [vmem:[%s413 + $0x78] sm:$0xff] %v444
                  %v446 = vld [vmem:[%s412 + $0x48] sm:$0xff]
                  %447 = vst [vmem:[%s413 + $0x20] sm:$0xff] %v446
                  %v448 = vld [vmem:[%s412 + $0x50] sm:$0xff]
                  %449 = vst [vmem:[%s413 + $0x28] sm:$0xff] %v448
                  %v450 = vld [vmem:[%s412 + $0x58] sm:$0xff]
                  %451 = vst [vmem:[%s413 + $0x30] sm:$0xff] %v450
                  %v452 = vld [vmem:[%s412 + $0x60] sm:$0xff]
                  %453 = vst [vmem:[%s413 + $0x38] sm:$0xff] %v452
                  %v454 = vld [vmem:[%s412 + $0x68] sm:$0xff]
                  %455 = vst [vmem:[%s413 + $0x40] sm:$0xff] %v454
                  %v456 = vld [vmem:[%s412 + $0x70] sm:$0xff]
                  %457 = vst [vmem:[%s413 + $0x48] sm:$0xff] %v456
                  %v458 = vld [vmem:[%s412 + $0x78] sm:$0xff]
                  %459 = vst [vmem:[%s413 + $0x50] sm:$0xff] %v458
                  %v460 = vld [vmem:[%s412 + $0x80] sm:$0xff]
                  %461 = vst [vmem:[%s413 + $0x58] sm:$0xff] %v460
                  %v462 = vld [vmem:[%s412 + $0x88] sm:$0xff]
                  %463 = vst [vmem:[%s413 + $0x60] sm:$0xff] %v462
                  %v464 = vld [vmem:[%s412 + $0x90] sm:$0xff]
                  %465 = vst [vmem:[%s413 + $0x68] sm:$0xff] %v464
                  %v466 = vld [vmem:[%s412 + $0x98] sm:$0xff]
                  %467 = vst [vmem:[%s413 + $0x70] sm:$0xff] %v466
                  %v468 = vld [vmem:[%s412 + $0xa0] sm:$0xff]
                  %469 = vst [vmem:[%s413 + $0x78] sm:$0xff] %v468
                  %v470 = vld [vmem:[%s412 + $0xa8] sm:$0xff]
                  %471 = vst [vmem:[%s413 + $0x80] sm:$0xff] %v470
                  %v472 = vld [vmem:[%s412 + $0xb0] sm:$0xff]
                  %473 = vst [vmem:[%s413 + $0x88] sm:$0xff] %v472
                  %v474 = vld [vmem:[%s412 + $0xb8] sm:$0xff]
                  %475 = vst [vmem:[%s413 + $0x90] sm:$0xff] %v474
                  %v476 = vld [vmem:[%s412 + $0xc0] sm:$0xff]
                  %477 = vst [vmem:[%s413 + $0x98] sm:$0xff] %v476
                  %v478 = vld [vmem:[%s412 + $0x90] sm:$0xff]
                  %479 = vst [vmem:[%s413 + $0x40] sm:$0xff] %v478
                  %v480 = vld [vmem:[%s412 + $0x98] sm:$0xff]
                  %481 = vst [vmem:[%s413 + $0x48] sm:$0xff] %v480
                  %v482 = vld [vmem:[%s412 + $0xa0] sm:$0xff]
                  %483 = vst [vmem:[%s413 + $0x50] sm:$0xff] %v482
                  %v484 = vld [vmem:[%s412 + $0xa8] sm:$0xff]
                  %485 = vst [vmem:[%s413 + $0x58] sm:$0xff] %v484
                  %v486 = vld [vmem:[%s412 + $0xb0] sm:$0xff]
                  %487 = vst [vmem:[%s413 + $0x60] sm:$0xff] %v486
                  %v488 = vld [vmem:[%s412 + $0xb8] sm:$0xff]
                  %489 = vst [vmem:[%s413 + $0x68] sm:$0xff] %v488
                  %v490 = vld [vmem:[%s412 + $0xc0] sm:$0xff]
                  %491 = vst [vmem:[%s413 + $0x70] sm:$0xff] %v490
                  %v492 = vld [vmem:[%s412 + $0xc8] sm:$0xff]
                  %493 = vst [vmem:[%s413 + $0x78] sm:$0xff] %v492
                  %v494 = vld [vmem:[%s412 + $0xd0] sm:$0xff]
                  %495 = vst [vmem:[%s413 + $0x80] sm:$0xff] %v494
                  %v496 = vld [vmem:[%s412 + $0xd8] sm:$0xff]
                  %497 = vst [vmem:[%s413 + $0x88] sm:$0xff] %v496
                  %v498 = vld [vmem:[%s412 + $0xe0] sm:$0xff]
                  %499 = vst [vmem:[%s413 + $0x90] sm:$0xff] %v498
                  %v500 = vld [vmem:[%s412 + $0xe8] sm:$0xff]
                  %501 = vst [vmem:[%s413 + $0x98] sm:$0xff] %v500
                  %v502 = vld [vmem:[%s412 + $0xf0] sm:$0xff]
                  %503 = vst [vmem:[%s413 + $0xa0] sm:$0xff] %v502
                  %v504 = vld [vmem:[%s412 + $0xf8] sm:$0xff]
                  %505 = vst [vmem:[%s413 + $0xa8] sm:$0xff] %v504
                  %v506 = vld [vmem:[%s412 + $0x100] sm:$0xff]
                  %507 = vst [vmem:[%s413 + $0xb0] sm:$0xff] %v506
                  %v508 = vld [vmem:[%s412 + $0x108] sm:$0xff]
                  %509 = vst [vmem:[%s413 + $0xb8] sm:$0xff] %v508
                  %v510 = vld [vmem:[%s412 + $0xd8] sm:$0xff]
                  %511 = vst [vmem:[%s413 + $0x60] sm:$0xff] %v510
                  %v512 = vld [vmem:[%s412 + $0xe0] sm:$0xff]
                  %513 = vst [vmem:[%s413 + $0x68] sm:$0xff] %v512
                  %v514 = vld [vmem:[%s412 + $0xe8] sm:$0xff]
                  %515 = vst [vmem:[%s413 + $0x70] sm:$0xff] %v514
                  %v516 = vld [vmem:[%s412 + $0xf0] sm:$0xff]
                  %517 = vst [vmem:[%s413 + $0x78] sm:$0xff] %v516
                  %v518 = vld [vmem:[%s412 + $0xf8] sm:$0xff]
                  %519 = vst [vmem:[%s413 + $0x80] sm:$0xff] %v518
                  %v520 = vld [vmem:[%s412 + $0x100] sm:$0xff]
                  %521 = vst [vmem:[%s413 + $0x88] sm:$0xff] %v520
                  %v522 = vld [vmem:[%s412 + $0x108] sm:$0xff]
                  %523 = vst [vmem:[%s413 + $0x90] sm:$0xff] %v522
                  %v524 = vld [vmem:[%s412 + $0x110] sm:$0xff]
                  %525 = vst [vmem:[%s413 + $0x98] sm:$0xff] %v524
                  %v526 = vld [vmem:[%s412 + $0x118] sm:$0xff]
                  %527 = vst [vmem:[%s413 + $0xa0] sm:$0xff] %v526
                  %v528 = vld [vmem:[%s412 + $0x120] sm:$0xff]
                  %529 = vst [vmem:[%s413 + $0xa8] sm:$0xff] %v528
                  %v530 = vld [vmem:[%s412 + $0x128] sm:$0xff]
                  %531 = vst [vmem:[%s413 + $0xb0] sm:$0xff] %v530
                  %v532 = vld [vmem:[%s412 + $0x130] sm:$0xff]
                  %533 = vst [vmem:[%s413 + $0xb8] sm:$0xff] %v532
                  %v534 = vld [vmem:[%s412 + $0x138] sm:$0xff]
                  %535 = vst [vmem:[%s413 + $0xc0] sm:$0xff] %v534
                  %v536 = vld [vmem:[%s412 + $0x140] sm:$0xff]
                  %537 = vst [vmem:[%s413 + $0xc8] sm:$0xff] %v536
                  %v538 = vld [vmem:[%s412 + $0x148] sm:$0xff]
                  %539 = vst [vmem:[%s413 + $0xd0] sm:$0xff] %v538
                  %v540 = vld [vmem:[%s412 + $0x150] sm:$0xff]
                  %541 = vst [vmem:[%s413 + $0xd8] sm:$0xff] %v540
                  %s542 = sadd.s32 1, %s411
                  %p543 = scmp.ge.s32.totalorder %s542, %s402
                  %s544 = scalar_select %p543, 0, %s542
                  %s545 = smul.u32 %s544, 128
                  %s546 = smul.u32 %s544, 128
                  %s547 = scalar_lea.vmem %s176, %s545
                  %s548 = scalar_lea.vmem %s168, %s546 [#allocation2]
                $region74: #{temporal_block.1} parent=68 // loop_footer
                  %s408 = sadd.s32 %s406, 1
                $region75: #{temporal_block.1} parent=68 // loop_footer_branch
                  %405 = sbr.rel target = $region71
                $region76: #{temporal_block.1} parent=68 // loop_exit
                  _
                %s549 = sshrl.u32 %s401, 4
                %s550 = sand.u32 %s401, 15
                %s551 = smul.u32 %s549, 16
                %s552 = smul.u32 128, %s551
                %s553 = sshra.s32 %s552, 4
                %s554 = scalar_lea.vmem %s176, %s553
                %s555 = smul.u32 128, %s551
                %s556 = sshra.s32 %s555, 4
                %s557 = scalar_lea.vmem %s168, %s556 [#allocation2]
                // While loop
                $region77: #{temporal_block.1} parent=68 // loop_pre_header
                  _
                $region78: #{temporal_block.1} parent=68 // loop_header
                  %s561 = sphi 0, %s563
                  %p562 = scmp.ge.s32.totalorder %s561, %s550
                  %s566 = sphi 0, %s579
                  %s567 = sphi %s554, %s582
                  %s568 = sphi %s557, %s583
                $region79: #{temporal_block.1} parent=68 // loop_header_branch
                  %565 = sbr.rel (%p562) target = $region83
                $region80: #{temporal_block.1} parent=68 // loop_body
                  %v569 = vld [vmem:[%s567] sm:$0xff]
                  %570 = vst [vmem:[%s568] sm:$0xff] %v569
                  %v571 = vld [vmem:[%s567 + $0x48] sm:$0xff]
                  %572 = vst [vmem:[%s568 + $0x20] sm:$0xff] %v571
                  %v573 = vld [vmem:[%s567 + $0x90] sm:$0xff]
                  %574 = vst [vmem:[%s568 + $0x40] sm:$0xff] %v573
                  %v575 = vld [vmem:[%s567 + $0xd8] sm:$0xff]
                  %576 = vst [vmem:[%s568 + $0x60] sm:$0xff] %v575
                  %s577 = sadd.s32 1, %s566
                  %p578 = scmp.ge.s32.totalorder %s577, %s550
                  %s579 = scalar_select %p578, 0, %s577
                  %s580 = smul.u32 %s579, 8
                  %s581 = smul.u32 %s579, 8
                  %s582 = scalar_lea.vmem %s554, %s580
                  %s583 = scalar_lea.vmem %s557, %s581 [#allocation2]
                $region81: #{temporal_block.1} parent=68 // loop_footer
                  %s563 = sadd.s32 %s561, 1
                $region82: #{temporal_block.1} parent=68 // loop_footer_branch
                  %560 = sbr.rel target = $region78
                $region83: #{temporal_block.1} parent=68 // loop_exit
                  _
                %s584 = sshllo.u32 0, %s396
                loop: start=0, step=1, limit=1
                $region84: #{temporal_block.1} parent=68 // loop_pre_header
                  _
                $region85: #{temporal_block.1} parent=68 // loop_header
                  %s586 = sphi 0, %s590
                  %p587 = scmp.ge.s32.totalorder %s586, 1
                  %s591 = sphi %s398, %s398
                  %s592 = sphi %s400, %s400
                $region86: #{temporal_block.1} parent=68 // loop_header_branch
                  %589 = sbr.rel (%p587) target = $region90
                $region87: #{temporal_block.1} parent=68 // loop_body
                  %v593 = vld [vmem:[%s591] sm:%s584]
                  %594 = vst [vmem:[%s592] sm:%s584] %v593
                  %v595 = vld [vmem:[%s591 + $0x48] sm:%s584]
                  %596 = vst [vmem:[%s592 + $0x20] sm:%s584] %v595
                  %v597 = vld [vmem:[%s591 + $0x90] sm:%s584]
                  %598 = vst [vmem:[%s592 + $0x40] sm:%s584] %v597
                  %v599 = vld [vmem:[%s591 + $0xd8] sm:%s584]
                  %600 = vst [vmem:[%s592 + $0x60] sm:%s584] %v599
                $region88: #{temporal_block.1} parent=68 // loop_footer
                  %s590 = sadd.s32 1, %s586
                $region89: #{temporal_block.1} parent=68 // loop_footer_branch
                  %585 = sbr.rel target = $region85
                $region90: #{temporal_block.1} parent=68 // loop_exit
                  _
              $region69: #{temporal_block.1} parent=35 // pred_fallthru
                _
            $region36: #{temporal_block.1} parent=31 // pred_fallthru
              _
            // Predicated region
            $region37: #{temporal_block.1} parent=31 // pred_check
              %p185 = pneg %p181
            $region38: #{temporal_block.1} parent=31 // pred_check_branch
              %187 = sbr.rel (%p185) target = $region40
            $region39: #{temporal_block.1} parent=31 // pred_region
              %s188 = sshllo.u32 0, %s177
              loop: start=0, step=1, limit=1
              $region41: #{temporal_block.1} parent=39 // loop_pre_header
                _
              $region42: #{temporal_block.1} parent=39 // loop_header
                %s190 = sphi 0, %s194
                %p191 = scmp.ge.s32.totalorder %s190, 1
                %s195 = sphi %s176, %s176
                %s196 = sphi %s168, %s168
              $region43: #{temporal_block.1} parent=39 // loop_header_branch
                %193 = sbr.rel (%p191) target = $region47
              $region44: #{temporal_block.1} parent=39 // loop_body
                %v197 = vld [vmem:[%s195] sm:%s188]
                %198 = vst [vmem:[%s196] sm:%s188] %v197
                %v199 = vld [vmem:[%s195 + $0x48] sm:%s188]
                %200 = vst [vmem:[%s196 + $0x20] sm:%s188] %v199
                %v201 = vld [vmem:[%s195 + $0x90] sm:%s188]
                %202 = vst [vmem:[%s196 + $0x40] sm:%s188] %v201
                %v203 = vld [vmem:[%s195 + $0xd8] sm:%s188]
                %204 = vst [vmem:[%s196 + $0x60] sm:%s188] %v203
              $region45: #{temporal_block.1} parent=39 // loop_footer
                %s194 = sadd.s32 1, %s190
              $region46: #{temporal_block.1} parent=39 // loop_footer_branch
                %189 = sbr.rel target = $region42
              $region47: #{temporal_block.1} parent=39 // loop_exit
                _
            $region40: #{temporal_block.1} parent=31 // pred_fallthru
              _
          $region32: #{temporal_block.1} parent=27 // pred_fallthru
            _
          %601 = vnop
        $region28: #{temporal_block.1} parent=23 // pred_fallthru
          _
        // Predicated region
        $region91: #{temporal_block.1} parent=23 // pred_check
          %p602 = pneg %p63
        $region92: #{temporal_block.1} parent=23 // pred_check_branch
          %604 = sbr.rel (%p602) target = $region94
        $region93: #{temporal_block.1} parent=23 // pred_region
          %s605 = sand.u32 %s53, 1
          %s606 = sand.u32 %s53, 1
          %s607 = smul.addr %s606, 32
          %s608 = scalar_lea.vmem [#allocation3], %s607
          %s609 = sadd.s32 %s13, 1
          %s610 = smul.u32 %s609, 4
          %s611 = smul.addr %s610, 8
          %s612 = scalar_lea.vmem %s1, %s611
          // Predicated region
          $region95: #{temporal_block.1} parent=93 // pred_check
            _
          $region96: #{temporal_block.1} parent=93 // pred_check_branch
            %614 = sbr.rel (0) target = $region98
          $region97: #{temporal_block.1} parent=93 // pred_region
            // Predicated region
            $region99: #{temporal_block.1} parent=97 // pred_check
              _
            $region100: #{temporal_block.1} parent=97 // pred_check_branch
              %616 = sbr.rel (0) target = $region102
            $region101: #{temporal_block.1} parent=97 // pred_region
              // Predicated region
              $region114: #{temporal_block.1} parent=101 // pred_check
                _
              $region115: #{temporal_block.1} parent=101 // pred_check_branch
                %637 = sbr.rel (0) target = $region117
              $region116: #{temporal_block.1} parent=101 // pred_region
                loop: start=0, step=1, limit=1
                $region118: #{temporal_block.1} parent=116 // loop_pre_header
                  _
                $region119: #{temporal_block.1} parent=116 // loop_header
                  %s639 = sphi 0, %s643
                  %p640 = scmp.ge.s32.totalorder %s639, 1
                  %s644 = sphi %s612, %s612
                  %s645 = sphi %s608, %s608
                $region120: #{temporal_block.1} parent=116 // loop_header_branch
                  %642 = sbr.rel (%p640) target = $region124
                $region121: #{temporal_block.1} parent=116 // loop_body
                  %v646 = vld [vmem:[%s644] sm:$0xff]
                  %647 = vst [vmem:[%s645] sm:$0xff] %v646
                  %v648 = vld [vmem:[%s644 + $0x48] sm:$0xff]
                  %649 = vst [vmem:[%s645 + $0x8] sm:$0xff] %v648
                  %v650 = vld [vmem:[%s644 + $0x90] sm:$0xff]
                  %651 = vst [vmem:[%s645 + $0x10] sm:$0xff] %v650
                  %v652 = vld [vmem:[%s644 + $0xd8] sm:$0xff]
                  %653 = vst [vmem:[%s645 + $0x18] sm:$0xff] %v652
                $region122: #{temporal_block.1} parent=116 // loop_footer
                  %s643 = sadd.s32 1, %s639
                $region123: #{temporal_block.1} parent=116 // loop_footer_branch
                  %638 = sbr.rel target = $region119
                $region124: #{temporal_block.1} parent=116 // loop_exit
                  _
              $region117: #{temporal_block.1} parent=101 // pred_fallthru
                _
              // Predicated region
              $region125: #{temporal_block.1} parent=101 // pred_check
                _
              $region126: #{temporal_block.1} parent=101 // pred_check_branch
                %655 = sbr.rel target = $region128
              $region127: #{temporal_block.1} parent=101 // pred_region
                _
              $region128: #{temporal_block.1} parent=101 // pred_fallthru
                _
            $region102: #{temporal_block.1} parent=97 // pred_fallthru
              _
            // Predicated region
            $region103: #{temporal_block.1} parent=97 // pred_check
              _
            $region104: #{temporal_block.1} parent=97 // pred_check_branch
              %618 = sbr.rel target = $region106
            $region105: #{temporal_block.1} parent=97 // pred_region
              loop: start=0, step=1, limit=1
              $region107: #{temporal_block.1} parent=105 // loop_pre_header
                _
              $region108: #{temporal_block.1} parent=105 // loop_header
                %s621 = sphi 0, %s625
                %p622 = scmp.ge.s32.totalorder %s621, 1
                %s626 = sphi %s612, %s612
                %s627 = sphi %s608, %s608
              $region109: #{temporal_block.1} parent=105 // loop_header_branch
                %624 = sbr.rel (%p622) target = $region113
              $region110: #{temporal_block.1} parent=105 // loop_body
                %v628 = vld [vmem:[%s626] sm:$0xff]
                %629 = vst [vmem:[%s627] sm:$0xff] %v628
                %v630 = vld [vmem:[%s626 + $0x48] sm:$0xff]
                %631 = vst [vmem:[%s627 + $0x8] sm:$0xff] %v630
                %v632 = vld [vmem:[%s626 + $0x90] sm:$0xff]
                %633 = vst [vmem:[%s627 + $0x10] sm:$0xff] %v632
                %v634 = vld [vmem:[%s626 + $0xd8] sm:$0xff]
                %635 = vst [vmem:[%s627 + $0x18] sm:$0xff] %v634
              $region111: #{temporal_block.1} parent=105 // loop_footer
                %s625 = sadd.s32 1, %s621
              $region112: #{temporal_block.1} parent=105 // loop_footer_branch
                %620 = sbr.rel target = $region108
              $region113: #{temporal_block.1} parent=105 // loop_exit
                _
            $region106: #{temporal_block.1} parent=97 // pred_fallthru
              _
          $region98: #{temporal_block.1} parent=93 // pred_fallthru
            _
          %656 = vnop
        $region94: #{temporal_block.1} parent=23 // pred_fallthru
          _
      $region24: #{temporal_block.1} parent=5 // pred_fallthru
        _
      %p657 = scmp.le.s32.totalorder 1, %s13
      %p658 = scmp.lt.s32.totalorder %s13, 3
      %p659 = pnand %p657, %p658
      %p660 = pneg %p659
      // Predicated region
      $region129: #{temporal_block.1} parent=5 // pred_check
        _
      $region130: #{temporal_block.1} parent=5 // pred_check_branch
        %662 = sbr.rel (%p659) target = $region132
      $region131: #{temporal_block.1} parent=5 // pred_region
        %s663 = ssub.s32 %s13, 1
        %s664 = sand.u32 %s26, 1
        %s665 = sand.u32 %s26, 1
        %s666 = smul.addr %s665, 128
        %s667 = scalar_lea.vmem [#allocation2], %s666
        // Predicated region
        $region133: #{temporal_block.1} parent=131 // pred_check
          %p668 = pneg %p39
        $region134: #{temporal_block.1} parent=131 // pred_check_branch
          %670 = sbr.rel (%p668) target = $region136
        $region135: #{temporal_block.1} parent=131 // pred_region
          _
        $region136: #{temporal_block.1} parent=131 // pred_fallthru
          _
        %s671 = sand.u32 %s56, 1
        %s672 = sand.u32 %s56, 1
        %s673 = smul.addr %s672, 32
        %s674 = scalar_lea.vmem [#allocation3], %s673
        // Predicated region
        $region137: #{temporal_block.1} parent=131 // pred_check
          %p675 = pneg %p69
        $region138: #{temporal_block.1} parent=131 // pred_check_branch
          %677 = sbr.rel (%p675) target = $region140
        $region139: #{temporal_block.1} parent=131 // pred_region
          _
        $region140: #{temporal_block.1} parent=131 // pred_fallthru
          _
        %s678 = sand.u32 %s26, 1
        %s679 = sand.u32 %s26, 1
        %s680 = smul.addr %s679, 128
        %s681 = scalar_lea.vmem [#allocation2], %s680
        %p682 = pneg %p39
        %p683 = pneg %p36
        %s684 = sand.u32 %s56, 1
        %s685 = sand.u32 %s56, 1
        %s686 = smul.addr %s685, 32
        %s687 = scalar_lea.vmem [#allocation3], %s686
        %p688 = pneg %p69
        %p689 = pneg %p66
        %p690 = pneg %p90
        %p691 = pneg %p87
        %p692 = pneg %p111
        %p693 = pneg %p108
        %p694 = pneg %p137
        %p695 = pneg %p134
        %s696 = sand.u32 %s124, 1
        %s697 = scalar_lea.sflag [#allocation5], %s696
        %s698 = sand.u32 %s124, 1
        %s699 = smul.addr %s698, 128
        %s700 = scalar_lea.vmem [#allocation4], %s699
        %s701 = smul.u32 4, %s18
        %s702 = ssub.s32 9, %s701
        %p703 = scmp.lt.s32.totalorder %s702, 4
        %s704 = scalar_select %p703, %s702, 4
        %s705 = smul.u32 512, %s704
        %s706 = sadd.s32 %s18, 1
        %s707 = smul.u32 %s706, 4
        %s708 = smul.u32 4, %s18
        %v709 = vld [vmem:[%s3] sm:$0xff]
        %711 = vset.pattern.permute.xlu0 0
        %712 = vperm.xlu0 %711, %v709
        %v713 = vpop.permute.xlu0 %712
        %715 = vset.pattern.permute.xlu0 1
        %716 = vperm.xlu0 %715, %v709
        %v717 = vpop.permute.xlu0 %716
        %719 = vset.pattern.permute.xlu0 2
        %720 = vperm.xlu0 %719, %v709
        %v721 = vpop.permute.xlu0 %720
        %723 = vset.pattern.permute.xlu0 3
        %724 = vperm.xlu0 %723, %v709
        %v725 = vpop.permute.xlu0 %724
        %727 = vset.pattern.permute.xlu0 4
        %728 = vperm.xlu0 %727, %v709
        %v729 = vpop.permute.xlu0 %728
        %731 = vset.pattern.permute.xlu0 5
        %732 = vperm.xlu0 %731, %v709
        %v733 = vpop.permute.xlu0 %732
        %735 = vset.pattern.permute.xlu0 6
        %736 = vperm.xlu0 %735, %v709
        %v737 = vpop.permute.xlu0 %736
        %739 = vset.pattern.permute.xlu0 7
        %740 = vperm.xlu0 %739, %v709
        %v741 = vpop.permute.xlu0 %740
        %v743 = vld [vmem:[%s2] sm:$0xff]
        %v744 = vld [vmem:[%s2 + $0x8] sm:$0xff]
        %v745 = vld [vmem:[%s2 + $0x10] sm:$0xff]
        %v746 = vld [vmem:[%s2 + $0x18] sm:$0xff]
        %v747 = vld [vmem:[%s667] sm:$0xff]
        %v748 = vld [vmem:[%s667 + $0x8] sm:$0xff]
        %v749 = vld [vmem:[%s667 + $0x10] sm:$0xff]
        %v750 = vld [vmem:[%s667 + $0x18] sm:$0xff]
        %v751 = vld [vmem:[%s674] sm:$0xff]
        %v752 = vmul.f32 %v713, %v747
        %v753 = vmul.f32 %v713, %v748
        %v754 = vmul.f32 %v713, %v749
        %v755 = vmul.f32 %v713, %v750
        %v756 = vmul.f32 %v717, %v747
        %v757 = vmul.f32 %v717, %v748
        %v758 = vmul.f32 %v717, %v749
        %v759 = vmul.f32 %v717, %v750
        %v760 = vmul.f32 %v717, %v751
        %766 = vrot.lane.b32.xlu0 %v756, 126
        %v767 = vpop.permute.xlu0 %766
        %768 = vrot.lane.b32.xlu0 %v757, 126
        %v769 = vpop.permute.xlu0 %768
        %770 = vrot.lane.b32.xlu0 %v758, 126
        %v771 = vpop.permute.xlu0 %770
        %772 = vrot.lane.b32.xlu0 %v759, 126
        %v773 = vpop.permute.xlu0 %772
        %774 = vrot.lane.b32.xlu0 %v760, 126
        %v775 = vpop.permute.xlu0 %774
        %vm776 = vcmask 1031168
        %v777 = vsel %vm776, %v767, %v769
        %v778 = vsel %vm776, %v769, %v771
        %v779 = vsel %vm776, %v771, %v773
        %v780 = vsel %vm776, %v773, %v775
        %v785 = vadd.f32 %v752, %v777
        %v786 = vadd.f32 %v753, %v778
        %v787 = vadd.f32 %v754, %v779
        %v788 = vadd.f32 %v755, %v780
        %v789 = vmul.f32 %v721, %v747
        %v790 = vmul.f32 %v721, %v748
        %v791 = vmul.f32 %v721, %v749
        %v792 = vmul.f32 %v721, %v750
        %v793 = vmul.f32 %v721, %v751
        %799 = vrot.lane.b32.xlu0 %v789, 124
        %v800 = vpop.permute.xlu0 %799
        %801 = vrot.lane.b32.xlu0 %v790, 124
        %v802 = vpop.permute.xlu0 %801
        %803 = vrot.lane.b32.xlu0 %v791, 124
        %v804 = vpop.permute.xlu0 %803
        %805 = vrot.lane.b32.xlu0 %v792, 124
        %v806 = vpop.permute.xlu0 %805
        %807 = vrot.lane.b32.xlu0 %v793, 124
        %v808 = vpop.permute.xlu0 %807
        %vm809 = vcmask 1014784
        %v810 = vsel %vm809, %v800, %v802
        %v811 = vsel %vm809, %v802, %v804
        %v812 = vsel %vm809, %v804, %v806
        %v813 = vsel %vm809, %v806, %v808
        %v818 = vadd.f32 %v785, %v810
        %v819 = vadd.f32 %v786, %v811
        %v820 = vadd.f32 %v787, %v812
        %v821 = vadd.f32 %v788, %v813
        %vm822 = vcmask 64512
        %v824 = vsel %vm822, %v743, 0
        %826 = vmatprep.subr.mxu0 %v819
        %827 = vmatpush1.msra.mxu0 %v818
        %828 = vmatprep.subr.mxu0 0.0
        %829 = vmatpush1.msra.mxu0 0.0
        %830 = vmatprep.subr.mxu0 0.0
        %831 = vmatpush1.msra.mxu0 0.0
        %832 = vmatprep.subr.mxu0 0.0
        %833 = vmatpush1.msra.mxu0 0.0
        %834 = vmatprep.subr.mxu0 0.0
        %835 = vmatpush1.msra.mxu0 0.0
        %836 = vmatprep.subr.mxu0 0.0
        %837 = vmatpush1.msra.mxu0 0.0
        %838 = vmatprep.subr.mxu0 0.0
        %839 = vmatpush1.msra.mxu0 0.0
        %840 = vmatprep.subr.mxu0 0.0
        %841 = vmatpush1.msra.mxu0 0.0
        %842 = vmatprep.subr.mxu0 0.0
        %843 = vmatpush1.msra.mxu0 0.0
        %844 = vmatprep.subr.mxu0 0.0
        %845 = vmatpush1.msra.mxu0 0.0
        %846 = vmatprep.subr.mxu0 0.0
        %847 = vmatpush1.msra.mxu0 0.0
        %848 = vmatprep.subr.mxu0 0.0
        %849 = vmatpush1.msra.mxu0 0.0
        %850 = vmatprep.subr.mxu0 0.0
        %851 = vmatpush1.msra.mxu0 0.0
        %852 = vmatprep.subr.mxu0 0.0
        %853 = vmatpush1.msra.mxu0 0.0
        %854 = vmatprep.subr.mxu0 0.0
        %855 = vmatpush1.msra.mxu0 0.0
        %856 = vmatprep.subr.mxu0 0.0
        %857 = vmatpush1.msra.mxu0 0.0
        %858 = vmatprep.subr.mxu0 0.0
        %859 = vmatpush1.msra.mxu0 0.0
        %860 = vmatprep.subr.mxu0 0.0
        %861 = vmatpush1.msra.mxu0 0.0
        %862 = vmatprep.subr.mxu0 0.0
        %863 = vmatpush1.msra.mxu0 0.0
        %864 = vmatprep.subr.mxu0 0.0
        %865 = vmatpush1.msra.mxu0 0.0
        %866 = vmatprep.subr.mxu0 0.0
        %867 = vmatpush1.msra.mxu0 0.0
        %868 = vmatprep.subr.mxu0 0.0
        %869 = vmatpush1.msra.mxu0 0.0
        %870 = vmatprep.subr.mxu0 0.0
        %871 = vmatpush1.msra.mxu0 0.0
        %872 = vmatprep.subr.mxu0 0.0
        %873 = vmatpush1.msra.mxu0 0.0
        %874 = vmatprep.subr.mxu0 0.0
        %875 = vmatpush1.msra.mxu0 0.0
        %876 = vmatprep.subr.mxu0 0.0
        %877 = vmatpush1.msra.mxu0 0.0
        %878 = vmatprep.subr.mxu0 0.0
        %879 = vmatpush1.msra.mxu0 0.0
        %880 = vmatprep.subr.mxu0 0.0
        %881 = vmatpush1.msra.mxu0 0.0
        %882 = vmatprep.subr.mxu0 0.0
        %883 = vmatpush1.msra.mxu0 0.0
        %884 = vmatprep.subr.mxu0 0.0
        %885 = vmatpush1.msra.mxu0 0.0
        %886 = vmatprep.subr.mxu0 0.0
        %887 = vmatpush1.msra.mxu0 0.0
        %888 = vmatprep.subr.mxu0 0.0
        %889 = vmatpush1.msra.mxu0 0.0
        %890 = vmatprep.mubr.f32.mxu0 0.0
        %891 = vmatmul.mubr.f32.gmra.mrb[0].mxu0 %v824
        %v892 = vpop.f32.mrb[0].mxu0
        %v893 = vadd.f32 %v725, %v892
        %v894 = vpop.f32.mrb[0].mxu0
        %v895 = vadd.f32 %v725, %v894
        %896 = vdwg.mxu0
        %897 = vmatprep.subr.mxu0 %v821
        %898 = vmatpush1.msra.mxu0 %v820
        %899 = vmatprep.subr.mxu0 0.0
        %900 = vmatpush1.msra.mxu0 0.0
        %901 = vmatprep.subr.mxu0 0.0
        %902 = vmatpush1.msra.mxu0 0.0
        %903 = vmatprep.subr.mxu0 0.0
        %904 = vmatpush1.msra.mxu0 0.0
        %905 = vmatprep.subr.mxu0 0.0
        %906 = vmatpush1.msra.mxu0 0.0
        %907 = vmatprep.subr.mxu0 0.0
        %908 = vmatpush1.msra.mxu0 0.0
        %909 = vmatprep.subr.mxu0 0.0
        %910 = vmatpush1.msra.mxu0 0.0
        %911 = vmatprep.subr.mxu0 0.0
        %912 = vmatpush1.msra.mxu0 0.0
        %913 = vmatprep.subr.mxu0 0.0
        %914 = vmatpush1.msra.mxu0 0.0
        %915 = vmatprep.subr.mxu0 0.0
        %916 = vmatpush1.msra.mxu0 0.0
        %917 = vmatprep.subr.mxu0 0.0
        %918 = vmatpush1.msra.mxu0 0.0
        %919 = vmatprep.subr.mxu0 0.0
        %920 = vmatpush1.msra.mxu0 0.0
        %921 = vmatprep.subr.mxu0 0.0
        %922 = vmatpush1.msra.mxu0 0.0
        %923 = vmatprep.subr.mxu0 0.0
        %924 = vmatpush1.msra.mxu0 0.0
        %925 = vmatprep.subr.mxu0 0.0
        %926 = vmatpush1.msra.mxu0 0.0
        %927 = vmatprep.subr.mxu0 0.0
        %928 = vmatpush1.msra.mxu0 0.0
        %929 = vmatprep.subr.mxu0 0.0
        %930 = vmatpush1.msra.mxu0 0.0
        %931 = vmatprep.subr.mxu0 0.0
        %932 = vmatpush1.msra.mxu0 0.0
        %933 = vmatprep.subr.mxu0 0.0
        %934 = vmatpush1.msra.mxu0 0.0
        %935 = vmatprep.subr.mxu0 0.0
        %936 = vmatpush1.msra.mxu0 0.0
        %937 = vmatprep.subr.mxu0 0.0
        %938 = vmatpush1.msra.mxu0 0.0
        %939 = vmatprep.subr.mxu0 0.0
        %940 = vmatpush1.msra.mxu0 0.0
        %941 = vmatprep.subr.mxu0 0.0
        %942 = vmatpush1.msra.mxu0 0.0
        %943 = vmatprep.subr.mxu0 0.0
        %944 = vmatpush1.msra.mxu0 0.0
        %945 = vmatprep.subr.mxu0 0.0
        %946 = vmatpush1.msra.mxu0 0.0
        %947 = vmatprep.subr.mxu0 0.0
        %948 = vmatpush1.msra.mxu0 0.0
        %949 = vmatprep.subr.mxu0 0.0
        %950 = vmatpush1.msra.mxu0 0.0
        %951 = vmatprep.subr.mxu0 0.0
        %952 = vmatpush1.msra.mxu0 0.0
        %953 = vmatprep.subr.mxu0 0.0
        %954 = vmatpush1.msra.mxu0 0.0
        %955 = vmatprep.subr.mxu0 0.0
        %956 = vmatpush1.msra.mxu0 0.0
        %957 = vmatprep.subr.mxu0 0.0
        %958 = vmatpush1.msra.mxu0 0.0
        %959 = vmatprep.subr.mxu0 0.0
        %960 = vmatpush1.msra.mxu0 0.0
        %961 = vmatprep.mubr.f32.mxu0 0.0
        %962 = vmatmul.mubr.f32.gmra.mrb[0].mxu0 %v824
        %v963 = vpop.f32.mrb[0].mxu0
        %v964 = vadd.f32 %v725, %v963
        %v965 = vpop.f32.mrb[0].mxu0
        %v966 = vadd.f32 %v725, %v965
        %967 = vdwg.mxu0
        %v969 = vsel %vm822, %v744, 0
        %971 = vmatprep.subr.mxu0 %v819
        %972 = vmatpush1.msra.mxu0 %v818
        %973 = vmatprep.subr.mxu0 0.0
        %974 = vmatpush1.msra.mxu0 0.0
        %975 = vmatprep.subr.mxu0 0.0
        %976 = vmatpush1.msra.mxu0 0.0
        %977 = vmatprep.subr.mxu0 0.0
        %978 = vmatpush1.msra.mxu0 0.0
        %979 = vmatprep.subr.mxu0 0.0
        %980 = vmatpush1.msra.mxu0 0.0
        %981 = vmatprep.subr.mxu0 0.0
        %982 = vmatpush1.msra.mxu0 0.0
        %983 = vmatprep.subr.mxu0 0.0
        %984 = vmatpush1.msra.mxu0 0.0
        %985 = vmatprep.subr.mxu0 0.0
        %986 = vmatpush1.msra.mxu0 0.0
        %987 = vmatprep.subr.mxu0 0.0
        %988 = vmatpush1.msra.mxu0 0.0
        %989 = vmatprep.subr.mxu0 0.0
        %990 = vmatpush1.msra.mxu0 0.0
        %991 = vmatprep.subr.mxu0 0.0
        %992 = vmatpush1.msra.mxu0 0.0
        %993 = vmatprep.subr.mxu0 0.0
        %994 = vmatpush1.msra.mxu0 0.0
        %995 = vmatprep.subr.mxu0 0.0
        %996 = vmatpush1.msra.mxu0 0.0
        %997 = vmatprep.subr.mxu0 0.0
        %998 = vmatpush1.msra.mxu0 0.0
        %999 = vmatprep.subr.mxu0 0.0
        %1000 = vmatpush1.msra.mxu0 0.0
        %1001 = vmatprep.subr.mxu0 0.0
        %1002 = vmatpush1.msra.mxu0 0.0
        %1003 = vmatprep.subr.mxu0 0.0
        %1004 = vmatpush1.msra.mxu0 0.0
        %1005 = vmatprep.subr.mxu0 0.0
        %1006 = vmatpush1.msra.mxu0 0.0
        %1007 = vmatprep.subr.mxu0 0.0
        %1008 = vmatpush1.msra.mxu0 0.0
        %1009 = vmatprep.subr.mxu0 0.0
        %1010 = vmatpush1.msra.mxu0 0.0
        %1011 = vmatprep.subr.mxu0 0.0
        %1012 = vmatpush1.msra.mxu0 0.0
        %1013 = vmatprep.subr.mxu0 0.0
        %1014 = vmatpush1.msra.mxu0 0.0
        %1015 = vmatprep.subr.mxu0 0.0
        %1016 = vmatpush1.msra.mxu0 0.0
        %1017 = vmatprep.subr.mxu0 0.0
        %1018 = vmatpush1.msra.mxu0 0.0
        %1019 = vmatprep.subr.mxu0 0.0
        %1020 = vmatpush1.msra.mxu0 0.0
        %1021 = vmatprep.subr.mxu0 0.0
        %1022 = vmatpush1.msra.mxu0 0.0
        %1023 = vmatprep.subr.mxu0 0.0
        %1024 = vmatpush1.msra.mxu0 0.0
        %1025 = vmatprep.subr.mxu0 0.0
        %1026 = vmatpush1.msra.mxu0 0.0
        %1027 = vmatprep.subr.mxu0 0.0
        %1028 = vmatpush1.msra.mxu0 0.0
        %1029 = vmatprep.subr.mxu0 0.0
        %1030 = vmatpush1.msra.mxu0 0.0
        %1031 = vmatprep.subr.mxu0 0.0
        %1032 = vmatpush1.msra.mxu0 0.0
        %1033 = vmatprep.subr.mxu0 0.0
        %1034 = vmatpush1.msra.mxu0 0.0
        %1035 = vmatprep.mubr.f32.mxu0 0.0
        %1036 = vmatmul.mubr.f32.gmra.mrb[0].mxu0 %v969
        %v1037 = vpop.f32.mrb[0].mxu0
        %v1038 = vadd.f32 %v729, %v1037
        %v1039 = vpop.f32.mrb[0].mxu0
        %v1040 = vadd.f32 %v729, %v1039
        %1041 = vdwg.mxu0
        %1042 = vmatprep.subr.mxu0 %v821
        %1043 = vmatpush1.msra.mxu0 %v820
        %1044 = vmatprep.subr.mxu0 0.0
        %1045 = vmatpush1.msra.mxu0 0.0
        %1046 = vmatprep.subr.mxu0 0.0
        %1047 = vmatpush1.msra.mxu0 0.0
        %1048 = vmatprep.subr.mxu0 0.0
        %1049 = vmatpush1.msra.mxu0 0.0
        %1050 = vmatprep.subr.mxu0 0.0
        %1051 = vmatpush1.msra.mxu0 0.0
        %1052 = vmatprep.subr.mxu0 0.0
        %1053 = vmatpush1.msra.mxu0 0.0
        %1054 = vmatprep.subr.mxu0 0.0
        %1055 = vmatpush1.msra.mxu0 0.0
        %1056 = vmatprep.subr.mxu0 0.0
        %1057 = vmatpush1.msra.mxu0 0.0
        %1058 = vmatprep.subr.mxu0 0.0
        %1059 = vmatpush1.msra.mxu0 0.0
        %1060 = vmatprep.subr.mxu0 0.0
        %1061 = vmatpush1.msra.mxu0 0.0
        %1062 = vmatprep.subr.mxu0 0.0
        %1063 = vmatpush1.msra.mxu0 0.0
        %1064 = vmatprep.subr.mxu0 0.0
        %1065 = vmatpush1.msra.mxu0 0.0
        %1066 = vmatprep.subr.mxu0 0.0
        %1067 = vmatpush1.msra.mxu0 0.0
        %1068 = vmatprep.subr.mxu0 0.0
        %1069 = vmatpush1.msra.mxu0 0.0
        %1070 = vmatprep.subr.mxu0 0.0
        %1071 = vmatpush1.msra.mxu0 0.0
        %1072 = vmatprep.subr.mxu0 0.0
        %1073 = vmatpush1.msra.mxu0 0.0
        %1074 = vmatprep.subr.mxu0 0.0
        %1075 = vmatpush1.msra.mxu0 0.0
        %1076 = vmatprep.subr.mxu0 0.0
        %1077 = vmatpush1.msra.mxu0 0.0
        %1078 = vmatprep.subr.mxu0 0.0
        %1079 = vmatpush1.msra.mxu0 0.0
        %1080 = vmatprep.subr.mxu0 0.0
        %1081 = vmatpush1.msra.mxu0 0.0
        %1082 = vmatprep.subr.mxu0 0.0
        %1083 = vmatpush1.msra.mxu0 0.0
        %1084 = vmatprep.subr.mxu0 0.0
        %1085 = vmatpush1.msra.mxu0 0.0
        %1086 = vmatprep.subr.mxu0 0.0
        %1087 = vmatpush1.msra.mxu0 0.0
        %1088 = vmatprep.subr.mxu0 0.0
        %1089 = vmatpush1.msra.mxu0 0.0
        %1090 = vmatprep.subr.mxu0 0.0
        %1091 = vmatpush1.msra.mxu0 0.0
        %1092 = vmatprep.subr.mxu0 0.0
        %1093 = vmatpush1.msra.mxu0 0.0
        %1094 = vmatprep.subr.mxu0 0.0
        %1095 = vmatpush1.msra.mxu0 0.0
        %1096 = vmatprep.subr.mxu0 0.0
        %1097 = vmatpush1.msra.mxu0 0.0
        %1098 = vmatprep.subr.mxu0 0.0
        %1099 = vmatpush1.msra.mxu0 0.0
        %1100 = vmatprep.subr.mxu0 0.0
        %1101 = vmatpush1.msra.mxu0 0.0
        %1102 = vmatprep.subr.mxu0 0.0
        %1103 = vmatpush1.msra.mxu0 0.0
        %1104 = vmatprep.subr.mxu0 0.0
        %1105 = vmatpush1.msra.mxu0 0.0
        %1106 = vmatprep.mubr.f32.mxu0 0.0
        %1107 = vmatmul.mubr.f32.gmra.mrb[0].mxu0 %v969
        %v1108 = vpop.f32.mrb[0].mxu0
        %v1109 = vadd.f32 %v729, %v1108
        %v1110 = vpop.f32.mrb[0].mxu0
        %v1111 = vadd.f32 %v729, %v1110
        %1112 = vdwg.mxu0
        %v1114 = vsel %vm822, %v745, 0
        %1116 = vmatprep.subr.mxu0 %v819
        %1117 = vmatpush1.msra.mxu0 %v818
        %1118 = vmatprep.subr.mxu0 0.0
        %1119 = vmatpush1.msra.mxu0 0.0
        %1120 = vmatprep.subr.mxu0 0.0
        %1121 = vmatpush1.msra.mxu0 0.0
        %1122 = vmatprep.subr.mxu0 0.0
        %1123 = vmatpush1.msra.mxu0 0.0
        %1124 = vmatprep.subr.mxu0 0.0
        %1125 = vmatpush1.msra.mxu0 0.0
        %1126 = vmatprep.subr.mxu0 0.0
        %1127 = vmatpush1.msra.mxu0 0.0
        %1128 = vmatprep.subr.mxu0 0.0
        %1129 = vmatpush1.msra.mxu0 0.0
        %1130 = vmatprep.subr.mxu0 0.0
        %1131 = vmatpush1.msra.mxu0 0.0
        %1132 = vmatprep.subr.mxu0 0.0
        %1133 = vmatpush1.msra.mxu0 0.0
        %1134 = vmatprep.subr.mxu0 0.0
        %1135 = vmatpush1.msra.mxu0 0.0
        %1136 = vmatprep.subr.mxu0 0.0
        %1137 = vmatpush1.msra.mxu0 0.0
        %1138 = vmatprep.subr.mxu0 0.0
        %1139 = vmatpush1.msra.mxu0 0.0
        %1140 = vmatprep.subr.mxu0 0.0
        %1141 = vmatpush1.msra.mxu0 0.0
        %1142 = vmatprep.subr.mxu0 0.0
        %1143 = vmatpush1.msra.mxu0 0.0
        %1144 = vmatprep.subr.mxu0 0.0
        %1145 = vmatpush1.msra.mxu0 0.0
        %1146 = vmatprep.subr.mxu0 0.0
        %1147 = vmatpush1.msra.mxu0 0.0
        %1148 = vmatprep.subr.mxu0 0.0
        %1149 = vmatpush1.msra.mxu0 0.0
        %1150 = vmatprep.subr.mxu0 0.0
        %1151 = vmatpush1.msra.mxu0 0.0
        %1152 = vmatprep.subr.mxu0 0.0
        %1153 = vmatpush1.msra.mxu0 0.0
        %1154 = vmatprep.subr.mxu0 0.0
        %1155 = vmatpush1.msra.mxu0 0.0
        %1156 = vmatprep.subr.mxu0 0.0
        %1157 = vmatpush1.msra.mxu0 0.0
        %1158 = vmatprep.subr.mxu0 0.0
        %1159 = vmatpush1.msra.mxu0 0.0
        %1160 = vmatprep.subr.mxu0 0.0
        %1161 = vmatpush1.msra.mxu0 0.0
        %1162 = vmatprep.subr.mxu0 0.0
        %1163 = vmatpush1.msra.mxu0 0.0
        %1164 = vmatprep.subr.mxu0 0.0
        %1165 = vmatpush1.msra.mxu0 0.0
        %1166 = vmatprep.subr.mxu0 0.0
        %1167 = vmatpush1.msra.mxu0 0.0
        %1168 = vmatprep.subr.mxu0 0.0
        %1169 = vmatpush1.msra.mxu0 0.0
        %1170 = vmatprep.subr.mxu0 0.0
        %1171 = vmatpush1.msra.mxu0 0.0
        %1172 = vmatprep.subr.mxu0 0.0
        %1173 = vmatpush1.msra.mxu0 0.0
        %1174 = vmatprep.subr.mxu0 0.0
        %1175 = vmatpush1.msra.mxu0 0.0
        %1176 = vmatprep.subr.mxu0 0.0
        %1177 = vmatpush1.msra.mxu0 0.0
        %1178 = vmatprep.subr.mxu0 0.0
        %1179 = vmatpush1.msra.mxu0 0.0
        %1180 = vmatprep.mubr.f32.mxu0 0.0
        %1181 = vmatmul.mubr.f32.gmra.mrb[0].mxu0 %v1114
        %v1182 = vpop.f32.mrb[0].mxu0
        %v1183 = vadd.f32 %v733, %v1182
        %v1184 = vpop.f32.mrb[0].mxu0
        %v1185 = vadd.f32 %v733, %v1184
        %1186 = vdwg.mxu0
        %1187 = vmatprep.subr.mxu0 %v821
        %1188 = vmatpush1.msra.mxu0 %v820
        %1189 = vmatprep.subr.mxu0 0.0
        %1190 = vmatpush1.msra.mxu0 0.0
        %1191 = vmatprep.subr.mxu0 0.0
        %1192 = vmatpush1.msra.mxu0 0.0
        %1193 = vmatprep.subr.mxu0 0.0
        %1194 = vmatpush1.msra.mxu0 0.0
        %1195 = vmatprep.subr.mxu0 0.0
        %1196 = vmatpush1.msra.mxu0 0.0
        %1197 = vmatprep.subr.mxu0 0.0
        %1198 = vmatpush1.msra.mxu0 0.0
        %1199 = vmatprep.subr.mxu0 0.0
        %1200 = vmatpush1.msra.mxu0 0.0
        %1201 = vmatprep.subr.mxu0 0.0
        %1202 = vmatpush1.msra.mxu0 0.0
        %1203 = vmatprep.subr.mxu0 0.0
        %1204 = vmatpush1.msra.mxu0 0.0
        %1205 = vmatprep.subr.mxu0 0.0
        %1206 = vmatpush1.msra.mxu0 0.0
        %1207 = vmatprep.subr.mxu0 0.0
        %1208 = vmatpush1.msra.mxu0 0.0
        %1209 = vmatprep.subr.mxu0 0.0
        %1210 = vmatpush1.msra.mxu0 0.0
        %1211 = vmatprep.subr.mxu0 0.0
        %1212 = vmatpush1.msra.mxu0 0.0
        %1213 = vmatprep.subr.mxu0 0.0
        %1214 = vmatpush1.msra.mxu0 0.0
        %1215 = vmatprep.subr.mxu0 0.0
        %1216 = vmatpush1.msra.mxu0 0.0
        %1217 = vmatprep.subr.mxu0 0.0
        %1218 = vmatpush1.msra.mxu0 0.0
        %1219 = vmatprep.subr.mxu0 0.0
        %1220 = vmatpush1.msra.mxu0 0.0
        %1221 = vmatprep.subr.mxu0 0.0
        %1222 = vmatpush1.msra.mxu0 0.0
        %1223 = vmatprep.subr.mxu0 0.0
        %1224 = vmatpush1.msra.mxu0 0.0
        %1225 = vmatprep.subr.mxu0 0.0
        %1226 = vmatpush1.msra.mxu0 0.0
        %1227 = vmatprep.subr.mxu0 0.0
        %1228 = vmatpush1.msra.mxu0 0.0
        %1229 = vmatprep.subr.mxu0 0.0
        %1230 = vmatpush1.msra.mxu0 0.0
        %1231 = vmatprep.subr.mxu0 0.0
        %1232 = vmatpush1.msra.mxu0 0.0
        %1233 = vmatprep.subr.mxu0 0.0
        %1234 = vmatpush1.msra.mxu0 0.0
        %1235 = vmatprep.subr.mxu0 0.0
        %1236 = vmatpush1.msra.mxu0 0.0
        %1237 = vmatprep.subr.mxu0 0.0
        %1238 = vmatpush1.msra.mxu0 0.0
        %1239 = vmatprep.subr.mxu0 0.0
        %1240 = vmatpush1.msra.mxu0 0.0
        %1241 = vmatprep.subr.mxu0 0.0
        %1242 = vmatpush1.msra.mxu0 0.0
        %1243 = vmatprep.subr.mxu0 0.0
        %1244 = vmatpush1.msra.mxu0 0.0
        %1245 = vmatprep.subr.mxu0 0.0
        %1246 = vmatpush1.msra.mxu0 0.0
        %1247 = vmatprep.subr.mxu0 0.0
        %1248 = vmatpush1.msra.mxu0 0.0
        %1249 = vmatprep.subr.mxu0 0.0
        %1250 = vmatpush1.msra.mxu0 0.0
        %1251 = vmatprep.mubr.f32.mxu0 0.0
        %1252 = vmatmul.mubr.f32.gmra.mrb[0].mxu0 %v1114
        %v1253 = vpop.f32.mrb[0].mxu0
        %v1254 = vadd.f32 %v733, %v1253
        %v1255 = vpop.f32.mrb[0].mxu0
        %v1256 = vadd.f32 %v733, %v1255
        %1257 = vdwg.mxu0
        %s1258 = scalar_lea.vmem %s667, 32 [#allocation2]
        %v1259 = vld [vmem:[%s1258] sm:$0xff]
        %v1260 = vld [vmem:[%s1258 + $0x8] sm:$0xff]
        %v1261 = vld [vmem:[%s1258 + $0x10] sm:$0xff]
        %v1262 = vld [vmem:[%s1258 + $0x18] sm:$0xff]
        %s1263 = scalar_lea.vmem %s674, 8 [#allocation3]
        %v1264 = vld [vmem:[%s1263] sm:$0xff]
        %v1265 = vmul.f32 %v713, %v1259
        %v1266 = vmul.f32 %v713, %v1260
        %v1267 = vmul.f32 %v713, %v1261
        %v1268 = vmul.f32 %v713, %v1262
        %v1269 = vmul.f32 %v717, %v1259
        %v1270 = vmul.f32 %v717, %v1260
        %v1271 = vmul.f32 %v717, %v1261
        %v1272 = vmul.f32 %v717, %v1262
        %v1273 = vmul.f32 %v717, %v1264
        %1279 = vrot.lane.b32.xlu0 %v1269, 126
        %v1280 = vpop.permute.xlu0 %1279
        %1281 = vrot.lane.b32.xlu0 %v1270, 126
        %v1282 = vpop.permute.xlu0 %1281
        %1283 = vrot.lane.b32.xlu0 %v1271, 126
        %v1284 = vpop.permute.xlu0 %1283
        %1285 = vrot.lane.b32.xlu0 %v1272, 126
        %v1286 = vpop.permute.xlu0 %1285
        %1287 = vrot.lane.b32.xlu0 %v1273, 126
        %v1288 = vpop.permute.xlu0 %1287
        %v1289 = vsel %vm776, %v1280, %v1282
        %v1290 = vsel %vm776, %v1282, %v1284
        %v1291 = vsel %vm776, %v1284, %v1286
        %v1292 = vsel %vm776, %v1286, %v1288
        %v1297 = vadd.f32 %v1265, %v1289
        %v1298 = vadd.f32 %v1266, %v1290
        %v1299 = vadd.f32 %v1267, %v1291
        %v1300 = vadd.f32 %v1268, %v1292
        %v1301 = vmul.f32 %v721, %v1259
        %v1302 = vmul.f32 %v721, %v1260
        %v1303 = vmul.f32 %v721, %v1261
        %v1304 = vmul.f32 %v721, %v1262
        %v1305 = vmul.f32 %v721, %v1264
        %1311 = vrot.lane.b32.xlu0 %v1301, 124
        %v1312 = vpop.permute.xlu0 %1311
        %1313 = vrot.lane.b32.xlu0 %v1302, 124
        %v1314 = vpop.permute.xlu0 %1313
        %1315 = vrot.lane.b32.xlu0 %v1303, 124
        %v1316 = vpop.permute.xlu0 %1315
        %1317 = vrot.lane.b32.xlu0 %v1304, 124
        %v1318 = vpop.permute.xlu0 %1317
        %1319 = vrot.lane.b32.xlu0 %v1305, 124
        %v1320 = vpop.permute.xlu0 %1319
        %v1321 = vsel %vm809, %v1312, %v1314
        %v1322 = vsel %vm809, %v1314, %v1316
        %v1323 = vsel %vm809, %v1316, %v1318
        %v1324 = vsel %vm809, %v1318, %v1320
        %v1329 = vadd.f32 %v1297, %v1321
        %v1330 = vadd.f32 %v1298, %v1322
        %v1331 = vadd.f32 %v1299, %v1323
        %v1332 = vadd.f32 %v1300, %v1324
        %1333 = vmatprep.subr.mxu0 %v1330
        %1334 = vmatpush1.msra.mxu0 %v1329
        %1335 = vmatprep.subr.mxu0 0.0
        %1336 = vmatpush1.msra.mxu0 0.0
        %1337 = vmatprep.subr.mxu0 0.0
        %1338 = vmatpush1.msra.mxu0 0.0
        %1339 = vmatprep.subr.mxu0 0.0
        %1340 = vmatpush1.msra.mxu0 0.0
        %1341 = vmatprep.subr.mxu0 0.0
        %1342 = vmatpush1.msra.mxu0 0.0
        %1343 = vmatprep.subr.mxu0 0.0
        %1344 = vmatpush1.msra.mxu0 0.0
        %1345 = vmatprep.subr.mxu0 0.0
        %1346 = vmatpush1.msra.mxu0 0.0
        %1347 = vmatprep.subr.mxu0 0.0
        %1348 = vmatpush1.msra.mxu0 0.0
        %1349 = vmatprep.subr.mxu0 0.0
        %1350 = vmatpush1.msra.mxu0 0.0
        %1351 = vmatprep.subr.mxu0 0.0
        %1352 = vmatpush1.msra.mxu0 0.0
        %1353 = vmatprep.subr.mxu0 0.0
        %1354 = vmatpush1.msra.mxu0 0.0
        %1355 = vmatprep.subr.mxu0 0.0
        %1356 = vmatpush1.msra.mxu0 0.0
        %1357 = vmatprep.subr.mxu0 0.0
        %1358 = vmatpush1.msra.mxu0 0.0
        %1359 = vmatprep.subr.mxu0 0.0
        %1360 = vmatpush1.msra.mxu0 0.0
        %1361 = vmatprep.subr.mxu0 0.0
        %1362 = vmatpush1.msra.mxu0 0.0
        %1363 = vmatprep.subr.mxu0 0.0
        %1364 = vmatpush1.msra.mxu0 0.0
        %1365 = vmatprep.subr.mxu0 0.0
        %1366 = vmatpush1.msra.mxu0 0.0
        %1367 = vmatprep.subr.mxu0 0.0
        %1368 = vmatpush1.msra.mxu0 0.0
        %1369 = vmatprep.subr.mxu0 0.0
        %1370 = vmatpush1.msra.mxu0 0.0
        %1371 = vmatprep.subr.mxu0 0.0
        %1372 = vmatpush1.msra.mxu0 0.0
        %1373 = vmatprep.subr.mxu0 0.0
        %1374 = vmatpush1.msra.mxu0 0.0
        %1375 = vmatprep.subr.mxu0 0.0
        %1376 = vmatpush1.msra.mxu0 0.0
        %1377 = vmatprep.subr.mxu0 0.0
        %1378 = vmatpush1.msra.mxu0 0.0
        %1379 = vmatprep.subr.mxu0 0.0
        %1380 = vmatpush1.msra.mxu0 0.0
        %1381 = vmatprep.subr.mxu0 0.0
        %1382 = vmatpush1.msra.mxu0 0.0
        %1383 = vmatprep.subr.mxu0 0.0
        %1384 = vmatpush1.msra.mxu0 0.0
        %1385 = vmatprep.subr.mxu0 0.0
        %1386 = vmatpush1.msra.mxu0 0.0
        %1387 = vmatprep.subr.mxu0 0.0
        %1388 = vmatpush1.msra.mxu0 0.0
        %1389 = vmatprep.subr.mxu0 0.0
        %1390 = vmatpush1.msra.mxu0 0.0
        %1391 = vmatprep.subr.mxu0 0.0
        %1392 = vmatpush1.msra.mxu0 0.0
        %1393 = vmatprep.subr.mxu0 0.0
        %1394 = vmatpush1.msra.mxu0 0.0
        %1395 = vmatprep.subr.mxu0 0.0
        %1396 = vmatpush1.msra.mxu0 0.0
        %1397 = vmatprep.mubr.f32.mxu0 0.0
        %1398 = vmatmul.mubr.f32.gmra.mrb[0].mxu0 %v824
        %v1399 = vpop.f32.mrb[0].mxu0
        %v1400 = vadd.f32 %v725, %v1399
        %v1401 = vpop.f32.mrb[0].mxu0
        %v1402 = vadd.f32 %v725, %v1401
        %1403 = vdwg.mxu0
        %1404 = vmatprep.subr.mxu0 %v1332
        %1405 = vmatpush1.msra.mxu0 %v1331
        %1406 = vmatprep.subr.mxu0 0.0
        %1407 = vmatpush1.msra.mxu0 0.0
        %1408 = vmatprep.subr.mxu0 0.0
        %1409 = vmatpush1.msra.mxu0 0.0
        %1410 = vmatprep.subr.mxu0 0.0
        %1411 = vmatpush1.msra.mxu0 0.0
        %1412 = vmatprep.subr.mxu0 0.0
        %1413 = vmatpush1.msra.mxu0 0.0
        %1414 = vmatprep.subr.mxu0 0.0
        %1415 = vmatpush1.msra.mxu0 0.0
        %1416 = vmatprep.subr.mxu0 0.0
        %1417 = vmatpush1.msra.mxu0 0.0
        %1418 = vmatprep.subr.mxu0 0.0
        %1419 = vmatpush1.msra.mxu0 0.0
        %1420 = vmatprep.subr.mxu0 0.0
        %1421 = vmatpush1.msra.mxu0 0.0
        %1422 = vmatprep.subr.mxu0 0.0
        %1423 = vmatpush1.msra.mxu0 0.0
        %1424 = vmatprep.subr.mxu0 0.0
        %1425 = vmatpush1.msra.mxu0 0.0
        %1426 = vmatprep.subr.mxu0 0.0
        %1427 = vmatpush1.msra.mxu0 0.0
        %1428 = vmatprep.subr.mxu0 0.0
        %1429 = vmatpush1.msra.mxu0 0.0
        %1430 = vmatprep.subr.mxu0 0.0
        %1431 = vmatpush1.msra.mxu0 0.0
        %1432 = vmatprep.subr.mxu0 0.0
        %1433 = vmatpush1.msra.mxu0 0.0
        %1434 = vmatprep.subr.mxu0 0.0
        %1435 = vmatpush1.msra.mxu0 0.0
        %1436 = vmatprep.subr.mxu0 0.0
        %1437 = vmatpush1.msra.mxu0 0.0
        %1438 = vmatprep.subr.mxu0 0.0
        %1439 = vmatpush1.msra.mxu0 0.0
        %1440 = vmatprep.subr.mxu0 0.0
        %1441 = vmatpush1.msra.mxu0 0.0
        %1442 = vmatprep.subr.mxu0 0.0
        %1443 = vmatpush1.msra.mxu0 0.0
        %1444 = vmatprep.subr.mxu0 0.0
        %1445 = vmatpush1.msra.mxu0 0.0
        %1446 = vmatprep.subr.mxu0 0.0
        %1447 = vmatpush1.msra.mxu0 0.0
        %1448 = vmatprep.subr.mxu0 0.0
        %1449 = vmatpush1.msra.mxu0 0.0
        %1450 = vmatprep.subr.mxu0 0.0
        %1451 = vmatpush1.msra.mxu0 0.0
        %1452 = vmatprep.subr.mxu0 0.0
        %1453 = vmatpush1.msra.mxu0 0.0
        %1454 = vmatprep.subr.mxu0 0.0
        %1455 = vmatpush1.msra.mxu0 0.0
        %1456 = vmatprep.subr.mxu0 0.0
        %1457 = vmatpush1.msra.mxu0 0.0
        %1458 = vmatprep.subr.mxu0 0.0
        %1459 = vmatpush1.msra.mxu0 0.0
        %1460 = vmatprep.subr.mxu0 0.0
        %1461 = vmatpush1.msra.mxu0 0.0
        %1462 = vmatprep.subr.mxu0 0.0
        %1463 = vmatpush1.msra.mxu0 0.0
        %1464 = vmatprep.subr.mxu0 0.0
        %1465 = vmatpush1.msra.mxu0 0.0
        %1466 = vmatprep.subr.mxu0 0.0
        %1467 = vmatpush1.msra.mxu0 0.0
        %1468 = vmatprep.mubr.f32.mxu0 0.0
        %1469 = vmatmul.mubr.f32.gmra.mrb[0].mxu0 %v824
        %v1470 = vpop.f32.mrb[0].mxu0
        %v1471 = vadd.f32 %v725, %v1470
        %v1472 = vpop.f32.mrb[0].mxu0
        %v1473 = vadd.f32 %v725, %v1472
        %1474 = vdwg.mxu0
        %1475 = vmatprep.subr.mxu0 %v1330
        %1476 = vmatpush1.msra.mxu0 %v1329
        %1477 = vmatprep.subr.mxu0 0.0
        %1478 = vmatpush1.msra.mxu0 0.0
        %1479 = vmatprep.subr.mxu0 0.0
        %1480 = vmatpush1.msra.mxu0 0.0
        %1481 = vmatprep.subr.mxu0 0.0
        %1482 = vmatpush1.msra.mxu0 0.0
        %1483 = vmatprep.subr.mxu0 0.0
        %1484 = vmatpush1.msra.mxu0 0.0
        %1485 = vmatprep.subr.mxu0 0.0
        %1486 = vmatpush1.msra.mxu0 0.0
        %1487 = vmatprep.subr.mxu0 0.0
        %1488 = vmatpush1.msra.mxu0 0.0
        %1489 = vmatprep.subr.mxu0 0.0
        %1490 = vmatpush1.msra.mxu0 0.0
        %1491 = vmatprep.subr.mxu0 0.0
        %1492 = vmatpush1.msra.mxu0 0.0
        %1493 = vmatprep.subr.mxu0 0.0
        %1494 = vmatpush1.msra.mxu0 0.0
        %1495 = vmatprep.subr.mxu0 0.0
        %1496 = vmatpush1.msra.mxu0 0.0
        %1497 = vmatprep.subr.mxu0 0.0
        %1498 = vmatpush1.msra.mxu0 0.0
        %1499 = vmatprep.subr.mxu0 0.0
        %1500 = vmatpush1.msra.mxu0 0.0
        %1501 = vmatprep.subr.mxu0 0.0
        %1502 = vmatpush1.msra.mxu0 0.0
        %1503 = vmatprep.subr.mxu0 0.0
        %1504 = vmatpush1.msra.mxu0 0.0
        %1505 = vmatprep.subr.mxu0 0.0
        %1506 = vmatpush1.msra.mxu0 0.0
        %1507 = vmatprep.subr.mxu0 0.0
        %1508 = vmatpush1.msra.mxu0 0.0
        %1509 = vmatprep.subr.mxu0 0.0
        %1510 = vmatpush1.msra.mxu0 0.0
        %1511 = vmatprep.subr.mxu0 0.0
        %1512 = vmatpush1.msra.mxu0 0.0
        %1513 = vmatprep.subr.mxu0 0.0
        %1514 = vmatpush1.msra.mxu0 0.0
        %1515 = vmatprep.subr.mxu0 0.0
        %1516 = vmatpush1.msra.mxu0 0.0
        %1517 = vmatprep.subr.mxu0 0.0
        %1518 = vmatpush1.msra.mxu0 0.0
        %1519 = vmatprep.subr.mxu0 0.0
        %1520 = vmatpush1.msra.mxu0 0.0
        %1521 = vmatprep.subr.mxu0 0.0
        %1522 = vmatpush1.msra.mxu0 0.0
        %1523 = vmatprep.subr.mxu0 0.0
        %1524 = vmatpush1.msra.mxu0 0.0
        %1525 = vmatprep.subr.mxu0 0.0
        %1526 = vmatpush1.msra.mxu0 0.0
        %1527 = vmatprep.subr.mxu0 0.0
        %1528 = vmatpush1.msra.mxu0 0.0
        %1529 = vmatprep.subr.mxu0 0.0
        %1530 = vmatpush1.msra.mxu0 0.0
        %1531 = vmatprep.subr.mxu0 0.0
        %1532 = vmatpush1.msra.mxu0 0.0
        %1533 = vmatprep.subr.mxu0 0.0
        %1534 = vmatpush1.msra.mxu0 0.0
        %1535 = vmatprep.subr.mxu0 0.0
        %1536 = vmatpush1.msra.mxu0 0.0
        %1537 = vmatprep.subr.mxu0 0.0
        %1538 = vmatpush1.msra.mxu0 0.0
        %1539 = vmatprep.mubr.f32.mxu0 0.0
        %1540 = vmatmul.mubr.f32.gmra.mrb[0].mxu0 %v969
        %v1541 = vpop.f32.mrb[0].mxu0
        %v1542 = vadd.f32 %v729, %v1541
        %v1543 = vpop.f32.mrb[0].mxu0
        %v1544 = vadd.f32 %v729, %v1543
        %1545 = vdwg.mxu0
        %1546 = vmatprep.subr.mxu0 %v1332
        %1547 = vmatpush1.msra.mxu0 %v1331
        %1548 = vmatprep.subr.mxu0 0.0
        %1549 = vmatpush1.msra.mxu0 0.0
        %1550 = vmatprep.subr.mxu0 0.0
        %1551 = vmatpush1.msra.mxu0 0.0
        %1552 = vmatprep.subr.mxu0 0.0
        %1553 = vmatpush1.msra.mxu0 0.0
        %1554 = vmatprep.subr.mxu0 0.0
        %1555 = vmatpush1.msra.mxu0 0.0
        %1556 = vmatprep.subr.mxu0 0.0
        %1557 = vmatpush1.msra.mxu0 0.0
        %1558 = vmatprep.subr.mxu0 0.0
        %1559 = vmatpush1.msra.mxu0 0.0
        %1560 = vmatprep.subr.mxu0 0.0
        %1561 = vmatpush1.msra.mxu0 0.0
        %1562 = vmatprep.subr.mxu0 0.0
        %1563 = vmatpush1.msra.mxu0 0.0
        %1564 = vmatprep.subr.mxu0 0.0
        %1565 = vmatpush1.msra.mxu0 0.0
        %1566 = vmatprep.subr.mxu0 0.0
        %1567 = vmatpush1.msra.mxu0 0.0
        %1568 = vmatprep.subr.mxu0 0.0
        %1569 = vmatpush1.msra.mxu0 0.0
        %1570 = vmatprep.subr.mxu0 0.0
        %1571 = vmatpush1.msra.mxu0 0.0
        %1572 = vmatprep.subr.mxu0 0.0
        %1573 = vmatpush1.msra.mxu0 0.0
        %1574 = vmatprep.subr.mxu0 0.0
        %1575 = vmatpush1.msra.mxu0 0.0
        %1576 = vmatprep.subr.mxu0 0.0
        %1577 = vmatpush1.msra.mxu0 0.0
        %1578 = vmatprep.subr.mxu0 0.0
        %1579 = vmatpush1.msra.mxu0 0.0
        %1580 = vmatprep.subr.mxu0 0.0
        %1581 = vmatpush1.msra.mxu0 0.0
        %1582 = vmatprep.subr.mxu0 0.0
        %1583 = vmatpush1.msra.mxu0 0.0
        %1584 = vmatprep.subr.mxu0 0.0
        %1585 = vmatpush1.msra.mxu0 0.0
        %1586 = vmatprep.subr.mxu0 0.0
        %1587 = vmatpush1.msra.mxu0 0.0
        %1588 = vmatprep.subr.mxu0 0.0
        %1589 = vmatpush1.msra.mxu0 0.0
        %1590 = vmatprep.subr.mxu0 0.0
        %1591 = vmatpush1.msra.mxu0 0.0
        %1592 = vmatprep.subr.mxu0 0.0
        %1593 = vmatpush1.msra.mxu0 0.0
        %1594 = vmatprep.subr.mxu0 0.0
        %1595 = vmatpush1.msra.mxu0 0.0
        %1596 = vmatprep.subr.mxu0 0.0
        %1597 = vmatpush1.msra.mxu0 0.0
        %1598 = vmatprep.subr.mxu0 0.0
        %1599 = vmatpush1.msra.mxu0 0.0
        %1600 = vmatprep.subr.mxu0 0.0
        %1601 = vmatpush1.msra.mxu0 0.0
        %1602 = vmatprep.subr.mxu0 0.0
        %1603 = vmatpush1.msra.mxu0 0.0
        %1604 = vmatprep.subr.mxu0 0.0
        %1605 = vmatpush1.msra.mxu0 0.0
        %1606 = vmatprep.subr.mxu0 0.0
        %1607 = vmatpush1.msra.mxu0 0.0
        %1608 = vmatprep.subr.mxu0 0.0
        %1609 = vmatpush1.msra.mxu0 0.0
        %1610 = vmatprep.mubr.f32.mxu0 0.0
        %1611 = vmatmul.mubr.f32.gmra.mrb[0].mxu0 %v969
        %v1612 = vpop.f32.mrb[0].mxu0
        %v1613 = vadd.f32 %v729, %v1612
        %v1614 = vpop.f32.mrb[0].mxu0
        %v1615 = vadd.f32 %v729, %v1614
        %1616 = vdwg.mxu0
        %1617 = vmatprep.subr.mxu0 %v1330
        %1618 = vmatpush1.msra.mxu0 %v1329
        %1619 = vmatprep.subr.mxu0 0.0
        %1620 = vmatpush1.msra.mxu0 0.0
        %1621 = vmatprep.subr.mxu0 0.0
        %1622 = vmatpush1.msra.mxu0 0.0
        %1623 = vmatprep.subr.mxu0 0.0
        %1624 = vmatpush1.msra.mxu0 0.0
        %1625 = vmatprep.subr.mxu0 0.0
        %1626 = vmatpush1.msra.mxu0 0.0
        %1627 = vmatprep.subr.mxu0 0.0
        %1628 = vmatpush1.msra.mxu0 0.0
        %1629 = vmatprep.subr.mxu0 0.0
        %1630 = vmatpush1.msra.mxu0 0.0
        %1631 = vmatprep.subr.mxu0 0.0
        %1632 = vmatpush1.msra.mxu0 0.0
        %1633 = vmatprep.subr.mxu0 0.0
        %1634 = vmatpush1.msra.mxu0 0.0
        %1635 = vmatprep.subr.mxu0 0.0
        %1636 = vmatpush1.msra.mxu0 0.0
        %1637 = vmatprep.subr.mxu0 0.0
        %1638 = vmatpush1.msra.mxu0 0.0
        %1639 = vmatprep.subr.mxu0 0.0
        %1640 = vmatpush1.msra.mxu0 0.0
        %1641 = vmatprep.subr.mxu0 0.0
        %1642 = vmatpush1.msra.mxu0 0.0
        %1643 = vmatprep.subr.mxu0 0.0
        %1644 = vmatpush1.msra.mxu0 0.0
        %1645 = vmatprep.subr.mxu0 0.0
        %1646 = vmatpush1.msra.mxu0 0.0
        %1647 = vmatprep.subr.mxu0 0.0
        %1648 = vmatpush1.msra.mxu0 0.0
        %1649 = vmatprep.subr.mxu0 0.0
        %1650 = vmatpush1.msra.mxu0 0.0
        %1651 = vmatprep.subr.mxu0 0.0
        %1652 = vmatpush1.msra.mxu0 0.0
        %1653 = vmatprep.subr.mxu0 0.0
        %1654 = vmatpush1.msra.mxu0 0.0
        %1655 = vmatprep.subr.mxu0 0.0
        %1656 = vmatpush1.msra.mxu0 0.0
        %1657 = vmatprep.subr.mxu0 0.0
        %1658 = vmatpush1.msra.mxu0 0.0
        %1659 = vmatprep.subr.mxu0 0.0
        %1660 = vmatpush1.msra.mxu0 0.0
        %1661 = vmatprep.subr.mxu0 0.0
        %1662 = vmatpush1.msra.mxu0 0.0
        %1663 = vmatprep.subr.mxu0 0.0
        %1664 = vmatpush1.msra.mxu0 0.0
        %1665 = vmatprep.subr.mxu0 0.0
        %1666 = vmatpush1.msra.mxu0 0.0
        %1667 = vmatprep.subr.mxu0 0.0
        %1668 = vmatpush1.msra.mxu0 0.0
        %1669 = vmatprep.subr.mxu0 0.0
        %1670 = vmatpush1.msra.mxu0 0.0
        %1671 = vmatprep.subr.mxu0 0.0
        %1672 = vmatpush1.msra.mxu0 0.0
        %1673 = vmatprep.subr.mxu0 0.0
        %1674 = vmatpush1.msra.mxu0 0.0
        %1675 = vmatprep.subr.mxu0 0.0
        %1676 = vmatpush1.msra.mxu0 0.0
        %1677 = vmatprep.subr.mxu0 0.0
        %1678 = vmatpush1.msra.mxu0 0.0
        %1679 = vmatprep.subr.mxu0 0.0
        %1680 = vmatpush1.msra.mxu0 0.0
        %1681 = vmatprep.mubr.f32.mxu0 0.0
        %1682 = vmatmul.mubr.f32.gmra.mrb[0].mxu0 %v1114
        %v1683 = vpop.f32.mrb[0].mxu0
        %v1684 = vadd.f32 %v733, %v1683
        %v1685 = vpop.f32.mrb[0].mxu0
        %v1686 = vadd.f32 %v733, %v1685
        %1687 = vdwg.mxu0
        %1688 = vmatprep.subr.mxu0 %v1332
        %1689 = vmatpush1.msra.mxu0 %v1331
        %1690 = vmatprep.subr.mxu0 0.0
        %1691 = vmatpush1.msra.mxu0 0.0
        %1692 = vmatprep.subr.mxu0 0.0
        %1693 = vmatpush1.msra.mxu0 0.0
        %1694 = vmatprep.subr.mxu0 0.0
        %1695 = vmatpush1.msra.mxu0 0.0
        %1696 = vmatprep.subr.mxu0 0.0
        %1697 = vmatpush1.msra.mxu0 0.0
        %1698 = vmatprep.subr.mxu0 0.0
        %1699 = vmatpush1.msra.mxu0 0.0
        %1700 = vmatprep.subr.mxu0 0.0
        %1701 = vmatpush1.msra.mxu0 0.0
        %1702 = vmatprep.subr.mxu0 0.0
        %1703 = vmatpush1.msra.mxu0 0.0
        %1704 = vmatprep.subr.mxu0 0.0
        %1705 = vmatpush1.msra.mxu0 0.0
        %1706 = vmatprep.subr.mxu0 0.0
        %1707 = vmatpush1.msra.mxu0 0.0
        %1708 = vmatprep.subr.mxu0 0.0
        %1709 = vmatpush1.msra.mxu0 0.0
        %1710 = vmatprep.subr.mxu0 0.0
        %1711 = vmatpush1.msra.mxu0 0.0
        %1712 = vmatprep.subr.mxu0 0.0
        %1713 = vmatpush1.msra.mxu0 0.0
        %1714 = vmatprep.subr.mxu0 0.0
        %1715 = vmatpush1.msra.mxu0 0.0
        %1716 = vmatprep.subr.mxu0 0.0
        %1717 = vmatpush1.msra.mxu0 0.0
        %1718 = vmatprep.subr.mxu0 0.0
        %1719 = vmatpush1.msra.mxu0 0.0
        %1720 = vmatprep.subr.mxu0 0.0
        %1721 = vmatpush1.msra.mxu0 0.0
        %1722 = vmatprep.subr.mxu0 0.0
        %1723 = vmatpush1.msra.mxu0 0.0
        %1724 = vmatprep.subr.mxu0 0.0
        %1725 = vmatpush1.msra.mxu0 0.0
        %1726 = vmatprep.subr.mxu0 0.0
        %1727 = vmatpush1.msra.mxu0 0.0
        %1728 = vmatprep.subr.mxu0 0.0
        %1729 = vmatpush1.msra.mxu0 0.0
        %1730 = vmatprep.subr.mxu0 0.0
        %1731 = vmatpush1.msra.mxu0 0.0
        %1732 = vmatprep.subr.mxu0 0.0
        %1733 = vmatpush1.msra.mxu0 0.0
        %1734 = vmatprep.subr.mxu0 0.0
        %1735 = vmatpush1.msra.mxu0 0.0
        %1736 = vmatprep.subr.mxu0 0.0
        %1737 = vmatpush1.msra.mxu0 0.0
        %1738 = vmatprep.subr.mxu0 0.0
        %1739 = vmatpush1.msra.mxu0 0.0
        %1740 = vmatprep.subr.mxu0 0.0
        %1741 = vmatpush1.msra.mxu0 0.0
        %1742 = vmatprep.subr.mxu0 0.0
        %1743 = vmatpush1.msra.mxu0 0.0
        %1744 = vmatprep.subr.mxu0 0.0
        %1745 = vmatpush1.msra.mxu0 0.0
        %1746 = vmatprep.subr.mxu0 0.0
        %1747 = vmatpush1.msra.mxu0 0.0
        %1748 = vmatprep.subr.mxu0 0.0
        %1749 = vmatpush1.msra.mxu0 0.0
        %1750 = vmatprep.subr.mxu0 0.0
        %1751 = vmatpush1.msra.mxu0 0.0
        %1752 = vmatprep.mubr.f32.mxu0 0.0
        %1753 = vmatmul.mubr.f32.gmra.mrb[0].mxu0 %v1114
        %v1754 = vpop.f32.mrb[0].mxu0
        %v1755 = vadd.f32 %v733, %v1754
        %v1756 = vpop.f32.mrb[0].mxu0
        %v1757 = vadd.f32 %v733, %v1756
        %1758 = vdwg.mxu0
        %s1759 = scalar_lea.vmem %s667, 64 [#allocation2]
        %v1760 = vld [vmem:[%s1759] sm:$0xff]
        %v1761 = vld [vmem:[%s1759 + $0x8] sm:$0xff]
        %v1762 = vld [vmem:[%s1759 + $0x10] sm:$0xff]
        %v1763 = vld [vmem:[%s1759 + $0x18] sm:$0xff]
        %s1764 = scalar_lea.vmem %s674, 16 [#allocation3]
        %v1765 = vld [vmem:[%s1764] sm:$0xff]
        %v1766 = vmul.f32 %v713, %v1760
        %v1767 = vmul.f32 %v713, %v1761
        %v1768 = vmul.f32 %v713, %v1762
        %v1769 = vmul.f32 %v713, %v1763
        %v1770 = vmul.f32 %v717, %v1760
        %v1771 = vmul.f32 %v717, %v1761
        %v1772 = vmul.f32 %v717, %v1762
        %v1773 = vmul.f32 %v717, %v1763
        %v1774 = vmul.f32 %v717, %v1765
        %1780 = vrot.lane.b32.xlu0 %v1770, 126
        %v1781 = vpop.permute.xlu0 %1780
        %1782 = vrot.lane.b32.xlu0 %v1771, 126
        %v1783 = vpop.permute.xlu0 %1782
        %1784 = vrot.lane.b32.xlu0 %v1772, 126
        %v1785 = vpop.permute.xlu0 %1784
        %1786 = vrot.lane.b32.xlu0 %v1773, 126
        %v1787 = vpop.permute.xlu0 %1786
        %1788 = vrot.lane.b32.xlu0 %v1774, 126
        %v1789 = vpop.permute.xlu0 %1788
        %v1790 = vsel %vm776, %v1781, %v1783
        %v1791 = vsel %vm776, %v1783, %v1785
        %v1792 = vsel %vm776, %v1785, %v1787
        %v1793 = vsel %vm776, %v1787, %v1789
        %v1798 = vadd.f32 %v1766, %v1790
        %v1799 = vadd.f32 %v1767, %v1791
        %v1800 = vadd.f32 %v1768, %v1792
        %v1801 = vadd.f32 %v1769, %v1793
        %v1802 = vmul.f32 %v721, %v1760
        %v1803 = vmul.f32 %v721, %v1761
        %v1804 = vmul.f32 %v721, %v1762
        %v1805 = vmul.f32 %v721, %v1763
        %v1806 = vmul.f32 %v721, %v1765
        %1812 = vrot.lane.b32.xlu0 %v1802, 124
        %v1813 = vpop.permute.xlu0 %1812
        %1814 = vrot.lane.b32.xlu0 %v1803, 124
        %v1815 = vpop.permute.xlu0 %1814
        %1816 = vrot.lane.b32.xlu0 %v1804, 124
        %v1817 = vpop.permute.xlu0 %1816
        %1818 = vrot.lane.b32.xlu0 %v1805, 124
        %v1819 = vpop.permute.xlu0 %1818
        %1820 = vrot.lane.b32.xlu0 %v1806, 124
        %v1821 = vpop.permute.xlu0 %1820
        %v1822 = vsel %vm809, %v1813, %v1815
        %v1823 = vsel %vm809, %v1815, %v1817
        %v1824 = vsel %vm809, %v1817, %v1819
        %v1825 = vsel %vm809, %v1819, %v1821
        %v1830 = vadd.f32 %v1798, %v1822
        %v1831 = vadd.f32 %v1799, %v1823
        %v1832 = vadd.f32 %v1800, %v1824
        %v1833 = vadd.f32 %v1801, %v1825
        %1834 = vmatprep.subr.mxu0 %v1831
        %1835 = vmatpush1.msra.mxu0 %v1830
        %1836 = vmatprep.subr.mxu0 0.0
        %1837 = vmatpush1.msra.mxu0 0.0
        %1838 = vmatprep.subr.mxu0 0.0
        %1839 = vmatpush1.msra.mxu0 0.0
        %1840 = vmatprep.subr.mxu0 0.0
        %1841 = vmatpush1.msra.mxu0 0.0
        %1842 = vmatprep.subr.mxu0 0.0
        %1843 = vmatpush1.msra.mxu0 0.0
        %1844 = vmatprep.subr.mxu0 0.0
        %1845 = vmatpush1.msra.mxu0 0.0
        %1846 = vmatprep.subr.mxu0 0.0
        %1847 = vmatpush1.msra.mxu0 0.0
        %1848 = vmatprep.subr.mxu0 0.0
        %1849 = vmatpush1.msra.mxu0 0.0
        %1850 = vmatprep.subr.mxu0 0.0
        %1851 = vmatpush1.msra.mxu0 0.0
        %1852 = vmatprep.subr.mxu0 0.0
        %1853 = vmatpush1.msra.mxu0 0.0
        %1854 = vmatprep.subr.mxu0 0.0
        %1855 = vmatpush1.msra.mxu0 0.0
        %1856 = vmatprep.subr.mxu0 0.0
        %1857 = vmatpush1.msra.mxu0 0.0
        %1858 = vmatprep.subr.mxu0 0.0
        %1859 = vmatpush1.msra.mxu0 0.0
        %1860 = vmatprep.subr.mxu0 0.0
        %1861 = vmatpush1.msra.mxu0 0.0
        %1862 = vmatprep.subr.mxu0 0.0
        %1863 = vmatpush1.msra.mxu0 0.0
        %1864 = vmatprep.subr.mxu0 0.0
        %1865 = vmatpush1.msra.mxu0 0.0
        %1866 = vmatprep.subr.mxu0 0.0
        %1867 = vmatpush1.msra.mxu0 0.0
        %1868 = vmatprep.subr.mxu0 0.0
        %1869 = vmatpush1.msra.mxu0 0.0
        %1870 = vmatprep.subr.mxu0 0.0
        %1871 = vmatpush1.msra.mxu0 0.0
        %1872 = vmatprep.subr.mxu0 0.0
        %1873 = vmatpush1.msra.mxu0 0.0
        %1874 = vmatprep.subr.mxu0 0.0
        %1875 = vmatpush1.msra.mxu0 0.0
        %1876 = vmatprep.subr.mxu0 0.0
        %1877 = vmatpush1.msra.mxu0 0.0
        %1878 = vmatprep.subr.mxu0 0.0
        %1879 = vmatpush1.msra.mxu0 0.0
        %1880 = vmatprep.subr.mxu0 0.0
        %1881 = vmatpush1.msra.mxu0 0.0
        %1882 = vmatprep.subr.mxu0 0.0
        %1883 = vmatpush1.msra.mxu0 0.0
        %1884 = vmatprep.subr.mxu0 0.0
        %1885 = vmatpush1.msra.mxu0 0.0
        %1886 = vmatprep.subr.mxu0 0.0
        %1887 = vmatpush1.msra.mxu0 0.0
        %1888 = vmatprep.subr.mxu0 0.0
        %1889 = vmatpush1.msra.mxu0 0.0
        %1890 = vmatprep.subr.mxu0 0.0
        %1891 = vmatpush1.msra.mxu0 0.0
        %1892 = vmatprep.subr.mxu0 0.0
        %1893 = vmatpush1.msra.mxu0 0.0
        %1894 = vmatprep.subr.mxu0 0.0
        %1895 = vmatpush1.msra.mxu0 0.0
        %1896 = vmatprep.subr.mxu0 0.0
        %1897 = vmatpush1.msra.mxu0 0.0
        %1898 = vmatprep.mubr.f32.mxu0 0.0
        %1899 = vmatmul.mubr.f32.gmra.mrb[0].mxu0 %v824
        %v1900 = vpop.f32.mrb[0].mxu0
        %v1901 = vadd.f32 %v725, %v1900
        %v1902 = vpop.f32.mrb[0].mxu0
        %v1903 = vadd.f32 %v725, %v1902
        %1904 = vdwg.mxu0
        %1905 = vmatprep.subr.mxu0 %v1833
        %1906 = vmatpush1.msra.mxu0 %v1832
        %1907 = vmatprep.subr.mxu0 0.0
        %1908 = vmatpush1.msra.mxu0 0.0
        %1909 = vmatprep.subr.mxu0 0.0
        %1910 = vmatpush1.msra.mxu0 0.0
        %1911 = vmatprep.subr.mxu0 0.0
        %1912 = vmatpush1.msra.mxu0 0.0
        %1913 = vmatprep.subr.mxu0 0.0
        %1914 = vmatpush1.msra.mxu0 0.0
        %1915 = vmatprep.subr.mxu0 0.0
        %1916 = vmatpush1.msra.mxu0 0.0
        %1917 = vmatprep.subr.mxu0 0.0
        %1918 = vmatpush1.msra.mxu0 0.0
        %1919 = vmatprep.subr.mxu0 0.0
        %1920 = vmatpush1.msra.mxu0 0.0
        %1921 = vmatprep.subr.mxu0 0.0
        %1922 = vmatpush1.msra.mxu0 0.0
        %1923 = vmatprep.subr.mxu0 0.0
        %1924 = vmatpush1.msra.mxu0 0.0
        %1925 = vmatprep.subr.mxu0 0.0
        %1926 = vmatpush1.msra.mxu0 0.0
        %1927 = vmatprep.subr.mxu0 0.0
        %1928 = vmatpush1.msra.mxu0 0.0
        %1929 = vmatprep.subr.mxu0 0.0
        %1930 = vmatpush1.msra.mxu0 0.0
        %1931 = vmatprep.subr.mxu0 0.0
        %1932 = vmatpush1.msra.mxu0 0.0
        %1933 = vmatprep.subr.mxu0 0.0
        %1934 = vmatpush1.msra.mxu0 0.0
        %1935 = vmatprep.subr.mxu0 0.0
        %1936 = vmatpush1.msra.mxu0 0.0
        %1937 = vmatprep.subr.mxu0 0.0
        %1938 = vmatpush1.msra.mxu0 0.0
        %1939 = vmatprep.subr.mxu0 0.0
        %1940 = vmatpush1.msra.mxu0 0.0
        %1941 = vmatprep.subr.mxu0 0.0
        %1942 = vmatpush1.msra.mxu0 0.0
        %1943 = vmatprep.subr.mxu0 0.0
        %1944 = vmatpush1.msra.mxu0 0.0
        %1945 = vmatprep.subr.mxu0 0.0
        %1946 = vmatpush1.msra.mxu0 0.0
        %1947 = vmatprep.subr.mxu0 0.0
        %1948 = vmatpush1.msra.mxu0 0.0
        %1949 = vmatprep.subr.mxu0 0.0
        %1950 = vmatpush1.msra.mxu0 0.0
        %1951 = vmatprep.subr.mxu0 0.0
        %1952 = vmatpush1.msra.mxu0 0.0
        %1953 = vmatprep.subr.mxu0 0.0
        %1954 = vmatpush1.msra.mxu0 0.0
        %1955 = vmatprep.subr.mxu0 0.0
        %1956 = vmatpush1.msra.mxu0 0.0
        %1957 = vmatprep.subr.mxu0 0.0
        %1958 = vmatpush1.msra.mxu0 0.0
        %1959 = vmatprep.subr.mxu0 0.0
        %1960 = vmatpush1.msra.mxu0 0.0
        %1961 = vmatprep.subr.mxu0 0.0
        %1962 = vmatpush1.msra.mxu0 0.0
        %1963 = vmatprep.subr.mxu0 0.0
        %1964 = vmatpush1.msra.mxu0 0.0
        %1965 = vmatprep.subr.mxu0 0.0
        %1966 = vmatpush1.msra.mxu0 0.0
        %1967 = vmatprep.subr.mxu0 0.0
        %1968 = vmatpush1.msra.mxu0 0.0
        %1969 = vmatprep.mubr.f32.mxu0 0.0
        %1970 = vmatmul.mubr.f32.gmra.mrb[0].mxu0 %v824
        %v1971 = vpop.f32.mrb[0].mxu0
        %v1972 = vadd.f32 %v725, %v1971
        %v1973 = vpop.f32.mrb[0].mxu0
        %v1974 = vadd.f32 %v725, %v1973
        %1975 = vdwg.mxu0
        %1976 = vmatprep.subr.mxu0 %v1831
        %1977 = vmatpush1.msra.mxu0 %v1830
        %1978 = vmatprep.subr.mxu0 0.0
        %1979 = vmatpush1.msra.mxu0 0.0
        %1980 = vmatprep.subr.mxu0 0.0
        %1981 = vmatpush1.msra.mxu0 0.0
        %1982 = vmatprep.subr.mxu0 0.0
        %1983 = vmatpush1.msra.mxu0 0.0
        %1984 = vmatprep.subr.mxu0 0.0
        %1985 = vmatpush1.msra.mxu0 0.0
        %1986 = vmatprep.subr.mxu0 0.0
        %1987 = vmatpush1.msra.mxu0 0.0
        %1988 = vmatprep.subr.mxu0 0.0
        %1989 = vmatpush1.msra.mxu0 0.0
        %1990 = vmatprep.subr.mxu0 0.0
        %1991 = vmatpush1.msra.mxu0 0.0
        %1992 = vmatprep.subr.mxu0 0.0
        %1993 = vmatpush1.msra.mxu0 0.0
        %1994 = vmatprep.subr.mxu0 0.0
        %1995 = vmatpush1.msra.mxu0 0.0
        %1996 = vmatprep.subr.mxu0 0.0
        %1997 = vmatpush1.msra.mxu0 0.0
        %1998 = vmatprep.subr.mxu0 0.0
        %1999 = vmatpush1.msra.mxu0 0.0
        %2000 = vmatprep.subr.mxu0 0.0
        %2001 = vmatpush1.msra.mxu0 0.0
        %2002 = vmatprep.subr.mxu0 0.0
        %2003 = vmatpush1.msra.mxu0 0.0
        %2004 = vmatprep.subr.mxu0 0.0
        %2005 = vmatpush1.msra.mxu0 0.0
        %2006 = vmatprep.subr.mxu0 0.0
        %2007 = vmatpush1.msra.mxu0 0.0
        %2008 = vmatprep.subr.mxu0 0.0
        %2009 = vmatpush1.msra.mxu0 0.0
        %2010 = vmatprep.subr.mxu0 0.0
        %2011 = vmatpush1.msra.mxu0 0.0
        %2012 = vmatprep.subr.mxu0 0.0
        %2013 = vmatpush1.msra.mxu0 0.0
        %2014 = vmatprep.subr.mxu0 0.0
        %2015 = vmatpush1.msra.mxu0 0.0
        %2016 = vmatprep.subr.mxu0 0.0
        %2017 = vmatpush1.msra.mxu0 0.0
        %2018 = vmatprep.subr.mxu0 0.0
        %2019 = vmatpush1.msra.mxu0 0.0
        %2020 = vmatprep.subr.mxu0 0.0
        %2021 = vmatpush1.msra.mxu0 0.0
        %2022 = vmatprep.subr.mxu0 0.0
        %2023 = vmatpush1.msra.mxu0 0.0
        %2024 = vmatprep.subr.mxu0 0.0
        %2025 = vmatpush1.msra.mxu0 0.0
        %2026 = vmatprep.subr.mxu0 0.0
        %2027 = vmatpush1.msra.mxu0 0.0
        %2028 = vmatprep.subr.mxu0 0.0
        %2029 = vmatpush1.msra.mxu0 0.0
        %2030 = vmatprep.subr.mxu0 0.0
        %2031 = vmatpush1.msra.mxu0 0.0
        %2032 = vmatprep.subr.mxu0 0.0
        %2033 = vmatpush1.msra.mxu0 0.0
        %2034 = vmatprep.subr.mxu0 0.0
        %2035 = vmatpush1.msra.mxu0 0.0
        %2036 = vmatprep.subr.mxu0 0.0
        %2037 = vmatpush1.msra.mxu0 0.0
        %2038 = vmatprep.subr.mxu0 0.0
        %2039 = vmatpush1.msra.mxu0 0.0
        %2040 = vmatprep.mubr.f32.mxu0 0.0
        %2041 = vmatmul.mubr.f32.gmra.mrb[0].mxu0 %v969
        %v2042 = vpop.f32.mrb[0].mxu0
        %v2043 = vadd.f32 %v729, %v2042
        %v2044 = vpop.f32.mrb[0].mxu0
        %v2045 = vadd.f32 %v729, %v2044
        %2046 = vdwg.mxu0
        %2047 = vmatprep.subr.mxu0 %v1833
        %2048 = vmatpush1.msra.mxu0 %v1832
        %2049 = vmatprep.subr.mxu0 0.0
        %2050 = vmatpush1.msra.mxu0 0.0
        %2051 = vmatprep.subr.mxu0 0.0
        %2052 = vmatpush1.msra.mxu0 0.0
        %2053 = vmatprep.subr.mxu0 0.0
        %2054 = vmatpush1.msra.mxu0 0.0
        %2055 = vmatprep.subr.mxu0 0.0
        %2056 = vmatpush1.msra.mxu0 0.0
        %2057 = vmatprep.subr.mxu0 0.0
        %2058 = vmatpush1.msra.mxu0 0.0
        %2059 = vmatprep.subr.mxu0 0.0
        %2060 = vmatpush1.msra.mxu0 0.0
        %2061 = vmatprep.subr.mxu0 0.0
        %2062 = vmatpush1.msra.mxu0 0.0
        %2063 = vmatprep.subr.mxu0 0.0
        %2064 = vmatpush1.msra.mxu0 0.0
        %2065 = vmatprep.subr.mxu0 0.0
        %2066 = vmatpush1.msra.mxu0 0.0
        %2067 = vmatprep.subr.mxu0 0.0
        %2068 = vmatpush1.msra.mxu0 0.0
        %2069 = vmatprep.subr.mxu0 0.0
        %2070 = vmatpush1.msra.mxu0 0.0
        %2071 = vmatprep.subr.mxu0 0.0
        %2072 = vmatpush1.msra.mxu0 0.0
        %2073 = vmatprep.subr.mxu0 0.0
        %2074 = vmatpush1.msra.mxu0 0.0
        %2075 = vmatprep.subr.mxu0 0.0
        %2076 = vmatpush1.msra.mxu0 0.0
        %2077 = vmatprep.subr.mxu0 0.0
        %2078 = vmatpush1.msra.mxu0 0.0
        %2079 = vmatprep.subr.mxu0 0.0
        %2080 = vmatpush1.msra.mxu0 0.0
        %2081 = vmatprep.subr.mxu0 0.0
        %2082 = vmatpush1.msra.mxu0 0.0
        %2083 = vmatprep.subr.mxu0 0.0
        %2084 = vmatpush1.msra.mxu0 0.0
        %2085 = vmatprep.subr.mxu0 0.0
        %2086 = vmatpush1.msra.mxu0 0.0
        %2087 = vmatprep.subr.mxu0 0.0
        %2088 = vmatpush1.msra.mxu0 0.0
        %2089 = vmatprep.subr.mxu0 0.0
        %2090 = vmatpush1.msra.mxu0 0.0
        %2091 = vmatprep.subr.mxu0 0.0
        %2092 = vmatpush1.msra.mxu0 0.0
        %2093 = vmatprep.subr.mxu0 0.0
        %2094 = vmatpush1.msra.mxu0 0.0
        %2095 = vmatprep.subr.mxu0 0.0
        %2096 = vmatpush1.msra.mxu0 0.0
        %2097 = vmatprep.subr.mxu0 0.0
        %2098 = vmatpush1.msra.mxu0 0.0
        %2099 = vmatprep.subr.mxu0 0.0
        %2100 = vmatpush1.msra.mxu0 0.0
        %2101 = vmatprep.subr.mxu0 0.0
        %2102 = vmatpush1.msra.mxu0 0.0
        %2103 = vmatprep.subr.mxu0 0.0
        %2104 = vmatpush1.msra.mxu0 0.0
        %2105 = vmatprep.subr.mxu0 0.0
        %2106 = vmatpush1.msra.mxu0 0.0
        %2107 = vmatprep.subr.mxu0 0.0
        %2108 = vmatpush1.msra.mxu0 0.0
        %2109 = vmatprep.subr.mxu0 0.0
        %2110 = vmatpush1.msra.mxu0 0.0
        %2111 = vmatprep.mubr.f32.mxu0 0.0
        %2112 = vmatmul.mubr.f32.gmra.mrb[0].mxu0 %v969
        %v2113 = vpop.f32.mrb[0].mxu0
        %v2114 = vadd.f32 %v729, %v2113
        %v2115 = vpop.f32.mrb[0].mxu0
        %v2116 = vadd.f32 %v729, %v2115
        %2117 = vdwg.mxu0
        %2118 = vmatprep.subr.mxu0 %v1831
        %2119 = vmatpush1.msra.mxu0 %v1830
        %2120 = vmatprep.subr.mxu0 0.0
        %2121 = vmatpush1.msra.mxu0 0.0
        %2122 = vmatprep.subr.mxu0 0.0
        %2123 = vmatpush1.msra.mxu0 0.0
        %2124 = vmatprep.subr.mxu0 0.0
        %2125 = vmatpush1.msra.mxu0 0.0
        %2126 = vmatprep.subr.mxu0 0.0
        %2127 = vmatpush1.msra.mxu0 0.0
        %2128 = vmatprep.subr.mxu0 0.0
        %2129 = vmatpush1.msra.mxu0 0.0
        %2130 = vmatprep.subr.mxu0 0.0
        %2131 = vmatpush1.msra.mxu0 0.0
        %2132 = vmatprep.subr.mxu0 0.0
        %2133 = vmatpush1.msra.mxu0 0.0
        %2134 = vmatprep.subr.mxu0 0.0
        %2135 = vmatpush1.msra.mxu0 0.0
        %2136 = vmatprep.subr.mxu0 0.0
        %2137 = vmatpush1.msra.mxu0 0.0
        %2138 = vmatprep.subr.mxu0 0.0
        %2139 = vmatpush1.msra.mxu0 0.0
        %2140 = vmatprep.subr.mxu0 0.0
        %2141 = vmatpush1.msra.mxu0 0.0
        %2142 = vmatprep.subr.mxu0 0.0
        %2143 = vmatpush1.msra.mxu0 0.0
        %2144 = vmatprep.subr.mxu0 0.0
        %2145 = vmatpush1.msra.mxu0 0.0
        %2146 = vmatprep.subr.mxu0 0.0
        %2147 = vmatpush1.msra.mxu0 0.0
        %2148 = vmatprep.subr.mxu0 0.0
        %2149 = vmatpush1.msra.mxu0 0.0
        %2150 = vmatprep.subr.mxu0 0.0
        %2151 = vmatpush1.msra.mxu0 0.0
        %2152 = vmatprep.subr.mxu0 0.0
        %2153 = vmatpush1.msra.mxu0 0.0
        %2154 = vmatprep.subr.mxu0 0.0
        %2155 = vmatpush1.msra.mxu0 0.0
        %2156 = vmatprep.subr.mxu0 0.0
        %2157 = vmatpush1.msra.mxu0 0.0
        %2158 = vmatprep.subr.mxu0 0.0
        %2159 = vmatpush1.msra.mxu0 0.0
        %2160 = vmatprep.subr.mxu0 0.0
        %2161 = vmatpush1.msra.mxu0 0.0
        %2162 = vmatprep.subr.mxu0 0.0
        %2163 = vmatpush1.msra.mxu0 0.0
        %2164 = vmatprep.subr.mxu0 0.0
        %2165 = vmatpush1.msra.mxu0 0.0
        %2166 = vmatprep.subr.mxu0 0.0
        %2167 = vmatpush1.msra.mxu0 0.0
        %2168 = vmatprep.subr.mxu0 0.0
        %2169 = vmatpush1.msra.mxu0 0.0
        %2170 = vmatprep.subr.mxu0 0.0
        %2171 = vmatpush1.msra.mxu0 0.0
        %2172 = vmatprep.subr.mxu0 0.0
        %2173 = vmatpush1.msra.mxu0 0.0
        %2174 = vmatprep.subr.mxu0 0.0
        %2175 = vmatpush1.msra.mxu0 0.0
        %2176 = vmatprep.subr.mxu0 0.0
        %2177 = vmatpush1.msra.mxu0 0.0
        %2178 = vmatprep.subr.mxu0 0.0
        %2179 = vmatpush1.msra.mxu0 0.0
        %2180 = vmatprep.subr.mxu0 0.0
        %2181 = vmatpush1.msra.mxu0 0.0
        %2182 = vmatprep.mubr.f32.mxu0 0.0
        %2183 = vmatmul.mubr.f32.gmra.mrb[0].mxu0 %v1114
        %v2184 = vpop.f32.mrb[0].mxu0
        %v2185 = vadd.f32 %v733, %v2184
        %v2186 = vpop.f32.mrb[0].mxu0
        %v2187 = vadd.f32 %v733, %v2186
        %2188 = vdwg.mxu0
        %2189 = vmatprep.subr.mxu0 %v1833
        %2190 = vmatpush1.msra.mxu0 %v1832
        %2191 = vmatprep.subr.mxu0 0.0
        %2192 = vmatpush1.msra.mxu0 0.0
        %2193 = vmatprep.subr.mxu0 0.0
        %2194 = vmatpush1.msra.mxu0 0.0
        %2195 = vmatprep.subr.mxu0 0.0
        %2196 = vmatpush1.msra.mxu0 0.0
        %2197 = vmatprep.subr.mxu0 0.0
        %2198 = vmatpush1.msra.mxu0 0.0
        %2199 = vmatprep.subr.mxu0 0.0
        %2200 = vmatpush1.msra.mxu0 0.0
        %2201 = vmatprep.subr.mxu0 0.0
        %2202 = vmatpush1.msra.mxu0 0.0
        %2203 = vmatprep.subr.mxu0 0.0
        %2204 = vmatpush1.msra.mxu0 0.0
        %2205 = vmatprep.subr.mxu0 0.0
        %2206 = vmatpush1.msra.mxu0 0.0
        %2207 = vmatprep.subr.mxu0 0.0
        %2208 = vmatpush1.msra.mxu0 0.0
        %2209 = vmatprep.subr.mxu0 0.0
        %2210 = vmatpush1.msra.mxu0 0.0
        %2211 = vmatprep.subr.mxu0 0.0
        %2212 = vmatpush1.msra.mxu0 0.0
        %2213 = vmatprep.subr.mxu0 0.0
        %2214 = vmatpush1.msra.mxu0 0.0
        %2215 = vmatprep.subr.mxu0 0.0
        %2216 = vmatpush1.msra.mxu0 0.0
        %2217 = vmatprep.subr.mxu0 0.0
        %2218 = vmatpush1.msra.mxu0 0.0
        %2219 = vmatprep.subr.mxu0 0.0
        %2220 = vmatpush1.msra.mxu0 0.0
        %2221 = vmatprep.subr.mxu0 0.0
        %2222 = vmatpush1.msra.mxu0 0.0
        %2223 = vmatprep.subr.mxu0 0.0
        %2224 = vmatpush1.msra.mxu0 0.0
        %2225 = vmatprep.subr.mxu0 0.0
        %2226 = vmatpush1.msra.mxu0 0.0
        %2227 = vmatprep.subr.mxu0 0.0
        %2228 = vmatpush1.msra.mxu0 0.0
        %2229 = vmatprep.subr.mxu0 0.0
        %2230 = vmatpush1.msra.mxu0 0.0
        %2231 = vmatprep.subr.mxu0 0.0
        %2232 = vmatpush1.msra.mxu0 0.0
        %2233 = vmatprep.subr.mxu0 0.0
        %2234 = vmatpush1.msra.mxu0 0.0
        %2235 = vmatprep.subr.mxu0 0.0
        %2236 = vmatpush1.msra.mxu0 0.0
        %2237 = vmatprep.subr.mxu0 0.0
        %2238 = vmatpush1.msra.mxu0 0.0
        %2239 = vmatprep.subr.mxu0 0.0
        %2240 = vmatpush1.msra.mxu0 0.0
        %2241 = vmatprep.subr.mxu0 0.0
        %2242 = vmatpush1.msra.mxu0 0.0
        %2243 = vmatprep.subr.mxu0 0.0
        %2244 = vmatpush1.msra.mxu0 0.0
        %2245 = vmatprep.subr.mxu0 0.0
        %2246 = vmatpush1.msra.mxu0 0.0
        %2247 = vmatprep.subr.mxu0 0.0
        %2248 = vmatpush1.msra.mxu0 0.0
        %2249 = vmatprep.subr.mxu0 0.0
        %2250 = vmatpush1.msra.mxu0 0.0
        %2251 = vmatprep.subr.mxu0 0.0
        %2252 = vmatpush1.msra.mxu0 0.0
        %2253 = vmatprep.mubr.f32.mxu0 0.0
        %2254 = vmatmul.mubr.f32.gmra.mrb[0].mxu0 %v1114
        %v2255 = vpop.f32.mrb[0].mxu0
        %v2256 = vadd.f32 %v733, %v2255
        %v2257 = vpop.f32.mrb[0].mxu0
        %v2258 = vadd.f32 %v733, %v2257
        %2259 = vdwg.mxu0
        %s2260 = scalar_lea.vmem %s667, 96 [#allocation2]
        %v2261 = vld [vmem:[%s2260] sm:$0xff]
        %v2262 = vld [vmem:[%s2260 + $0x8] sm:$0xff]
        %v2263 = vld [vmem:[%s2260 + $0x10] sm:$0xff]
        %v2264 = vld [vmem:[%s2260 + $0x18] sm:$0xff]
        %s2265 = scalar_lea.vmem %s674, 24 [#allocation3]
        %v2266 = vld [vmem:[%s2265] sm:$0xff]
        %v2267 = vmul.f32 %v713, %v2261
        %v2268 = vmul.f32 %v713, %v2262
        %v2269 = vmul.f32 %v713, %v2263
        %v2270 = vmul.f32 %v713, %v2264
        %v2271 = vmul.f32 %v717, %v2261
        %v2272 = vmul.f32 %v717, %v2262
        %v2273 = vmul.f32 %v717, %v2263
        %v2274 = vmul.f32 %v717, %v2264
        %v2275 = vmul.f32 %v717, %v2266
        %2281 = vrot.lane.b32.xlu0 %v2271, 126
        %v2282 = vpop.permute.xlu0 %2281
        %2283 = vrot.lane.b32.xlu0 %v2272, 126
        %v2284 = vpop.permute.xlu0 %2283
        %2285 = vrot.lane.b32.xlu0 %v2273, 126
        %v2286 = vpop.permute.xlu0 %2285
        %2287 = vrot.lane.b32.xlu0 %v2274, 126
        %v2288 = vpop.permute.xlu0 %2287
        %2289 = vrot.lane.b32.xlu0 %v2275, 126
        %v2290 = vpop.permute.xlu0 %2289
        %v2291 = vsel %vm776, %v2282, %v2284
        %v2292 = vsel %vm776, %v2284, %v2286
        %v2293 = vsel %vm776, %v2286, %v2288
        %v2294 = vsel %vm776, %v2288, %v2290
        %v2299 = vadd.f32 %v2267, %v2291
        %v2300 = vadd.f32 %v2268, %v2292
        %v2301 = vadd.f32 %v2269, %v2293
        %v2302 = vadd.f32 %v2270, %v2294
        %v2303 = vmul.f32 %v721, %v2261
        %v2304 = vmul.f32 %v721, %v2262
        %v2305 = vmul.f32 %v721, %v2263
        %v2306 = vmul.f32 %v721, %v2264
        %v2307 = vmul.f32 %v721, %v2266
        %2313 = vrot.lane.b32.xlu0 %v2303, 124
        %v2314 = vpop.permute.xlu0 %2313
        %2315 = vrot.lane.b32.xlu0 %v2304, 124
        %v2316 = vpop.permute.xlu0 %2315
        %2317 = vrot.lane.b32.xlu0 %v2305, 124
        %v2318 = vpop.permute.xlu0 %2317
        %2319 = vrot.lane.b32.xlu0 %v2306, 124
        %v2320 = vpop.permute.xlu0 %2319
        %2321 = vrot.lane.b32.xlu0 %v2307, 124
        %v2322 = vpop.permute.xlu0 %2321
        %v2323 = vsel %vm809, %v2314, %v2316
        %v2324 = vsel %vm809, %v2316, %v2318
        %v2325 = vsel %vm809, %v2318, %v2320
        %v2326 = vsel %vm809, %v2320, %v2322
        %v2331 = vadd.f32 %v2299, %v2323
        %v2332 = vadd.f32 %v2300, %v2324
        %v2333 = vadd.f32 %v2301, %v2325
        %v2334 = vadd.f32 %v2302, %v2326
        %2335 = vmatprep.subr.mxu0 %v2332
        %2336 = vmatpush1.msra.mxu0 %v2331
        %2337 = vmatprep.subr.mxu0 0.0
        %2338 = vmatpush1.msra.mxu0 0.0
        %2339 = vmatprep.subr.mxu0 0.0
        %2340 = vmatpush1.msra.mxu0 0.0
        %2341 = vmatprep.subr.mxu0 0.0
        %2342 = vmatpush1.msra.mxu0 0.0
        %2343 = vmatprep.subr.mxu0 0.0
        %2344 = vmatpush1.msra.mxu0 0.0
        %2345 = vmatprep.subr.mxu0 0.0
        %2346 = vmatpush1.msra.mxu0 0.0
        %2347 = vmatprep.subr.mxu0 0.0
        %2348 = vmatpush1.msra.mxu0 0.0
        %2349 = vmatprep.subr.mxu0 0.0
        %2350 = vmatpush1.msra.mxu0 0.0
        %2351 = vmatprep.subr.mxu0 0.0
        %2352 = vmatpush1.msra.mxu0 0.0
        %2353 = vmatprep.subr.mxu0 0.0
        %2354 = vmatpush1.msra.mxu0 0.0
        %2355 = vmatprep.subr.mxu0 0.0
        %2356 = vmatpush1.msra.mxu0 0.0
        %2357 = vmatprep.subr.mxu0 0.0
        %2358 = vmatpush1.msra.mxu0 0.0
        %2359 = vmatprep.subr.mxu0 0.0
        %2360 = vmatpush1.msra.mxu0 0.0
        %2361 = vmatprep.subr.mxu0 0.0
        %2362 = vmatpush1.msra.mxu0 0.0
        %2363 = vmatprep.subr.mxu0 0.0
        %2364 = vmatpush1.msra.mxu0 0.0
        %2365 = vmatprep.subr.mxu0 0.0
        %2366 = vmatpush1.msra.mxu0 0.0
        %2367 = vmatprep.subr.mxu0 0.0
        %2368 = vmatpush1.msra.mxu0 0.0
        %2369 = vmatprep.subr.mxu0 0.0
        %2370 = vmatpush1.msra.mxu0 0.0
        %2371 = vmatprep.subr.mxu0 0.0
        %2372 = vmatpush1.msra.mxu0 0.0
        %2373 = vmatprep.subr.mxu0 0.0
        %2374 = vmatpush1.msra.mxu0 0.0
        %2375 = vmatprep.subr.mxu0 0.0
        %2376 = vmatpush1.msra.mxu0 0.0
        %2377 = vmatprep.subr.mxu0 0.0
        %2378 = vmatpush1.msra.mxu0 0.0
        %2379 = vmatprep.subr.mxu0 0.0
        %2380 = vmatpush1.msra.mxu0 0.0
        %2381 = vmatprep.subr.mxu0 0.0
        %2382 = vmatpush1.msra.mxu0 0.0
        %2383 = vmatprep.subr.mxu0 0.0
        %2384 = vmatpush1.msra.mxu0 0.0
        %2385 = vmatprep.subr.mxu0 0.0
        %2386 = vmatpush1.msra.mxu0 0.0
        %2387 = vmatprep.subr.mxu0 0.0
        %2388 = vmatpush1.msra.mxu0 0.0
        %2389 = vmatprep.subr.mxu0 0.0
        %2390 = vmatpush1.msra.mxu0 0.0
        %2391 = vmatprep.subr.mxu0 0.0
        %2392 = vmatpush1.msra.mxu0 0.0
        %2393 = vmatprep.subr.mxu0 0.0
        %2394 = vmatpush1.msra.mxu0 0.0
        %2395 = vmatprep.subr.mxu0 0.0
        %2396 = vmatpush1.msra.mxu0 0.0
        %2397 = vmatprep.subr.mxu0 0.0
        %2398 = vmatpush1.msra.mxu0 0.0
        %2399 = vmatprep.mubr.f32.mxu0 0.0
        %2400 = vmatmul.mubr.f32.gmra.mrb[0].mxu0 %v824
        %v2401 = vpop.f32.mrb[0].mxu0
        %v2402 = vadd.f32 %v725, %v2401
        %v2403 = vpop.f32.mrb[0].mxu0
        %v2404 = vadd.f32 %v725, %v2403
        %2405 = vdwg.mxu0
        %2406 = vmatprep.subr.mxu0 %v2334
        %2407 = vmatpush1.msra.mxu0 %v2333
        %2408 = vmatprep.subr.mxu0 0.0
        %2409 = vmatpush1.msra.mxu0 0.0
        %2410 = vmatprep.subr.mxu0 0.0
        %2411 = vmatpush1.msra.mxu0 0.0
        %2412 = vmatprep.subr.mxu0 0.0
        %2413 = vmatpush1.msra.mxu0 0.0
        %2414 = vmatprep.subr.mxu0 0.0
        %2415 = vmatpush1.msra.mxu0 0.0
        %2416 = vmatprep.subr.mxu0 0.0
        %2417 = vmatpush1.msra.mxu0 0.0
        %2418 = vmatprep.subr.mxu0 0.0
        %2419 = vmatpush1.msra.mxu0 0.0
        %2420 = vmatprep.subr.mxu0 0.0
        %2421 = vmatpush1.msra.mxu0 0.0
        %2422 = vmatprep.subr.mxu0 0.0
        %2423 = vmatpush1.msra.mxu0 0.0
        %2424 = vmatprep.subr.mxu0 0.0
        %2425 = vmatpush1.msra.mxu0 0.0
        %2426 = vmatprep.subr.mxu0 0.0
        %2427 = vmatpush1.msra.mxu0 0.0
        %2428 = vmatprep.subr.mxu0 0.0
        %2429 = vmatpush1.msra.mxu0 0.0
        %2430 = vmatprep.subr.mxu0 0.0
        %2431 = vmatpush1.msra.mxu0 0.0
        %2432 = vmatprep.subr.mxu0 0.0
        %2433 = vmatpush1.msra.mxu0 0.0
        %2434 = vmatprep.subr.mxu0 0.0
        %2435 = vmatpush1.msra.mxu0 0.0
        %2436 = vmatprep.subr.mxu0 0.0
        %2437 = vmatpush1.msra.mxu0 0.0
        %2438 = vmatprep.subr.mxu0 0.0
        %2439 = vmatpush1.msra.mxu0 0.0
        %2440 = vmatprep.subr.mxu0 0.0
        %2441 = vmatpush1.msra.mxu0 0.0
        %2442 = vmatprep.subr.mxu0 0.0
        %2443 = vmatpush1.msra.mxu0 0.0
        %2444 = vmatprep.subr.mxu0 0.0
        %2445 = vmatpush1.msra.mxu0 0.0
        %2446 = vmatprep.subr.mxu0 0.0
        %2447 = vmatpush1.msra.mxu0 0.0
        %2448 = vmatprep.subr.mxu0 0.0
        %2449 = vmatpush1.msra.mxu0 0.0
        %2450 = vmatprep.subr.mxu0 0.0
        %2451 = vmatpush1.msra.mxu0 0.0
        %2452 = vmatprep.subr.mxu0 0.0
        %2453 = vmatpush1.msra.mxu0 0.0
        %2454 = vmatprep.subr.mxu0 0.0
        %2455 = vmatpush1.msra.mxu0 0.0
        %2456 = vmatprep.subr.mxu0 0.0
        %2457 = vmatpush1.msra.mxu0 0.0
        %2458 = vmatprep.subr.mxu0 0.0
        %2459 = vmatpush1.msra.mxu0 0.0
        %2460 = vmatprep.subr.mxu0 0.0
        %2461 = vmatpush1.msra.mxu0 0.0
        %2462 = vmatprep.subr.mxu0 0.0
        %2463 = vmatpush1.msra.mxu0 0.0
        %2464 = vmatprep.subr.mxu0 0.0
        %2465 = vmatpush1.msra.mxu0 0.0
        %2466 = vmatprep.subr.mxu0 0.0
        %2467 = vmatpush1.msra.mxu0 0.0
        %2468 = vmatprep.subr.mxu0 0.0
        %2469 = vmatpush1.msra.mxu0 0.0
        %2470 = vmatprep.mubr.f32.mxu0 0.0
        %2471 = vmatmul.mubr.f32.gmra.mrb[0].mxu0 %v824
        %v2472 = vpop.f32.mrb[0].mxu0
        %v2473 = vadd.f32 %v725, %v2472
        %v2474 = vpop.f32.mrb[0].mxu0
        %v2475 = vadd.f32 %v725, %v2474
        %2476 = vdwg.mxu0
        %2477 = vmatprep.subr.mxu0 %v2332
        %2478 = vmatpush1.msra.mxu0 %v2331
        %2479 = vmatprep.subr.mxu0 0.0
        %2480 = vmatpush1.msra.mxu0 0.0
        %2481 = vmatprep.subr.mxu0 0.0
        %2482 = vmatpush1.msra.mxu0 0.0
        %2483 = vmatprep.subr.mxu0 0.0
        %2484 = vmatpush1.msra.mxu0 0.0
        %2485 = vmatprep.subr.mxu0 0.0
        %2486 = vmatpush1.msra.mxu0 0.0
        %2487 = vmatprep.subr.mxu0 0.0
        %2488 = vmatpush1.msra.mxu0 0.0
        %2489 = vmatprep.subr.mxu0 0.0
        %2490 = vmatpush1.msra.mxu0 0.0
        %2491 = vmatprep.subr.mxu0 0.0
        %2492 = vmatpush1.msra.mxu0 0.0
        %2493 = vmatprep.subr.mxu0 0.0
        %2494 = vmatpush1.msra.mxu0 0.0
        %2495 = vmatprep.subr.mxu0 0.0
        %2496 = vmatpush1.msra.mxu0 0.0
        %2497 = vmatprep.subr.mxu0 0.0
        %2498 = vmatpush1.msra.mxu0 0.0
        %2499 = vmatprep.subr.mxu0 0.0
        %2500 = vmatpush1.msra.mxu0 0.0
        %2501 = vmatprep.subr.mxu0 0.0
        %2502 = vmatpush1.msra.mxu0 0.0
        %2503 = vmatprep.subr.mxu0 0.0
        %2504 = vmatpush1.msra.mxu0 0.0
        %2505 = vmatprep.subr.mxu0 0.0
        %2506 = vmatpush1.msra.mxu0 0.0
        %2507 = vmatprep.subr.mxu0 0.0
        %2508 = vmatpush1.msra.mxu0 0.0
        %2509 = vmatprep.subr.mxu0 0.0
        %2510 = vmatpush1.msra.mxu0 0.0
        %2511 = vmatprep.subr.mxu0 0.0
        %2512 = vmatpush1.msra.mxu0 0.0
        %2513 = vmatprep.subr.mxu0 0.0
        %2514 = vmatpush1.msra.mxu0 0.0
        %2515 = vmatprep.subr.mxu0 0.0
        %2516 = vmatpush1.msra.mxu0 0.0
        %2517 = vmatprep.subr.mxu0 0.0
        %2518 = vmatpush1.msra.mxu0 0.0
        %2519 = vmatprep.subr.mxu0 0.0
        %2520 = vmatpush1.msra.mxu0 0.0
        %2521 = vmatprep.subr.mxu0 0.0
        %2522 = vmatpush1.msra.mxu0 0.0
        %2523 = vmatprep.subr.mxu0 0.0
        %2524 = vmatpush1.msra.mxu0 0.0
        %2525 = vmatprep.subr.mxu0 0.0
        %2526 = vmatpush1.msra.mxu0 0.0
        %2527 = vmatprep.subr.mxu0 0.0
        %2528 = vmatpush1.msra.mxu0 0.0
        %2529 = vmatprep.subr.mxu0 0.0
        %2530 = vmatpush1.msra.mxu0 0.0
        %2531 = vmatprep.subr.mxu0 0.0
        %2532 = vmatpush1.msra.mxu0 0.0
        %2533 = vmatprep.subr.mxu0 0.0
        %2534 = vmatpush1.msra.mxu0 0.0
        %2535 = vmatprep.subr.mxu0 0.0
        %2536 = vmatpush1.msra.mxu0 0.0
        %2537 = vmatprep.subr.mxu0 0.0
        %2538 = vmatpush1.msra.mxu0 0.0
        %2539 = vmatprep.subr.mxu0 0.0
        %2540 = vmatpush1.msra.mxu0 0.0
        %2541 = vmatprep.mubr.f32.mxu0 0.0
        %2542 = vmatmul.mubr.f32.gmra.mrb[0].mxu0 %v969
        %v2543 = vpop.f32.mrb[0].mxu0
        %v2544 = vadd.f32 %v729, %v2543
        %v2545 = vpop.f32.mrb[0].mxu0
        %v2546 = vadd.f32 %v729, %v2545
        %2547 = vdwg.mxu0
        %2548 = vmatprep.subr.mxu0 %v2334
        %2549 = vmatpush1.msra.mxu0 %v2333
        %2550 = vmatprep.subr.mxu0 0.0
        %2551 = vmatpush1.msra.mxu0 0.0
        %2552 = vmatprep.subr.mxu0 0.0
        %2553 = vmatpush1.msra.mxu0 0.0
        %2554 = vmatprep.subr.mxu0 0.0
        %2555 = vmatpush1.msra.mxu0 0.0
        %2556 = vmatprep.subr.mxu0 0.0
        %2557 = vmatpush1.msra.mxu0 0.0
        %2558 = vmatprep.subr.mxu0 0.0
        %2559 = vmatpush1.msra.mxu0 0.0
        %2560 = vmatprep.subr.mxu0 0.0
        %2561 = vmatpush1.msra.mxu0 0.0
        %2562 = vmatprep.subr.mxu0 0.0
        %2563 = vmatpush1.msra.mxu0 0.0
        %2564 = vmatprep.subr.mxu0 0.0
        %2565 = vmatpush1.msra.mxu0 0.0
        %2566 = vmatprep.subr.mxu0 0.0
        %2567 = vmatpush1.msra.mxu0 0.0
        %2568 = vmatprep.subr.mxu0 0.0
        %2569 = vmatpush1.msra.mxu0 0.0
        %2570 = vmatprep.subr.mxu0 0.0
        %2571 = vmatpush1.msra.mxu0 0.0
        %2572 = vmatprep.subr.mxu0 0.0
        %2573 = vmatpush1.msra.mxu0 0.0
        %2574 = vmatprep.subr.mxu0 0.0
        %2575 = vmatpush1.msra.mxu0 0.0
        %2576 = vmatprep.subr.mxu0 0.0
        %2577 = vmatpush1.msra.mxu0 0.0
        %2578 = vmatprep.subr.mxu0 0.0
        %2579 = vmatpush1.msra.mxu0 0.0
        %2580 = vmatprep.subr.mxu0 0.0
        %2581 = vmatpush1.msra.mxu0 0.0
        %2582 = vmatprep.subr.mxu0 0.0
        %2583 = vmatpush1.msra.mxu0 0.0
        %2584 = vmatprep.subr.mxu0 0.0
        %2585 = vmatpush1.msra.mxu0 0.0
        %2586 = vmatprep.subr.mxu0 0.0
        %2587 = vmatpush1.msra.mxu0 0.0
        %2588 = vmatprep.subr.mxu0 0.0
        %2589 = vmatpush1.msra.mxu0 0.0
        %2590 = vmatprep.subr.mxu0 0.0
        %2591 = vmatpush1.msra.mxu0 0.0
        %2592 = vmatprep.subr.mxu0 0.0
        %2593 = vmatpush1.msra.mxu0 0.0
        %2594 = vmatprep.subr.mxu0 0.0
        %2595 = vmatpush1.msra.mxu0 0.0
        %2596 = vmatprep.subr.mxu0 0.0
        %2597 = vmatpush1.msra.mxu0 0.0
        %2598 = vmatprep.subr.mxu0 0.0
        %2599 = vmatpush1.msra.mxu0 0.0
        %2600 = vmatprep.subr.mxu0 0.0
        %2601 = vmatpush1.msra.mxu0 0.0
        %2602 = vmatprep.subr.mxu0 0.0
        %2603 = vmatpush1.msra.mxu0 0.0
        %2604 = vmatprep.subr.mxu0 0.0
        %2605 = vmatpush1.msra.mxu0 0.0
        %2606 = vmatprep.subr.mxu0 0.0
        %2607 = vmatpush1.msra.mxu0 0.0
        %2608 = vmatprep.subr.mxu0 0.0
        %2609 = vmatpush1.msra.mxu0 0.0
        %2610 = vmatprep.subr.mxu0 0.0
        %2611 = vmatpush1.msra.mxu0 0.0
        %2612 = vmatprep.mubr.f32.mxu0 0.0
        %2613 = vmatmul.mubr.f32.gmra.mrb[0].mxu0 %v969
        %v2614 = vpop.f32.mrb[0].mxu0
        %v2615 = vadd.f32 %v729, %v2614
        %v2616 = vpop.f32.mrb[0].mxu0
        %v2617 = vadd.f32 %v729, %v2616
        %2618 = vdwg.mxu0
        %2619 = vmatprep.subr.mxu0 %v2332
        %2620 = vmatpush1.msra.mxu0 %v2331
        %2621 = vmatprep.subr.mxu0 0.0
        %2622 = vmatpush1.msra.mxu0 0.0
        %2623 = vmatprep.subr.mxu0 0.0
        %2624 = vmatpush1.msra.mxu0 0.0
        %2625 = vmatprep.subr.mxu0 0.0
        %2626 = vmatpush1.msra.mxu0 0.0
        %2627 = vmatprep.subr.mxu0 0.0
        %2628 = vmatpush1.msra.mxu0 0.0
        %2629 = vmatprep.subr.mxu0 0.0
        %2630 = vmatpush1.msra.mxu0 0.0
        %2631 = vmatprep.subr.mxu0 0.0
        %2632 = vmatpush1.msra.mxu0 0.0
        %2633 = vmatprep.subr.mxu0 0.0
        %2634 = vmatpush1.msra.mxu0 0.0
        %2635 = vmatprep.subr.mxu0 0.0
        %2636 = vmatpush1.msra.mxu0 0.0
        %2637 = vmatprep.subr.mxu0 0.0
        %2638 = vmatpush1.msra.mxu0 0.0
        %2639 = vmatprep.subr.mxu0 0.0
        %2640 = vmatpush1.msra.mxu0 0.0
        %2641 = vmatprep.subr.mxu0 0.0
        %2642 = vmatpush1.msra.mxu0 0.0
        %2643 = vmatprep.subr.mxu0 0.0
        %2644 = vmatpush1.msra.mxu0 0.0
        %2645 = vmatprep.subr.mxu0 0.0
        %2646 = vmatpush1.msra.mxu0 0.0
        %2647 = vmatprep.subr.mxu0 0.0
        %2648 = vmatpush1.msra.mxu0 0.0
        %2649 = vmatprep.subr.mxu0 0.0
        %2650 = vmatpush1.msra.mxu0 0.0
        %2651 = vmatprep.subr.mxu0 0.0
        %2652 = vmatpush1.msra.mxu0 0.0
        %2653 = vmatprep.subr.mxu0 0.0
        %2654 = vmatpush1.msra.mxu0 0.0
        %2655 = vmatprep.subr.mxu0 0.0
        %2656 = vmatpush1.msra.mxu0 0.0
        %2657 = vmatprep.subr.mxu0 0.0
        %2658 = vmatpush1.msra.mxu0 0.0
        %2659 = vmatprep.subr.mxu0 0.0
        %2660 = vmatpush1.msra.mxu0 0.0
        %2661 = vmatprep.subr.mxu0 0.0
        %2662 = vmatpush1.msra.mxu0 0.0
        %2663 = vmatprep.subr.mxu0 0.0
        %2664 = vmatpush1.msra.mxu0 0.0
        %2665 = vmatprep.subr.mxu0 0.0
        %2666 = vmatpush1.msra.mxu0 0.0
        %2667 = vmatprep.subr.mxu0 0.0
        %2668 = vmatpush1.msra.mxu0 0.0
        %2669 = vmatprep.subr.mxu0 0.0
        %2670 = vmatpush1.msra.mxu0 0.0
        %2671 = vmatprep.subr.mxu0 0.0
        %2672 = vmatpush1.msra.mxu0 0.0
        %2673 = vmatprep.subr.mxu0 0.0
        %2674 = vmatpush1.msra.mxu0 0.0
        %2675 = vmatprep.subr.mxu0 0.0
        %2676 = vmatpush1.msra.mxu0 0.0
        %2677 = vmatprep.subr.mxu0 0.0
        %2678 = vmatpush1.msra.mxu0 0.0
        %2679 = vmatprep.subr.mxu0 0.0
        %2680 = vmatpush1.msra.mxu0 0.0
        %2681 = vmatprep.subr.mxu0 0.0
        %2682 = vmatpush1.msra.mxu0 0.0
        %2683 = vmatprep.mubr.f32.mxu0 0.0
        %2684 = vmatmul.mubr.f32.gmra.mrb[0].mxu0 %v1114
        %v2685 = vpop.f32.mrb[0].mxu0
        %v2686 = vadd.f32 %v733, %v2685
        %v2687 = vpop.f32.mrb[0].mxu0
        %v2688 = vadd.f32 %v733, %v2687
        %2689 = vdwg.mxu0
        %2690 = vmatprep.subr.mxu0 %v2334
        %2691 = vmatpush1.msra.mxu0 %v2333
        %2692 = vmatprep.subr.mxu0 0.0
        %2693 = vmatpush1.msra.mxu0 0.0
        %2694 = vmatprep.subr.mxu0 0.0
        %2695 = vmatpush1.msra.mxu0 0.0
        %2696 = vmatprep.subr.mxu0 0.0
        %2697 = vmatpush1.msra.mxu0 0.0
        %2698 = vmatprep.subr.mxu0 0.0
        %2699 = vmatpush1.msra.mxu0 0.0
        %2700 = vmatprep.subr.mxu0 0.0
        %2701 = vmatpush1.msra.mxu0 0.0
        %2702 = vmatprep.subr.mxu0 0.0
        %2703 = vmatpush1.msra.mxu0 0.0
        %2704 = vmatprep.subr.mxu0 0.0
        %2705 = vmatpush1.msra.mxu0 0.0
        %2706 = vmatprep.subr.mxu0 0.0
        %2707 = vmatpush1.msra.mxu0 0.0
        %2708 = vmatprep.subr.mxu0 0.0
        %2709 = vmatpush1.msra.mxu0 0.0
        %2710 = vmatprep.subr.mxu0 0.0
        %2711 = vmatpush1.msra.mxu0 0.0
        %2712 = vmatprep.subr.mxu0 0.0
        %2713 = vmatpush1.msra.mxu0 0.0
        %2714 = vmatprep.subr.mxu0 0.0
        %2715 = vmatpush1.msra.mxu0 0.0
        %2716 = vmatprep.subr.mxu0 0.0
        %2717 = vmatpush1.msra.mxu0 0.0
        %2718 = vmatprep.subr.mxu0 0.0
        %2719 = vmatpush1.msra.mxu0 0.0
        %2720 = vmatprep.subr.mxu0 0.0
        %2721 = vmatpush1.msra.mxu0 0.0
        %2722 = vmatprep.subr.mxu0 0.0
        %2723 = vmatpush1.msra.mxu0 0.0
        %2724 = vmatprep.subr.mxu0 0.0
        %2725 = vmatpush1.msra.mxu0 0.0
        %2726 = vmatprep.subr.mxu0 0.0
        %2727 = vmatpush1.msra.mxu0 0.0
        %2728 = vmatprep.subr.mxu0 0.0
        %2729 = vmatpush1.msra.mxu0 0.0
        %2730 = vmatprep.subr.mxu0 0.0
        %2731 = vmatpush1.msra.mxu0 0.0
        %2732 = vmatprep.subr.mxu0 0.0
        %2733 = vmatpush1.msra.mxu0 0.0
        %2734 = vmatprep.subr.mxu0 0.0
        %2735 = vmatpush1.msra.mxu0 0.0
        %2736 = vmatprep.subr.mxu0 0.0
        %2737 = vmatpush1.msra.mxu0 0.0
        %2738 = vmatprep.subr.mxu0 0.0
        %2739 = vmatpush1.msra.mxu0 0.0
        %2740 = vmatprep.subr.mxu0 0.0
        %2741 = vmatpush1.msra.mxu0 0.0
        %2742 = vmatprep.subr.mxu0 0.0
        %2743 = vmatpush1.msra.mxu0 0.0
        %2744 = vmatprep.subr.mxu0 0.0
        %2745 = vmatpush1.msra.mxu0 0.0
        %2746 = vmatprep.subr.mxu0 0.0
        %2747 = vmatpush1.msra.mxu0 0.0
        %2748 = vmatprep.subr.mxu0 0.0
        %2749 = vmatpush1.msra.mxu0 0.0
        %2750 = vmatprep.subr.mxu0 0.0
        %2751 = vmatpush1.msra.mxu0 0.0
        %2752 = vmatprep.subr.mxu0 0.0
        %2753 = vmatpush1.msra.mxu0 0.0
        %2754 = vmatprep.mubr.f32.mxu0 0.0
        %2755 = vmatmul.mubr.f32.gmra.mrb[0].mxu0 %v1114
        %v2756 = vpop.f32.mrb[0].mxu0
        %v2757 = vadd.f32 %v733, %v2756
        %v2758 = vpop.f32.mrb[0].mxu0
        %v2759 = vadd.f32 %v733, %v2758
        %2760 = vdwg.mxu0
        %v2761 = vmul.f32 %v893, %v1038
        %v2762 = vmul.f32 %v895, %v1040
        %v2763 = vmul.f32 %v964, %v1109
        %v2764 = vmul.f32 %v966, %v1111
        %v2765 = vmul.f32 %v893, %v1542
        %v2766 = vmul.f32 %v895, %v1544
        %v2767 = vmul.f32 %v964, %v1613
        %v2768 = vmul.f32 %v966, %v1615
        %v2769 = vmax.f32 %v2761, %v2765
        %v2770 = vmax.f32 %v2762, %v2766
        %v2771 = vmax.f32 %v2763, %v2767
        %v2772 = vmax.f32 %v2764, %v2768
        %v2773 = vsub.f32 %v2761, %v2769
        %v2774 = vsub.f32 %v2762, %v2770
        %v2775 = vsub.f32 %v2763, %v2771
        %v2776 = vsub.f32 %v2764, %v2772
        %v2777 = vmul.f32 %v2773, 1.442695
        %v2778 = vpow.pop %v2777
        %v2779 = vmul.f32 %v2774, 1.442695
        %v2780 = vpow.pop %v2779
        %v2781 = vmul.f32 %v2775, 1.442695
        %v2782 = vpow.pop %v2781
        %v2783 = vmul.f32 %v2776, 1.442695
        %v2784 = vpow.pop %v2783
        %v2785 = vsub.f32 %v2765, %v2769
        %v2786 = vsub.f32 %v2766, %v2770
        %v2787 = vsub.f32 %v2767, %v2771
        %v2788 = vsub.f32 %v2768, %v2772
        %v2789 = vmul.f32 %v2785, 1.442695
        %v2790 = vpow.pop %v2789
        %v2791 = vmul.f32 %v2786, 1.442695
        %v2792 = vpow.pop %v2791
        %v2793 = vmul.f32 %v2787, 1.442695
        %v2794 = vpow.pop %v2793
        %v2795 = vmul.f32 %v2788, 1.442695
        %v2796 = vpow.pop %v2795
        %v2797 = vadd.f32 %v2778, %v2790
        %v2798 = vadd.f32 %v2780, %v2792
        %v2799 = vadd.f32 %v2782, %v2794
        %v2800 = vadd.f32 %v2784, %v2796
        %v2801 = vmul.f32 %v1183, %v2778
        %v2802 = vmul.f32 %v1185, %v2780
        %v2803 = vmul.f32 %v1254, %v2782
        %v2804 = vmul.f32 %v1256, %v2784
        %v2805 = vmul.f32 %v2790, %v1684
        %v2806 = vmul.f32 %v2792, %v1686
        %v2807 = vmul.f32 %v2794, %v1755
        %v2808 = vmul.f32 %v2796, %v1757
        %v2809 = vadd.f32 %v2801, %v2805
        %v2810 = vadd.f32 %v2802, %v2806
        %v2811 = vadd.f32 %v2803, %v2807
        %v2812 = vadd.f32 %v2804, %v2808
        %v2813 = vmul.f32 %v893, %v2043
        %v2814 = vmul.f32 %v895, %v2045
        %v2815 = vmul.f32 %v964, %v2114
        %v2816 = vmul.f32 %v966, %v2116
        %v2817 = vmax.f32 %v2769, %v2813
        %v2818 = vmax.f32 %v2770, %v2814
        %v2819 = vmax.f32 %v2771, %v2815
        %v2820 = vmax.f32 %v2772, %v2816
        %v2821 = vsub.f32 %v2769, %v2817
        %v2822 = vsub.f32 %v2770, %v2818
        %v2823 = vsub.f32 %v2771, %v2819
        %v2824 = vsub.f32 %v2772, %v2820
        %v2825 = vmul.f32 %v2821, 1.442695
        %v2826 = vpow.pop %v2825
        %v2827 = vmul.f32 %v2822, 1.442695
        %v2828 = vpow.pop %v2827
        %v2829 = vmul.f32 %v2823, 1.442695
        %v2830 = vpow.pop %v2829
        %v2831 = vmul.f32 %v2824, 1.442695
        %v2832 = vpow.pop %v2831
        %v2833 = vsub.f32 %v2813, %v2817
        %v2834 = vsub.f32 %v2814, %v2818
        %v2835 = vsub.f32 %v2815, %v2819
        %v2836 = vsub.f32 %v2816, %v2820
        %v2837 = vmul.f32 %v2833, 1.442695
        %v2838 = vpow.pop %v2837
        %v2839 = vmul.f32 %v2834, 1.442695
        %v2840 = vpow.pop %v2839
        %v2841 = vmul.f32 %v2835, 1.442695
        %v2842 = vpow.pop %v2841
        %v2843 = vmul.f32 %v2836, 1.442695
        %v2844 = vpow.pop %v2843
        %v2845 = vmul.f32 %v2797, %v2826
        %v2846 = vmul.f32 %v2798, %v2828
        %v2847 = vmul.f32 %v2799, %v2830
        %v2848 = vmul.f32 %v2800, %v2832
        %v2849 = vadd.f32 %v2845, %v2838
        %v2850 = vadd.f32 %v2846, %v2840
        %v2851 = vadd.f32 %v2847, %v2842
        %v2852 = vadd.f32 %v2848, %v2844
        %v2853 = vmul.f32 %v2809, %v2826
        %v2854 = vmul.f32 %v2810, %v2828
        %v2855 = vmul.f32 %v2811, %v2830
        %v2856 = vmul.f32 %v2812, %v2832
        %v2857 = vmul.f32 %v2838, %v2185
        %v2858 = vmul.f32 %v2840, %v2187
        %v2859 = vmul.f32 %v2842, %v2256
        %v2860 = vmul.f32 %v2844, %v2258
        %v2861 = vadd.f32 %v2853, %v2857
        %v2862 = vadd.f32 %v2854, %v2858
        %v2863 = vadd.f32 %v2855, %v2859
        %v2864 = vadd.f32 %v2856, %v2860
        %v2865 = vmul.f32 %v893, %v2544
        %v2866 = vmul.f32 %v895, %v2546
        %v2867 = vmul.f32 %v964, %v2615
        %v2868 = vmul.f32 %v966, %v2617
        %v2869 = vmax.f32 %v2817, %v2865
        %v2870 = vmax.f32 %v2818, %v2866
        %v2871 = vmax.f32 %v2819, %v2867
        %v2872 = vmax.f32 %v2820, %v2868
        %v2873 = vsub.f32 %v2817, %v2869
        %v2874 = vsub.f32 %v2818, %v2870
        %v2875 = vsub.f32 %v2819, %v2871
        %v2876 = vsub.f32 %v2820, %v2872
        %v2877 = vmul.f32 %v2873, 1.442695
        %v2878 = vpow.pop %v2877
        %v2879 = vmul.f32 %v2874, 1.442695
        %v2880 = vpow.pop %v2879
        %v2881 = vmul.f32 %v2875, 1.442695
        %v2882 = vpow.pop %v2881
        %v2883 = vmul.f32 %v2876, 1.442695
        %v2884 = vpow.pop %v2883
        %v2885 = vsub.f32 %v2865, %v2869
        %v2886 = vsub.f32 %v2866, %v2870
        %v2887 = vsub.f32 %v2867, %v2871
        %v2888 = vsub.f32 %v2868, %v2872
        %v2889 = vmul.f32 %v2885, 1.442695
        %v2890 = vpow.pop %v2889
        %v2891 = vmul.f32 %v2886, 1.442695
        %v2892 = vpow.pop %v2891
        %v2893 = vmul.f32 %v2887, 1.442695
        %v2894 = vpow.pop %v2893
        %v2895 = vmul.f32 %v2888, 1.442695
        %v2896 = vpow.pop %v2895
        %v2897 = vmul.f32 %v2849, %v2878
        %v2898 = vmul.f32 %v2850, %v2880
        %v2899 = vmul.f32 %v2851, %v2882
        %v2900 = vmul.f32 %v2852, %v2884
        %v2901 = vadd.f32 %v2897, %v2890
        %v2902 = vadd.f32 %v2898, %v2892
        %v2903 = vadd.f32 %v2899, %v2894
        %v2904 = vadd.f32 %v2900, %v2896
        %v2905 = vmul.f32 %v2861, %v2878
        %v2906 = vmul.f32 %v2862, %v2880
        %v2907 = vmul.f32 %v2863, %v2882
        %v2908 = vmul.f32 %v2864, %v2884
        %v2909 = vmul.f32 %v2890, %v2686
        %v2910 = vmul.f32 %v2892, %v2688
        %v2911 = vmul.f32 %v2894, %v2757
        %v2912 = vmul.f32 %v2896, %v2759
        %v2913 = vadd.f32 %v2905, %v2909
        %v2914 = vadd.f32 %v2906, %v2910
        %v2915 = vadd.f32 %v2907, %v2911
        %v2916 = vadd.f32 %v2908, %v2912
        %v2917 = vrcp.pop %v2901
        %v2918 = vmul.f32 %v2913, %v2917
        %v2919 = vrcp.pop %v2902
        %v2920 = vmul.f32 %v2914, %v2919
        %v2921 = vrcp.pop %v2903
        %v2922 = vmul.f32 %v2915, %v2921
        %v2923 = vrcp.pop %v2904
        %v2924 = vmul.f32 %v2916, %v2923
        %v2926 = vsel %vm822, %v746, 0
        %2928 = vmatprep.subr.mxu0 %v2920
        %2929 = vmatpush1.msra.mxu0 %v2918
        %2930 = vmatprep.subr.mxu0 0.0
        %2931 = vmatpush1.msra.mxu0 0.0
        %2932 = vmatprep.subr.mxu0 0.0
        %2933 = vmatpush1.msra.mxu0 0.0
        %2934 = vmatprep.subr.mxu0 0.0
        %2935 = vmatpush1.msra.mxu0 0.0
        %2936 = vmatprep.subr.mxu0 0.0
        %2937 = vmatpush1.msra.mxu0 0.0
        %2938 = vmatprep.subr.mxu0 0.0
        %2939 = vmatpush1.msra.mxu0 0.0
        %2940 = vmatprep.subr.mxu0 0.0
        %2941 = vmatpush1.msra.mxu0 0.0
        %2942 = vmatprep.subr.mxu0 0.0
        %2943 = vmatpush1.msra.mxu0 0.0
        %2944 = vmatprep.subr.mxu0 0.0
        %2945 = vmatpush1.msra.mxu0 0.0
        %2946 = vmatprep.subr.mxu0 0.0
        %2947 = vmatpush1.msra.mxu0 0.0
        %2948 = vmatprep.subr.mxu0 0.0
        %2949 = vmatpush1.msra.mxu0 0.0
        %2950 = vmatprep.subr.mxu0 0.0
        %2951 = vmatpush1.msra.mxu0 0.0
        %2952 = vmatprep.subr.mxu0 0.0
        %2953 = vmatpush1.msra.mxu0 0.0
        %2954 = vmatprep.subr.mxu0 0.0
        %2955 = vmatpush1.msra.mxu0 0.0
        %2956 = vmatprep.subr.mxu0 0.0
        %2957 = vmatpush1.msra.mxu0 0.0
        %2958 = vmatprep.subr.mxu0 0.0
        %2959 = vmatpush1.msra.mxu0 0.0
        %2960 = vmatprep.subr.mxu0 0.0
        %2961 = vmatpush1.msra.mxu0 0.0
        %2962 = vmatprep.subr.mxu0 0.0
        %2963 = vmatpush1.msra.mxu0 0.0
        %2964 = vmatprep.subr.mxu0 0.0
        %2965 = vmatpush1.msra.mxu0 0.0
        %2966 = vmatprep.subr.mxu0 0.0
        %2967 = vmatpush1.msra.mxu0 0.0
        %2968 = vmatprep.subr.mxu0 0.0
        %2969 = vmatpush1.msra.mxu0 0.0
        %2970 = vmatprep.subr.mxu0 0.0
        %2971 = vmatpush1.msra.mxu0 0.0
        %2972 = vmatprep.subr.mxu0 0.0
        %2973 = vmatpush1.msra.mxu0 0.0
        %2974 = vmatprep.subr.mxu0 0.0
        %2975 = vmatpush1.msra.mxu0 0.0
        %2976 = vmatprep.subr.mxu0 0.0
        %2977 = vmatpush1.msra.mxu0 0.0
        %2978 = vmatprep.subr.mxu0 0.0
        %2979 = vmatpush1.msra.mxu0 0.0
        %2980 = vmatprep.subr.mxu0 0.0
        %2981 = vmatpush1.msra.mxu0 0.0
        %2982 = vmatprep.subr.mxu0 0.0
        %2983 = vmatpush1.msra.mxu0 0.0
        %2984 = vmatprep.subr.mxu0 0.0
        %2985 = vmatpush1.msra.mxu0 0.0
        %2986 = vmatprep.subr.mxu0 0.0
        %2987 = vmatpush1.msra.mxu0 0.0
        %2988 = vmatprep.subr.mxu0 0.0
        %2989 = vmatpush1.msra.mxu0 0.0
        %2990 = vmatprep.subr.mxu0 0.0
        %2991 = vmatpush1.msra.mxu0 0.0
        %2992 = vmatprep.mubr.f32.mxu0 0.0
        %2993 = vmatmul.mubr.f32.gmra.mrb[0].mxu0 %v2926
        %v2994 = vpop.f32.mrb[0].mxu0
        %v2995 = vadd.f32 %v737, %v2994
        %v2996 = vpop.f32.mrb[0].mxu0
        %v2997 = vadd.f32 %v737, %v2996
        %2998 = vdwg.mxu0
        %2999 = vmatprep.subr.mxu0 %v2924
        %3000 = vmatpush1.msra.mxu0 %v2922
        %3001 = vmatprep.subr.mxu0 0.0
        %3002 = vmatpush1.msra.mxu0 0.0
        %3003 = vmatprep.subr.mxu0 0.0
        %3004 = vmatpush1.msra.mxu0 0.0
        %3005 = vmatprep.subr.mxu0 0.0
        %3006 = vmatpush1.msra.mxu0 0.0
        %3007 = vmatprep.subr.mxu0 0.0
        %3008 = vmatpush1.msra.mxu0 0.0
        %3009 = vmatprep.subr.mxu0 0.0
        %3010 = vmatpush1.msra.mxu0 0.0
        %3011 = vmatprep.subr.mxu0 0.0
        %3012 = vmatpush1.msra.mxu0 0.0
        %3013 = vmatprep.subr.mxu0 0.0
        %3014 = vmatpush1.msra.mxu0 0.0
        %3015 = vmatprep.subr.mxu0 0.0
        %3016 = vmatpush1.msra.mxu0 0.0
        %3017 = vmatprep.subr.mxu0 0.0
        %3018 = vmatpush1.msra.mxu0 0.0
        %3019 = vmatprep.subr.mxu0 0.0
        %3020 = vmatpush1.msra.mxu0 0.0
        %3021 = vmatprep.subr.mxu0 0.0
        %3022 = vmatpush1.msra.mxu0 0.0
        %3023 = vmatprep.subr.mxu0 0.0
        %3024 = vmatpush1.msra.mxu0 0.0
        %3025 = vmatprep.subr.mxu0 0.0
        %3026 = vmatpush1.msra.mxu0 0.0
        %3027 = vmatprep.subr.mxu0 0.0
        %3028 = vmatpush1.msra.mxu0 0.0
        %3029 = vmatprep.subr.mxu0 0.0
        %3030 = vmatpush1.msra.mxu0 0.0
        %3031 = vmatprep.subr.mxu0 0.0
        %3032 = vmatpush1.msra.mxu0 0.0
        %3033 = vmatprep.subr.mxu0 0.0
        %3034 = vmatpush1.msra.mxu0 0.0
        %3035 = vmatprep.subr.mxu0 0.0
        %3036 = vmatpush1.msra.mxu0 0.0
        %3037 = vmatprep.subr.mxu0 0.0
        %3038 = vmatpush1.msra.mxu0 0.0
        %3039 = vmatprep.subr.mxu0 0.0
        %3040 = vmatpush1.msra.mxu0 0.0
        %3041 = vmatprep.subr.mxu0 0.0
        %3042 = vmatpush1.msra.mxu0 0.0
        %3043 = vmatprep.subr.mxu0 0.0
        %3044 = vmatpush1.msra.mxu0 0.0
        %3045 = vmatprep.subr.mxu0 0.0
        %3046 = vmatpush1.msra.mxu0 0.0
        %3047 = vmatprep.subr.mxu0 0.0
        %3048 = vmatpush1.msra.mxu0 0.0
        %3049 = vmatprep.subr.mxu0 0.0
        %3050 = vmatpush1.msra.mxu0 0.0
        %3051 = vmatprep.subr.mxu0 0.0
        %3052 = vmatpush1.msra.mxu0 0.0
        %3053 = vmatprep.subr.mxu0 0.0
        %3054 = vmatpush1.msra.mxu0 0.0
        %3055 = vmatprep.subr.mxu0 0.0
        %3056 = vmatpush1.msra.mxu0 0.0
        %3057 = vmatprep.subr.mxu0 0.0
        %3058 = vmatpush1.msra.mxu0 0.0
        %3059 = vmatprep.subr.mxu0 0.0
        %3060 = vmatpush1.msra.mxu0 0.0
        %3061 = vmatprep.subr.mxu0 0.0
        %3062 = vmatpush1.msra.mxu0 0.0
        %3063 = vmatprep.mubr.f32.mxu0 0.0
        %3064 = vmatmul.mubr.f32.gmra.mrb[0].mxu0 %v2926
        %v3065 = vpop.f32.mrb[0].mxu0
        %v3066 = vadd.f32 %v737, %v3065
        %v3067 = vpop.f32.mrb[0].mxu0
        %v3068 = vadd.f32 %v737, %v3067
        %3069 = vdwg.mxu0
        %vm3070 = vcmp.gt.f32.partialorder %v2995, 0.0
        %vm3071 = vcmp.gt.f32.partialorder %v2997, 0.0
        %vm3072 = vcmp.gt.f32.partialorder %v3066, 0.0
        %vm3073 = vcmp.gt.f32.partialorder %v3068, 0.0
        %v3074 = vmul.f32 %v741, %v2995
        %v3075 = vmul.f32 %v741, %v2997
        %v3076 = vmul.f32 %v741, %v3066
        %v3077 = vmul.f32 %v741, %v3068
        %v3078 = vsel %vm3070, %v2995, %v3074
        %v3079 = vsel %vm3071, %v2997, %v3075
        %v3080 = vsel %vm3072, %v3066, %v3076
        %v3081 = vsel %vm3073, %v3068, %v3077
        %3082 = vst [vmem:[%s700] sm:$0xff] %v3078
        %3083 = vst [vmem:[%s700 + $0x8] sm:$0xff] %v3079
        %3084 = vst [vmem:[%s700 + $0x10] sm:$0xff] %v3080
        %3085 = vst [vmem:[%s700 + $0x18] sm:$0xff] %v3081
        %v3086 = vmul.f32 %v1400, %v1038
        %v3087 = vmul.f32 %v1402, %v1040
        %v3088 = vmul.f32 %v1471, %v1109
        %v3089 = vmul.f32 %v1473, %v1111
        %v3090 = vmul.f32 %v1400, %v1542
        %v3091 = vmul.f32 %v1402, %v1544
        %v3092 = vmul.f32 %v1471, %v1613
        %v3093 = vmul.f32 %v1473, %v1615
        %v3094 = vmax.f32 %v3086, %v3090
        %v3095 = vmax.f32 %v3087, %v3091
        %v3096 = vmax.f32 %v3088, %v3092
        %v3097 = vmax.f32 %v3089, %v3093
        %v3098 = vsub.f32 %v3086, %v3094
        %v3099 = vsub.f32 %v3087, %v3095
        %v3100 = vsub.f32 %v3088, %v3096
        %v3101 = vsub.f32 %v3089, %v3097
        %v3102 = vmul.f32 %v3098, 1.442695
        %v3103 = vpow.pop %v3102
        %v3104 = vmul.f32 %v3099, 1.442695
        %v3105 = vpow.pop %v3104
        %v3106 = vmul.f32 %v3100, 1.442695
        %v3107 = vpow.pop %v3106
        %v3108 = vmul.f32 %v3101, 1.442695
        %v3109 = vpow.pop %v3108
        %v3110 = vsub.f32 %v3090, %v3094
        %v3111 = vsub.f32 %v3091, %v3095
        %v3112 = vsub.f32 %v3092, %v3096
        %v3113 = vsub.f32 %v3093, %v3097
        %v3114 = vmul.f32 %v3110, 1.442695
        %v3115 = vpow.pop %v3114
        %v3116 = vmul.f32 %v3111, 1.442695
        %v3117 = vpow.pop %v3116
        %v3118 = vmul.f32 %v3112, 1.442695
        %v3119 = vpow.pop %v3118
        %v3120 = vmul.f32 %v3113, 1.442695
        %v3121 = vpow.pop %v3120
        %v3122 = vadd.f32 %v3103, %v3115
        %v3123 = vadd.f32 %v3105, %v3117
        %v3124 = vadd.f32 %v3107, %v3119
        %v3125 = vadd.f32 %v3109, %v3121
        %v3126 = vmul.f32 %v1183, %v3103
        %v3127 = vmul.f32 %v1185, %v3105
        %v3128 = vmul.f32 %v1254, %v3107
        %v3129 = vmul.f32 %v1256, %v3109
        %v3130 = vmul.f32 %v3115, %v1684
        %v3131 = vmul.f32 %v3117, %v1686
        %v3132 = vmul.f32 %v3119, %v1755
        %v3133 = vmul.f32 %v3121, %v1757
        %v3134 = vadd.f32 %v3126, %v3130
        %v3135 = vadd.f32 %v3127, %v3131
        %v3136 = vadd.f32 %v3128, %v3132
        %v3137 = vadd.f32 %v3129, %v3133
        %v3138 = vmul.f32 %v1400, %v2043
        %v3139 = vmul.f32 %v1402, %v2045
        %v3140 = vmul.f32 %v1471, %v2114
        %v3141 = vmul.f32 %v1473, %v2116
        %v3142 = vmax.f32 %v3094, %v3138
        %v3143 = vmax.f32 %v3095, %v3139
        %v3144 = vmax.f32 %v3096, %v3140
        %v3145 = vmax.f32 %v3097, %v3141
        %v3146 = vsub.f32 %v3094, %v3142
        %v3147 = vsub.f32 %v3095, %v3143
        %v3148 = vsub.f32 %v3096, %v3144
        %v3149 = vsub.f32 %v3097, %v3145
        %v3150 = vmul.f32 %v3146, 1.442695
        %v3151 = vpow.pop %v3150
        %v3152 = vmul.f32 %v3147, 1.442695
        %v3153 = vpow.pop %v3152
        %v3154 = vmul.f32 %v3148, 1.442695
        %v3155 = vpow.pop %v3154
        %v3156 = vmul.f32 %v3149, 1.442695
        %v3157 = vpow.pop %v3156
        %v3158 = vsub.f32 %v3138, %v3142
        %v3159 = vsub.f32 %v3139, %v3143
        %v3160 = vsub.f32 %v3140, %v3144
        %v3161 = vsub.f32 %v3141, %v3145
        %v3162 = vmul.f32 %v3158, 1.442695
        %v3163 = vpow.pop %v3162
        %v3164 = vmul.f32 %v3159, 1.442695
        %v3165 = vpow.pop %v3164
        %v3166 = vmul.f32 %v3160, 1.442695
        %v3167 = vpow.pop %v3166
        %v3168 = vmul.f32 %v3161, 1.442695
        %v3169 = vpow.pop %v3168
        %v3170 = vmul.f32 %v3122, %v3151
        %v3171 = vmul.f32 %v3123, %v3153
        %v3172 = vmul.f32 %v3124, %v3155
        %v3173 = vmul.f32 %v3125, %v3157
        %v3174 = vadd.f32 %v3170, %v3163
        %v3175 = vadd.f32 %v3171, %v3165
        %v3176 = vadd.f32 %v3172, %v3167
        %v3177 = vadd.f32 %v3173, %v3169
        %v3178 = vmul.f32 %v3134, %v3151
        %v3179 = vmul.f32 %v3135, %v3153
        %v3180 = vmul.f32 %v3136, %v3155
        %v3181 = vmul.f32 %v3137, %v3157
        %v3182 = vmul.f32 %v3163, %v2185
        %v3183 = vmul.f32 %v3165, %v2187
        %v3184 = vmul.f32 %v3167, %v2256
        %v3185 = vmul.f32 %v3169, %v2258
        %v3186 = vadd.f32 %v3178, %v3182
        %v3187 = vadd.f32 %v3179, %v3183
        %v3188 = vadd.f32 %v3180, %v3184
        %v3189 = vadd.f32 %v3181, %v3185
        %v3190 = vmul.f32 %v1400, %v2544
        %v3191 = vmul.f32 %v1402, %v2546
        %v3192 = vmul.f32 %v1471, %v2615
        %v3193 = vmul.f32 %v1473, %v2617
        %v3194 = vmax.f32 %v3142, %v3190
        %v3195 = vmax.f32 %v3143, %v3191
        %v3196 = vmax.f32 %v3144, %v3192
        %v3197 = vmax.f32 %v3145, %v3193
        %v3198 = vsub.f32 %v3142, %v3194
        %v3199 = vsub.f32 %v3143, %v3195
        %v3200 = vsub.f32 %v3144, %v3196
        %v3201 = vsub.f32 %v3145, %v3197
        %v3202 = vmul.f32 %v3198, 1.442695
        %v3203 = vpow.pop %v3202
        %v3204 = vmul.f32 %v3199, 1.442695
        %v3205 = vpow.pop %v3204
        %v3206 = vmul.f32 %v3200, 1.442695
        %v3207 = vpow.pop %v3206
        %v3208 = vmul.f32 %v3201, 1.442695
        %v3209 = vpow.pop %v3208
        %v3210 = vsub.f32 %v3190, %v3194
        %v3211 = vsub.f32 %v3191, %v3195
        %v3212 = vsub.f32 %v3192, %v3196
        %v3213 = vsub.f32 %v3193, %v3197
        %v3214 = vmul.f32 %v3210, 1.442695
        %v3215 = vpow.pop %v3214
        %v3216 = vmul.f32 %v3211, 1.442695
        %v3217 = vpow.pop %v3216
        %v3218 = vmul.f32 %v3212, 1.442695
        %v3219 = vpow.pop %v3218
        %v3220 = vmul.f32 %v3213, 1.442695
        %v3221 = vpow.pop %v3220
        %v3222 = vmul.f32 %v3174, %v3203
        %v3223 = vmul.f32 %v3175, %v3205
        %v3224 = vmul.f32 %v3176, %v3207
        %v3225 = vmul.f32 %v3177, %v3209
        %v3226 = vadd.f32 %v3222, %v3215
        %v3227 = vadd.f32 %v3223, %v3217
        %v3228 = vadd.f32 %v3224, %v3219
        %v3229 = vadd.f32 %v3225, %v3221
        %v3230 = vmul.f32 %v3186, %v3203
        %v3231 = vmul.f32 %v3187, %v3205
        %v3232 = vmul.f32 %v3188, %v3207
        %v3233 = vmul.f32 %v3189, %v3209
        %v3234 = vmul.f32 %v3215, %v2686
        %v3235 = vmul.f32 %v3217, %v2688
        %v3236 = vmul.f32 %v3219, %v2757
        %v3237 = vmul.f32 %v3221, %v2759
        %v3238 = vadd.f32 %v3230, %v3234
        %v3239 = vadd.f32 %v3231, %v3235
        %v3240 = vadd.f32 %v3232, %v3236
        %v3241 = vadd.f32 %v3233, %v3237
        %v3242 = vrcp.pop %v3226
        %v3243 = vmul.f32 %v3238, %v3242
        %v3244 = vrcp.pop %v3227
        %v3245 = vmul.f32 %v3239, %v3244
        %v3246 = vrcp.pop %v3228
        %v3247 = vmul.f32 %v3240, %v3246
        %v3248 = vrcp.pop %v3229
        %v3249 = vmul.f32 %v3241, %v3248
        %3250 = vmatprep.subr.mxu0 %v3245
        %3251 = vmatpush1.msra.mxu0 %v3243
        %3252 = vmatprep.subr.mxu0 0.0
        %3253 = vmatpush1.msra.mxu0 0.0
        %3254 = vmatprep.subr.mxu0 0.0
        %3255 = vmatpush1.msra.mxu0 0.0
        %3256 = vmatprep.subr.mxu0 0.0
        %3257 = vmatpush1.msra.mxu0 0.0
        %3258 = vmatprep.subr.mxu0 0.0
        %3259 = vmatpush1.msra.mxu0 0.0
        %3260 = vmatprep.subr.mxu0 0.0
        %3261 = vmatpush1.msra.mxu0 0.0
        %3262 = vmatprep.subr.mxu0 0.0
        %3263 = vmatpush1.msra.mxu0 0.0
        %3264 = vmatprep.subr.mxu0 0.0
        %3265 = vmatpush1.msra.mxu0 0.0
        %3266 = vmatprep.subr.mxu0 0.0
        %3267 = vmatpush1.msra.mxu0 0.0
        %3268 = vmatprep.subr.mxu0 0.0
        %3269 = vmatpush1.msra.mxu0 0.0
        %3270 = vmatprep.subr.mxu0 0.0
        %3271 = vmatpush1.msra.mxu0 0.0
        %3272 = vmatprep.subr.mxu0 0.0
        %3273 = vmatpush1.msra.mxu0 0.0
        %3274 = vmatprep.subr.mxu0 0.0
        %3275 = vmatpush1.msra.mxu0 0.0
        %3276 = vmatprep.subr.mxu0 0.0
        %3277 = vmatpush1.msra.mxu0 0.0
        %3278 = vmatprep.subr.mxu0 0.0
        %3279 = vmatpush1.msra.mxu0 0.0
        %3280 = vmatprep.subr.mxu0 0.0
        %3281 = vmatpush1.msra.mxu0 0.0
        %3282 = vmatprep.subr.mxu0 0.0
        %3283 = vmatpush1.msra.mxu0 0.0
        %3284 = vmatprep.subr.mxu0 0.0
        %3285 = vmatpush1.msra.mxu0 0.0
        %3286 = vmatprep.subr.mxu0 0.0
        %3287 = vmatpush1.msra.mxu0 0.0
        %3288 = vmatprep.subr.mxu0 0.0
        %3289 = vmatpush1.msra.mxu0 0.0
        %3290 = vmatprep.subr.mxu0 0.0
        %3291 = vmatpush1.msra.mxu0 0.0
        %3292 = vmatprep.subr.mxu0 0.0
        %3293 = vmatpush1.msra.mxu0 0.0
        %3294 = vmatprep.subr.mxu0 0.0
        %3295 = vmatpush1.msra.mxu0 0.0
        %3296 = vmatprep.subr.mxu0 0.0
        %3297 = vmatpush1.msra.mxu0 0.0
        %3298 = vmatprep.subr.mxu0 0.0
        %3299 = vmatpush1.msra.mxu0 0.0
        %3300 = vmatprep.subr.mxu0 0.0
        %3301 = vmatpush1.msra.mxu0 0.0
        %3302 = vmatprep.subr.mxu0 0.0
        %3303 = vmatpush1.msra.mxu0 0.0
        %3304 = vmatprep.subr.mxu0 0.0
        %3305 = vmatpush1.msra.mxu0 0.0
        %3306 = vmatprep.subr.mxu0 0.0
        %3307 = vmatpush1.msra.mxu0 0.0
        %3308 = vmatprep.subr.mxu0 0.0
        %3309 = vmatpush1.msra.mxu0 0.0
        %3310 = vmatprep.subr.mxu0 0.0
        %3311 = vmatpush1.msra.mxu0 0.0
        %3312 = vmatprep.subr.mxu0 0.0
        %3313 = vmatpush1.msra.mxu0 0.0
        %3314 = vmatprep.mubr.f32.mxu0 0.0
        %3315 = vmatmul.mubr.f32.gmra.mrb[0].mxu0 %v2926
        %v3316 = vpop.f32.mrb[0].mxu0
        %v3317 = vadd.f32 %v737, %v3316
        %v3318 = vpop.f32.mrb[0].mxu0
        %v3319 = vadd.f32 %v737, %v3318
        %3320 = vdwg.mxu0
        %3321 = vmatprep.subr.mxu0 %v3249
        %3322 = vmatpush1.msra.mxu0 %v3247
        %3323 = vmatprep.subr.mxu0 0.0
        %3324 = vmatpush1.msra.mxu0 0.0
        %3325 = vmatprep.subr.mxu0 0.0
        %3326 = vmatpush1.msra.mxu0 0.0
        %3327 = vmatprep.subr.mxu0 0.0
        %3328 = vmatpush1.msra.mxu0 0.0
        %3329 = vmatprep.subr.mxu0 0.0
        %3330 = vmatpush1.msra.mxu0 0.0
        %3331 = vmatprep.subr.mxu0 0.0
        %3332 = vmatpush1.msra.mxu0 0.0
        %3333 = vmatprep.subr.mxu0 0.0
        %3334 = vmatpush1.msra.mxu0 0.0
        %3335 = vmatprep.subr.mxu0 0.0
        %3336 = vmatpush1.msra.mxu0 0.0
        %3337 = vmatprep.subr.mxu0 0.0
        %3338 = vmatpush1.msra.mxu0 0.0
        %3339 = vmatprep.subr.mxu0 0.0
        %3340 = vmatpush1.msra.mxu0 0.0
        %3341 = vmatprep.subr.mxu0 0.0
        %3342 = vmatpush1.msra.mxu0 0.0
        %3343 = vmatprep.subr.mxu0 0.0
        %3344 = vmatpush1.msra.mxu0 0.0
        %3345 = vmatprep.subr.mxu0 0.0
        %3346 = vmatpush1.msra.mxu0 0.0
        %3347 = vmatprep.subr.mxu0 0.0
        %3348 = vmatpush1.msra.mxu0 0.0
        %3349 = vmatprep.subr.mxu0 0.0
        %3350 = vmatpush1.msra.mxu0 0.0
        %3351 = vmatprep.subr.mxu0 0.0
        %3352 = vmatpush1.msra.mxu0 0.0
        %3353 = vmatprep.subr.mxu0 0.0
        %3354 = vmatpush1.msra.mxu0 0.0
        %3355 = vmatprep.subr.mxu0 0.0
        %3356 = vmatpush1.msra.mxu0 0.0
        %3357 = vmatprep.subr.mxu0 0.0
        %3358 = vmatpush1.msra.mxu0 0.0
        %3359 = vmatprep.subr.mxu0 0.0
        %3360 = vmatpush1.msra.mxu0 0.0
        %3361 = vmatprep.subr.mxu0 0.0
        %3362 = vmatpush1.msra.mxu0 0.0
        %3363 = vmatprep.subr.mxu0 0.0
        %3364 = vmatpush1.msra.mxu0 0.0
        %3365 = vmatprep.subr.mxu0 0.0
        %3366 = vmatpush1.msra.mxu0 0.0
        %3367 = vmatprep.subr.mxu0 0.0
        %3368 = vmatpush1.msra.mxu0 0.0
        %3369 = vmatprep.subr.mxu0 0.0
        %3370 = vmatpush1.msra.mxu0 0.0
        %3371 = vmatprep.subr.mxu0 0.0
        %3372 = vmatpush1.msra.mxu0 0.0
        %3373 = vmatprep.subr.mxu0 0.0
        %3374 = vmatpush1.msra.mxu0 0.0
        %3375 = vmatprep.subr.mxu0 0.0
        %3376 = vmatpush1.msra.mxu0 0.0
        %3377 = vmatprep.subr.mxu0 0.0
        %3378 = vmatpush1.msra.mxu0 0.0
        %3379 = vmatprep.subr.mxu0 0.0
        %3380 = vmatpush1.msra.mxu0 0.0
        %3381 = vmatprep.subr.mxu0 0.0
        %3382 = vmatpush1.msra.mxu0 0.0
        %3383 = vmatprep.subr.mxu0 0.0
        %3384 = vmatpush1.msra.mxu0 0.0
        %3385 = vmatprep.mubr.f32.mxu0 0.0
        %3386 = vmatmul.mubr.f32.gmra.mrb[0].mxu0 %v2926
        %v3387 = vpop.f32.mrb[0].mxu0
        %v3388 = vadd.f32 %v737, %v3387
        %v3389 = vpop.f32.mrb[0].mxu0
        %v3390 = vadd.f32 %v737, %v3389
        %3391 = vdwg.mxu0
        %vm3392 = vcmp.gt.f32.partialorder %v3317, 0.0
        %vm3393 = vcmp.gt.f32.partialorder %v3319, 0.0
        %vm3394 = vcmp.gt.f32.partialorder %v3388, 0.0
        %vm3395 = vcmp.gt.f32.partialorder %v3390, 0.0
        %v3396 = vmul.f32 %v741, %v3317
        %v3397 = vmul.f32 %v741, %v3319
        %v3398 = vmul.f32 %v741, %v3388
        %v3399 = vmul.f32 %v741, %v3390
        %v3400 = vsel %vm3392, %v3317, %v3396
        %v3401 = vsel %vm3393, %v3319, %v3397
        %v3402 = vsel %vm3394, %v3388, %v3398
        %v3403 = vsel %vm3395, %v3390, %v3399
        %s3404 = scalar_lea.vmem %s700, 32 [#allocation4]
        %3405 = vst [vmem:[%s3404] sm:$0xff] %v3400
        %3406 = vst [vmem:[%s3404 + $0x8] sm:$0xff] %v3401
        %3407 = vst [vmem:[%s3404 + $0x10] sm:$0xff] %v3402
        %3408 = vst [vmem:[%s3404 + $0x18] sm:$0xff] %v3403
        %v3409 = vmul.f32 %v1901, %v1038
        %v3410 = vmul.f32 %v1903, %v1040
        %v3411 = vmul.f32 %v1972, %v1109
        %v3412 = vmul.f32 %v1974, %v1111
        %v3413 = vmul.f32 %v1901, %v1542
        %v3414 = vmul.f32 %v1903, %v1544
        %v3415 = vmul.f32 %v1972, %v1613
        %v3416 = vmul.f32 %v1974, %v1615
        %v3417 = vmax.f32 %v3409, %v3413
        %v3418 = vmax.f32 %v3410, %v3414
        %v3419 = vmax.f32 %v3411, %v3415
        %v3420 = vmax.f32 %v3412, %v3416
        %v3421 = vsub.f32 %v3409, %v3417
        %v3422 = vsub.f32 %v3410, %v3418
        %v3423 = vsub.f32 %v3411, %v3419
        %v3424 = vsub.f32 %v3412, %v3420
        %v3425 = vmul.f32 %v3421, 1.442695
        %v3426 = vpow.pop %v3425
        %v3427 = vmul.f32 %v3422, 1.442695
        %v3428 = vpow.pop %v3427
        %v3429 = vmul.f32 %v3423, 1.442695
        %v3430 = vpow.pop %v3429
        %v3431 = vmul.f32 %v3424, 1.442695
        %v3432 = vpow.pop %v3431
        %v3433 = vsub.f32 %v3413, %v3417
        %v3434 = vsub.f32 %v3414, %v3418
        %v3435 = vsub.f32 %v3415, %v3419
        %v3436 = vsub.f32 %v3416, %v3420
        %v3437 = vmul.f32 %v3433, 1.442695
        %v3438 = vpow.pop %v3437
        %v3439 = vmul.f32 %v3434, 1.442695
        %v3440 = vpow.pop %v3439
        %v3441 = vmul.f32 %v3435, 1.442695
        %v3442 = vpow.pop %v3441
        %v3443 = vmul.f32 %v3436, 1.442695
        %v3444 = vpow.pop %v3443
        %v3445 = vadd.f32 %v3426, %v3438
        %v3446 = vadd.f32 %v3428, %v3440
        %v3447 = vadd.f32 %v3430, %v3442
        %v3448 = vadd.f32 %v3432, %v3444
        %v3449 = vmul.f32 %v1183, %v3426
        %v3450 = vmul.f32 %v1185, %v3428
        %v3451 = vmul.f32 %v1254, %v3430
        %v3452 = vmul.f32 %v1256, %v3432
        %v3453 = vmul.f32 %v3438, %v1684
        %v3454 = vmul.f32 %v3440, %v1686
        %v3455 = vmul.f32 %v3442, %v1755
        %v3456 = vmul.f32 %v3444, %v1757
        %v3457 = vadd.f32 %v3449, %v3453
        %v3458 = vadd.f32 %v3450, %v3454
        %v3459 = vadd.f32 %v3451, %v3455
        %v3460 = vadd.f32 %v3452, %v3456
        %v3461 = vmul.f32 %v1901, %v2043
        %v3462 = vmul.f32 %v1903, %v2045
        %v3463 = vmul.f32 %v1972, %v2114
        %v3464 = vmul.f32 %v1974, %v2116
        %v3465 = vmax.f32 %v3417, %v3461
        %v3466 = vmax.f32 %v3418, %v3462
        %v3467 = vmax.f32 %v3419, %v3463
        %v3468 = vmax.f32 %v3420, %v3464
        %v3469 = vsub.f32 %v3417, %v3465
        %v3470 = vsub.f32 %v3418, %v3466
        %v3471 = vsub.f32 %v3419, %v3467
        %v3472 = vsub.f32 %v3420, %v3468
        %v3473 = vmul.f32 %v3469, 1.442695
        %v3474 = vpow.pop %v3473
        %v3475 = vmul.f32 %v3470, 1.442695
        %v3476 = vpow.pop %v3475
        %v3477 = vmul.f32 %v3471, 1.442695
        %v3478 = vpow.pop %v3477
        %v3479 = vmul.f32 %v3472, 1.442695
        %v3480 = vpow.pop %v3479
        %v3481 = vsub.f32 %v3461, %v3465
        %v3482 = vsub.f32 %v3462, %v3466
        %v3483 = vsub.f32 %v3463, %v3467
        %v3484 = vsub.f32 %v3464, %v3468
        %v3485 = vmul.f32 %v3481, 1.442695
        %v3486 = vpow.pop %v3485
        %v3487 = vmul.f32 %v3482, 1.442695
        %v3488 = vpow.pop %v3487
        %v3489 = vmul.f32 %v3483, 1.442695
        %v3490 = vpow.pop %v3489
        %v3491 = vmul.f32 %v3484, 1.442695
        %v3492 = vpow.pop %v3491
        %v3493 = vmul.f32 %v3445, %v3474
        %v3494 = vmul.f32 %v3446, %v3476
        %v3495 = vmul.f32 %v3447, %v3478
        %v3496 = vmul.f32 %v3448, %v3480
        %v3497 = vadd.f32 %v3493, %v3486
        %v3498 = vadd.f32 %v3494, %v3488
        %v3499 = vadd.f32 %v3495, %v3490
        %v3500 = vadd.f32 %v3496, %v3492
        %v3501 = vmul.f32 %v3457, %v3474
        %v3502 = vmul.f32 %v3458, %v3476
        %v3503 = vmul.f32 %v3459, %v3478
        %v3504 = vmul.f32 %v3460, %v3480
        %v3505 = vmul.f32 %v3486, %v2185
        %v3506 = vmul.f32 %v3488, %v2187
        %v3507 = vmul.f32 %v3490, %v2256
        %v3508 = vmul.f32 %v3492, %v2258
        %v3509 = vadd.f32 %v3501, %v3505
        %v3510 = vadd.f32 %v3502, %v3506
        %v3511 = vadd.f32 %v3503, %v3507
        %v3512 = vadd.f32 %v3504, %v3508
        %v3513 = vmul.f32 %v1901, %v2544
        %v3514 = vmul.f32 %v1903, %v2546
        %v3515 = vmul.f32 %v1972, %v2615
        %v3516 = vmul.f32 %v1974, %v2617
        %v3517 = vmax.f32 %v3465, %v3513
        %v3518 = vmax.f32 %v3466, %v3514
        %v3519 = vmax.f32 %v3467, %v3515
        %v3520 = vmax.f32 %v3468, %v3516
        %v3521 = vsub.f32 %v3465, %v3517
        %v3522 = vsub.f32 %v3466, %v3518
        %v3523 = vsub.f32 %v3467, %v3519
        %v3524 = vsub.f32 %v3468, %v3520
        %v3525 = vmul.f32 %v3521, 1.442695
        %v3526 = vpow.pop %v3525
        %v3527 = vmul.f32 %v3522, 1.442695
        %v3528 = vpow.pop %v3527
        %v3529 = vmul.f32 %v3523, 1.442695
        %v3530 = vpow.pop %v3529
        %v3531 = vmul.f32 %v3524, 1.442695
        %v3532 = vpow.pop %v3531
        %v3533 = vsub.f32 %v3513, %v3517
        %v3534 = vsub.f32 %v3514, %v3518
        %v3535 = vsub.f32 %v3515, %v3519
        %v3536 = vsub.f32 %v3516, %v3520
        %v3537 = vmul.f32 %v3533, 1.442695
        %v3538 = vpow.pop %v3537
        %v3539 = vmul.f32 %v3534, 1.442695
        %v3540 = vpow.pop %v3539
        %v3541 = vmul.f32 %v3535, 1.442695
        %v3542 = vpow.pop %v3541
        %v3543 = vmul.f32 %v3536, 1.442695
        %v3544 = vpow.pop %v3543
        %v3545 = vmul.f32 %v3497, %v3526
        %v3546 = vmul.f32 %v3498, %v3528
        %v3547 = vmul.f32 %v3499, %v3530
        %v3548 = vmul.f32 %v3500, %v3532
        %v3549 = vadd.f32 %v3545, %v3538
        %v3550 = vadd.f32 %v3546, %v3540
        %v3551 = vadd.f32 %v3547, %v3542
        %v3552 = vadd.f32 %v3548, %v3544
        %v3553 = vmul.f32 %v3509, %v3526
        %v3554 = vmul.f32 %v3510, %v3528
        %v3555 = vmul.f32 %v3511, %v3530
        %v3556 = vmul.f32 %v3512, %v3532
        %v3557 = vmul.f32 %v3538, %v2686
        %v3558 = vmul.f32 %v3540, %v2688
        %v3559 = vmul.f32 %v3542, %v2757
        %v3560 = vmul.f32 %v3544, %v2759
        %v3561 = vadd.f32 %v3553, %v3557
        %v3562 = vadd.f32 %v3554, %v3558
        %v3563 = vadd.f32 %v3555, %v3559
        %v3564 = vadd.f32 %v3556, %v3560
        %v3565 = vrcp.pop %v3549
        %v3566 = vmul.f32 %v3561, %v3565
        %v3567 = vrcp.pop %v3550
        %v3568 = vmul.f32 %v3562, %v3567
        %v3569 = vrcp.pop %v3551
        %v3570 = vmul.f32 %v3563, %v3569
        %v3571 = vrcp.pop %v3552
        %v3572 = vmul.f32 %v3564, %v3571
        %3573 = vmatprep.subr.mxu0 %v3568
        %3574 = vmatpush1.msra.mxu0 %v3566
        %3575 = vmatprep.subr.mxu0 0.0
        %3576 = vmatpush1.msra.mxu0 0.0
        %3577 = vmatprep.subr.mxu0 0.0
        %3578 = vmatpush1.msra.mxu0 0.0
        %3579 = vmatprep.subr.mxu0 0.0
        %3580 = vmatpush1.msra.mxu0 0.0
        %3581 = vmatprep.subr.mxu0 0.0
        %3582 = vmatpush1.msra.mxu0 0.0
        %3583 = vmatprep.subr.mxu0 0.0
        %3584 = vmatpush1.msra.mxu0 0.0
        %3585 = vmatprep.subr.mxu0 0.0
        %3586 = vmatpush1.msra.mxu0 0.0
        %3587 = vmatprep.subr.mxu0 0.0
        %3588 = vmatpush1.msra.mxu0 0.0
        %3589 = vmatprep.subr.mxu0 0.0
        %3590 = vmatpush1.msra.mxu0 0.0
        %3591 = vmatprep.subr.mxu0 0.0
        %3592 = vmatpush1.msra.mxu0 0.0
        %3593 = vmatprep.subr.mxu0 0.0
        %3594 = vmatpush1.msra.mxu0 0.0
        %3595 = vmatprep.subr.mxu0 0.0
        %3596 = vmatpush1.msra.mxu0 0.0
        %3597 = vmatprep.subr.mxu0 0.0
        %3598 = vmatpush1.msra.mxu0 0.0
        %3599 = vmatprep.subr.mxu0 0.0
        %3600 = vmatpush1.msra.mxu0 0.0
        %3601 = vmatprep.subr.mxu0 0.0
        %3602 = vmatpush1.msra.mxu0 0.0
        %3603 = vmatprep.subr.mxu0 0.0
        %3604 = vmatpush1.msra.mxu0 0.0
        %3605 = vmatprep.subr.mxu0 0.0
        %3606 = vmatpush1.msra.mxu0 0.0
        %3607 = vmatprep.subr.mxu0 0.0
        %3608 = vmatpush1.msra.mxu0 0.0
        %3609 = vmatprep.subr.mxu0 0.0
        %3610 = vmatpush1.msra.mxu0 0.0
        %3611 = vmatprep.subr.mxu0 0.0
        %3612 = vmatpush1.msra.mxu0 0.0
        %3613 = vmatprep.subr.mxu0 0.0
        %3614 = vmatpush1.msra.mxu0 0.0
        %3615 = vmatprep.subr.mxu0 0.0
        %3616 = vmatpush1.msra.mxu0 0.0
        %3617 = vmatprep.subr.mxu0 0.0
        %3618 = vmatpush1.msra.mxu0 0.0
        %3619 = vmatprep.subr.mxu0 0.0
        %3620 = vmatpush1.msra.mxu0 0.0
        %3621 = vmatprep.subr.mxu0 0.0
        %3622 = vmatpush1.msra.mxu0 0.0
        %3623 = vmatprep.subr.mxu0 0.0
        %3624 = vmatpush1.msra.mxu0 0.0
        %3625 = vmatprep.subr.mxu0 0.0
        %3626 = vmatpush1.msra.mxu0 0.0
        %3627 = vmatprep.subr.mxu0 0.0
        %3628 = vmatpush1.msra.mxu0 0.0
        %3629 = vmatprep.subr.mxu0 0.0
        %3630 = vmatpush1.msra.mxu0 0.0
        %3631 = vmatprep.subr.mxu0 0.0
        %3632 = vmatpush1.msra.mxu0 0.0
        %3633 = vmatprep.subr.mxu0 0.0
        %3634 = vmatpush1.msra.mxu0 0.0
        %3635 = vmatprep.subr.mxu0 0.0
        %3636 = vmatpush1.msra.mxu0 0.0
        %3637 = vmatprep.mubr.f32.mxu0 0.0
        %3638 = vmatmul.mubr.f32.gmra.mrb[0].mxu0 %v2926
        %v3639 = vpop.f32.mrb[0].mxu0
        %v3640 = vadd.f32 %v737, %v3639
        %v3641 = vpop.f32.mrb[0].mxu0
        %v3642 = vadd.f32 %v737, %v3641
        %3643 = vdwg.mxu0
        %3644 = vmatprep.subr.mxu0 %v3572
        %3645 = vmatpush1.msra.mxu0 %v3570
        %3646 = vmatprep.subr.mxu0 0.0
        %3647 = vmatpush1.msra.mxu0 0.0
        %3648 = vmatprep.subr.mxu0 0.0
        %3649 = vmatpush1.msra.mxu0 0.0
        %3650 = vmatprep.subr.mxu0 0.0
        %3651 = vmatpush1.msra.mxu0 0.0
        %3652 = vmatprep.subr.mxu0 0.0
        %3653 = vmatpush1.msra.mxu0 0.0
        %3654 = vmatprep.subr.mxu0 0.0
        %3655 = vmatpush1.msra.mxu0 0.0
        %3656 = vmatprep.subr.mxu0 0.0
        %3657 = vmatpush1.msra.mxu0 0.0
        %3658 = vmatprep.subr.mxu0 0.0
        %3659 = vmatpush1.msra.mxu0 0.0
        %3660 = vmatprep.subr.mxu0 0.0
        %3661 = vmatpush1.msra.mxu0 0.0
        %3662 = vmatprep.subr.mxu0 0.0
        %3663 = vmatpush1.msra.mxu0 0.0
        %3664 = vmatprep.subr.mxu0 0.0
        %3665 = vmatpush1.msra.mxu0 0.0
        %3666 = vmatprep.subr.mxu0 0.0
        %3667 = vmatpush1.msra.mxu0 0.0
        %3668 = vmatprep.subr.mxu0 0.0
        %3669 = vmatpush1.msra.mxu0 0.0
        %3670 = vmatprep.subr.mxu0 0.0
        %3671 = vmatpush1.msra.mxu0 0.0
        %3672 = vmatprep.subr.mxu0 0.0
        %3673 = vmatpush1.msra.mxu0 0.0
        %3674 = vmatprep.subr.mxu0 0.0
        %3675 = vmatpush1.msra.mxu0 0.0
        %3676 = vmatprep.subr.mxu0 0.0
        %3677 = vmatpush1.msra.mxu0 0.0
        %3678 = vmatprep.subr.mxu0 0.0
        %3679 = vmatpush1.msra.mxu0 0.0
        %3680 = vmatprep.subr.mxu0 0.0
        %3681 = vmatpush1.msra.mxu0 0.0
        %3682 = vmatprep.subr.mxu0 0.0
        %3683 = vmatpush1.msra.mxu0 0.0
        %3684 = vmatprep.subr.mxu0 0.0
        %3685 = vmatpush1.msra.mxu0 0.0
        %3686 = vmatprep.subr.mxu0 0.0
        %3687 = vmatpush1.msra.mxu0 0.0
        %3688 = vmatprep.subr.mxu0 0.0
        %3689 = vmatpush1.msra.mxu0 0.0
        %3690 = vmatprep.subr.mxu0 0.0
        %3691 = vmatpush1.msra.mxu0 0.0
        %3692 = vmatprep.subr.mxu0 0.0
        %3693 = vmatpush1.msra.mxu0 0.0
        %3694 = vmatprep.subr.mxu0 0.0
        %3695 = vmatpush1.msra.mxu0 0.0
        %3696 = vmatprep.subr.mxu0 0.0
        %3697 = vmatpush1.msra.mxu0 0.0
        %3698 = vmatprep.subr.mxu0 0.0
        %3699 = vmatpush1.msra.mxu0 0.0
        %3700 = vmatprep.subr.mxu0 0.0
        %3701 = vmatpush1.msra.mxu0 0.0
        %3702 = vmatprep.subr.mxu0 0.0
        %3703 = vmatpush1.msra.mxu0 0.0
        %3704 = vmatprep.subr.mxu0 0.0
        %3705 = vmatpush1.msra.mxu0 0.0
        %3706 = vmatprep.subr.mxu0 0.0
        %3707 = vmatpush1.msra.mxu0 0.0
        %3708 = vmatprep.mubr.f32.mxu0 0.0
        %3709 = vmatmul.mubr.f32.gmra.mrb[0].mxu0 %v2926
        %v3710 = vpop.f32.mrb[0].mxu0
        %v3711 = vadd.f32 %v737, %v3710
        %v3712 = vpop.f32.mrb[0].mxu0
        %v3713 = vadd.f32 %v737, %v3712
        %3714 = vdwg.mxu0
        %vm3715 = vcmp.gt.f32.partialorder %v3640, 0.0
        %vm3716 = vcmp.gt.f32.partialorder %v3642, 0.0
        %vm3717 = vcmp.gt.f32.partialorder %v3711, 0.0
        %vm3718 = vcmp.gt.f32.partialorder %v3713, 0.0
        %v3719 = vmul.f32 %v741, %v3640
        %v3720 = vmul.f32 %v741, %v3642
        %v3721 = vmul.f32 %v741, %v3711
        %v3722 = vmul.f32 %v741, %v3713
        %v3723 = vsel %vm3715, %v3640, %v3719
        %v3724 = vsel %vm3716, %v3642, %v3720
        %v3725 = vsel %vm3717, %v3711, %v3721
        %v3726 = vsel %vm3718, %v3713, %v3722
        %s3727 = scalar_lea.vmem %s700, 64 [#allocation4]
        %3728 = vst [vmem:[%s3727] sm:$0xff] %v3723
        %3729 = vst [vmem:[%s3727 + $0x8] sm:$0xff] %v3724
        %3730 = vst [vmem:[%s3727 + $0x10] sm:$0xff] %v3725
        %3731 = vst [vmem:[%s3727 + $0x18] sm:$0xff] %v3726
        %v3732 = vmul.f32 %v2402, %v1038
        %v3733 = vmul.f32 %v2404, %v1040
        %v3734 = vmul.f32 %v2473, %v1109
        %v3735 = vmul.f32 %v2475, %v1111
        %v3736 = vmul.f32 %v2402, %v1542
        %v3737 = vmul.f32 %v2404, %v1544
        %v3738 = vmul.f32 %v2473, %v1613
        %v3739 = vmul.f32 %v2475, %v1615
        %v3740 = vmax.f32 %v3732, %v3736
        %v3741 = vmax.f32 %v3733, %v3737
        %v3742 = vmax.f32 %v3734, %v3738
        %v3743 = vmax.f32 %v3735, %v3739
        %v3744 = vsub.f32 %v3732, %v3740
        %v3745 = vsub.f32 %v3733, %v3741
        %v3746 = vsub.f32 %v3734, %v3742
        %v3747 = vsub.f32 %v3735, %v3743
        %v3748 = vmul.f32 %v3744, 1.442695
        %v3749 = vpow.pop %v3748
        %v3750 = vmul.f32 %v3745, 1.442695
        %v3751 = vpow.pop %v3750
        %v3752 = vmul.f32 %v3746, 1.442695
        %v3753 = vpow.pop %v3752
        %v3754 = vmul.f32 %v3747, 1.442695
        %v3755 = vpow.pop %v3754
        %v3756 = vsub.f32 %v3736, %v3740
        %v3757 = vsub.f32 %v3737, %v3741
        %v3758 = vsub.f32 %v3738, %v3742
        %v3759 = vsub.f32 %v3739, %v3743
        %v3760 = vmul.f32 %v3756, 1.442695
        %v3761 = vpow.pop %v3760
        %v3762 = vmul.f32 %v3757, 1.442695
        %v3763 = vpow.pop %v3762
        %v3764 = vmul.f32 %v3758, 1.442695
        %v3765 = vpow.pop %v3764
        %v3766 = vmul.f32 %v3759, 1.442695
        %v3767 = vpow.pop %v3766
        %v3768 = vadd.f32 %v3749, %v3761
        %v3769 = vadd.f32 %v3751, %v3763
        %v3770 = vadd.f32 %v3753, %v3765
        %v3771 = vadd.f32 %v3755, %v3767
        %v3772 = vmul.f32 %v1183, %v3749
        %v3773 = vmul.f32 %v1185, %v3751
        %v3774 = vmul.f32 %v1254, %v3753
        %v3775 = vmul.f32 %v1256, %v3755
        %v3776 = vmul.f32 %v3761, %v1684
        %v3777 = vmul.f32 %v3763, %v1686
        %v3778 = vmul.f32 %v3765, %v1755
        %v3779 = vmul.f32 %v3767, %v1757
        %v3780 = vadd.f32 %v3772, %v3776
        %v3781 = vadd.f32 %v3773, %v3777
        %v3782 = vadd.f32 %v3774, %v3778
        %v3783 = vadd.f32 %v3775, %v3779
        %v3784 = vmul.f32 %v2402, %v2043
        %v3785 = vmul.f32 %v2404, %v2045
        %v3786 = vmul.f32 %v2473, %v2114
        %v3787 = vmul.f32 %v2475, %v2116
        %v3788 = vmax.f32 %v3740, %v3784
        %v3789 = vmax.f32 %v3741, %v3785
        %v3790 = vmax.f32 %v3742, %v3786
        %v3791 = vmax.f32 %v3743, %v3787
        %v3792 = vsub.f32 %v3740, %v3788
        %v3793 = vsub.f32 %v3741, %v3789
        %v3794 = vsub.f32 %v3742, %v3790
        %v3795 = vsub.f32 %v3743, %v3791
        %v3796 = vmul.f32 %v3792, 1.442695
        %v3797 = vpow.pop %v3796
        %v3798 = vmul.f32 %v3793, 1.442695
        %v3799 = vpow.pop %v3798
        %v3800 = vmul.f32 %v3794, 1.442695
        %v3801 = vpow.pop %v3800
        %v3802 = vmul.f32 %v3795, 1.442695
        %v3803 = vpow.pop %v3802
        %v3804 = vsub.f32 %v3784, %v3788
        %v3805 = vsub.f32 %v3785, %v3789
        %v3806 = vsub.f32 %v3786, %v3790
        %v3807 = vsub.f32 %v3787, %v3791
        %v3808 = vmul.f32 %v3804, 1.442695
        %v3809 = vpow.pop %v3808
        %v3810 = vmul.f32 %v3805, 1.442695
        %v3811 = vpow.pop %v3810
        %v3812 = vmul.f32 %v3806, 1.442695
        %v3813 = vpow.pop %v3812
        %v3814 = vmul.f32 %v3807, 1.442695
        %v3815 = vpow.pop %v3814
        %v3816 = vmul.f32 %v3768, %v3797
        %v3817 = vmul.f32 %v3769, %v3799
        %v3818 = vmul.f32 %v3770, %v3801
        %v3819 = vmul.f32 %v3771, %v3803
        %v3820 = vadd.f32 %v3816, %v3809
        %v3821 = vadd.f32 %v3817, %v3811
        %v3822 = vadd.f32 %v3818, %v3813
        %v3823 = vadd.f32 %v3819, %v3815
        %v3824 = vmul.f32 %v3780, %v3797
        %v3825 = vmul.f32 %v3781, %v3799
        %v3826 = vmul.f32 %v3782, %v3801
        %v3827 = vmul.f32 %v3783, %v3803
        %v3828 = vmul.f32 %v3809, %v2185
        %v3829 = vmul.f32 %v3811, %v2187
        %v3830 = vmul.f32 %v3813, %v2256
        %v3831 = vmul.f32 %v3815, %v2258
        %v3832 = vadd.f32 %v3824, %v3828
        %v3833 = vadd.f32 %v3825, %v3829
        %v3834 = vadd.f32 %v3826, %v3830
        %v3835 = vadd.f32 %v3827, %v3831
        %v3836 = vmul.f32 %v2402, %v2544
        %v3837 = vmul.f32 %v2404, %v2546
        %v3838 = vmul.f32 %v2473, %v2615
        %v3839 = vmul.f32 %v2475, %v2617
        %v3840 = vmax.f32 %v3788, %v3836
        %v3841 = vmax.f32 %v3789, %v3837
        %v3842 = vmax.f32 %v3790, %v3838
        %v3843 = vmax.f32 %v3791, %v3839
        %v3844 = vsub.f32 %v3788, %v3840
        %v3845 = vsub.f32 %v3789, %v3841
        %v3846 = vsub.f32 %v3790, %v3842
        %v3847 = vsub.f32 %v3791, %v3843
        %v3848 = vmul.f32 %v3844, 1.442695
        %v3849 = vpow.pop %v3848
        %v3850 = vmul.f32 %v3845, 1.442695
        %v3851 = vpow.pop %v3850
        %v3852 = vmul.f32 %v3846, 1.442695
        %v3853 = vpow.pop %v3852
        %v3854 = vmul.f32 %v3847, 1.442695
        %v3855 = vpow.pop %v3854
        %v3856 = vsub.f32 %v3836, %v3840
        %v3857 = vsub.f32 %v3837, %v3841
        %v3858 = vsub.f32 %v3838, %v3842
        %v3859 = vsub.f32 %v3839, %v3843
        %v3860 = vmul.f32 %v3856, 1.442695
        %v3861 = vpow.pop %v3860
        %v3862 = vmul.f32 %v3857, 1.442695
        %v3863 = vpow.pop %v3862
        %v3864 = vmul.f32 %v3858, 1.442695
        %v3865 = vpow.pop %v3864
        %v3866 = vmul.f32 %v3859, 1.442695
        %v3867 = vpow.pop %v3866
        %v3868 = vmul.f32 %v3820, %v3849
        %v3869 = vmul.f32 %v3821, %v3851
        %v3870 = vmul.f32 %v3822, %v3853
        %v3871 = vmul.f32 %v3823, %v3855
        %v3872 = vadd.f32 %v3868, %v3861
        %v3873 = vadd.f32 %v3869, %v3863
        %v3874 = vadd.f32 %v3870, %v3865
        %v3875 = vadd.f32 %v3871, %v3867
        %v3876 = vmul.f32 %v3832, %v3849
        %v3877 = vmul.f32 %v3833, %v3851
        %v3878 = vmul.f32 %v3834, %v3853
        %v3879 = vmul.f32 %v3835, %v3855
        %v3880 = vmul.f32 %v3861, %v2686
        %v3881 = vmul.f32 %v3863, %v2688
        %v3882 = vmul.f32 %v3865, %v2757
        %v3883 = vmul.f32 %v3867, %v2759
        %v3884 = vadd.f32 %v3876, %v3880
        %v3885 = vadd.f32 %v3877, %v3881
        %v3886 = vadd.f32 %v3878, %v3882
        %v3887 = vadd.f32 %v3879, %v3883
        %v3888 = vrcp.pop %v3872
        %v3889 = vmul.f32 %v3884, %v3888
        %v3890 = vrcp.pop %v3873
        %v3891 = vmul.f32 %v3885, %v3890
        %v3892 = vrcp.pop %v3874
        %v3893 = vmul.f32 %v3886, %v3892
        %v3894 = vrcp.pop %v3875
        %v3895 = vmul.f32 %v3887, %v3894
        %3896 = vmatprep.subr.mxu0 %v3891
        %3897 = vmatpush1.msra.mxu0 %v3889
        %3898 = vmatprep.subr.mxu0 0.0
        %3899 = vmatpush1.msra.mxu0 0.0
        %3900 = vmatprep.subr.mxu0 0.0
        %3901 = vmatpush1.msra.mxu0 0.0
        %3902 = vmatprep.subr.mxu0 0.0
        %3903 = vmatpush1.msra.mxu0 0.0
        %3904 = vmatprep.subr.mxu0 0.0
        %3905 = vmatpush1.msra.mxu0 0.0
        %3906 = vmatprep.subr.mxu0 0.0
        %3907 = vmatpush1.msra.mxu0 0.0
        %3908 = vmatprep.subr.mxu0 0.0
        %3909 = vmatpush1.msra.mxu0 0.0
        %3910 = vmatprep.subr.mxu0 0.0
        %3911 = vmatpush1.msra.mxu0 0.0
        %3912 = vmatprep.subr.mxu0 0.0
        %3913 = vmatpush1.msra.mxu0 0.0
        %3914 = vmatprep.subr.mxu0 0.0
        %3915 = vmatpush1.msra.mxu0 0.0
        %3916 = vmatprep.subr.mxu0 0.0
        %3917 = vmatpush1.msra.mxu0 0.0
        %3918 = vmatprep.subr.mxu0 0.0
        %3919 = vmatpush1.msra.mxu0 0.0
        %3920 = vmatprep.subr.mxu0 0.0
        %3921 = vmatpush1.msra.mxu0 0.0
        %3922 = vmatprep.subr.mxu0 0.0
        %3923 = vmatpush1.msra.mxu0 0.0
        %3924 = vmatprep.subr.mxu0 0.0
        %3925 = vmatpush1.msra.mxu0 0.0
        %3926 = vmatprep.subr.mxu0 0.0
        %3927 = vmatpush1.msra.mxu0 0.0
        %3928 = vmatprep.subr.mxu0 0.0
        %3929 = vmatpush1.msra.mxu0 0.0
        %3930 = vmatprep.subr.mxu0 0.0
        %3931 = vmatpush1.msra.mxu0 0.0
        %3932 = vmatprep.subr.mxu0 0.0
        %3933 = vmatpush1.msra.mxu0 0.0
        %3934 = vmatprep.subr.mxu0 0.0
        %3935 = vmatpush1.msra.mxu0 0.0
        %3936 = vmatprep.subr.mxu0 0.0
        %3937 = vmatpush1.msra.mxu0 0.0
        %3938 = vmatprep.subr.mxu0 0.0
        %3939 = vmatpush1.msra.mxu0 0.0
        %3940 = vmatprep.subr.mxu0 0.0
        %3941 = vmatpush1.msra.mxu0 0.0
        %3942 = vmatprep.subr.mxu0 0.0
        %3943 = vmatpush1.msra.mxu0 0.0
        %3944 = vmatprep.subr.mxu0 0.0
        %3945 = vmatpush1.msra.mxu0 0.0
        %3946 = vmatprep.subr.mxu0 0.0
        %3947 = vmatpush1.msra.mxu0 0.0
        %3948 = vmatprep.subr.mxu0 0.0
        %3949 = vmatpush1.msra.mxu0 0.0
        %3950 = vmatprep.subr.mxu0 0.0
        %3951 = vmatpush1.msra.mxu0 0.0
        %3952 = vmatprep.subr.mxu0 0.0
        %3953 = vmatpush1.msra.mxu0 0.0
        %3954 = vmatprep.subr.mxu0 0.0
        %3955 = vmatpush1.msra.mxu0 0.0
        %3956 = vmatprep.subr.mxu0 0.0
        %3957 = vmatpush1.msra.mxu0 0.0
        %3958 = vmatprep.subr.mxu0 0.0
        %3959 = vmatpush1.msra.mxu0 0.0
        %3960 = vmatprep.mubr.f32.mxu0 0.0
        %3961 = vmatmul.mubr.f32.gmra.mrb[0].mxu0 %v2926
        %v3962 = vpop.f32.mrb[0].mxu0
        %v3963 = vadd.f32 %v737, %v3962
        %v3964 = vpop.f32.mrb[0].mxu0
        %v3965 = vadd.f32 %v737, %v3964
        %3966 = vdwg.mxu0
        %3967 = vmatprep.subr.mxu0 %v3895
        %3968 = vmatpush1.msra.mxu0 %v3893
        %3969 = vmatprep.subr.mxu0 0.0
        %3970 = vmatpush1.msra.mxu0 0.0
        %3971 = vmatprep.subr.mxu0 0.0
        %3972 = vmatpush1.msra.mxu0 0.0
        %3973 = vmatprep.subr.mxu0 0.0
        %3974 = vmatpush1.msra.mxu0 0.0
        %3975 = vmatprep.subr.mxu0 0.0
        %3976 = vmatpush1.msra.mxu0 0.0
        %3977 = vmatprep.subr.mxu0 0.0
        %3978 = vmatpush1.msra.mxu0 0.0
        %3979 = vmatprep.subr.mxu0 0.0
        %3980 = vmatpush1.msra.mxu0 0.0
        %3981 = vmatprep.subr.mxu0 0.0
        %3982 = vmatpush1.msra.mxu0 0.0
        %3983 = vmatprep.subr.mxu0 0.0
        %3984 = vmatpush1.msra.mxu0 0.0
        %3985 = vmatprep.subr.mxu0 0.0
        %3986 = vmatpush1.msra.mxu0 0.0
        %3987 = vmatprep.subr.mxu0 0.0
        %3988 = vmatpush1.msra.mxu0 0.0
        %3989 = vmatprep.subr.mxu0 0.0
        %3990 = vmatpush1.msra.mxu0 0.0
        %3991 = vmatprep.subr.mxu0 0.0
        %3992 = vmatpush1.msra.mxu0 0.0
        %3993 = vmatprep.subr.mxu0 0.0
        %3994 = vmatpush1.msra.mxu0 0.0
        %3995 = vmatprep.subr.mxu0 0.0
        %3996 = vmatpush1.msra.mxu0 0.0
        %3997 = vmatprep.subr.mxu0 0.0
        %3998 = vmatpush1.msra.mxu0 0.0
        %3999 = vmatprep.subr.mxu0 0.0
        %4000 = vmatpush1.msra.mxu0 0.0
        %4001 = vmatprep.subr.mxu0 0.0
        %4002 = vmatpush1.msra.mxu0 0.0
        %4003 = vmatprep.subr.mxu0 0.0
        %4004 = vmatpush1.msra.mxu0 0.0
        %4005 = vmatprep.subr.mxu0 0.0
        %4006 = vmatpush1.msra.mxu0 0.0
        %4007 = vmatprep.subr.mxu0 0.0
        %4008 = vmatpush1.msra.mxu0 0.0
        %4009 = vmatprep.subr.mxu0 0.0
        %4010 = vmatpush1.msra.mxu0 0.0
        %4011 = vmatprep.subr.mxu0 0.0
        %4012 = vmatpush1.msra.mxu0 0.0
        %4013 = vmatprep.subr.mxu0 0.0
        %4014 = vmatpush1.msra.mxu0 0.0
        %4015 = vmatprep.subr.mxu0 0.0
        %4016 = vmatpush1.msra.mxu0 0.0
        %4017 = vmatprep.subr.mxu0 0.0
        %4018 = vmatpush1.msra.mxu0 0.0
        %4019 = vmatprep.subr.mxu0 0.0
        %4020 = vmatpush1.msra.mxu0 0.0
        %4021 = vmatprep.subr.mxu0 0.0
        %4022 = vmatpush1.msra.mxu0 0.0
        %4023 = vmatprep.subr.mxu0 0.0
        %4024 = vmatpush1.msra.mxu0 0.0
        %4025 = vmatprep.subr.mxu0 0.0
        %4026 = vmatpush1.msra.mxu0 0.0
        %4027 = vmatprep.subr.mxu0 0.0
        %4028 = vmatpush1.msra.mxu0 0.0
        %4029 = vmatprep.subr.mxu0 0.0
        %4030 = vmatpush1.msra.mxu0 0.0
        %4031 = vmatprep.mubr.f32.mxu0 0.0
        %4032 = vmatmul.mubr.f32.gmra.mrb[0].mxu0 %v2926
        %v4033 = vpop.f32.mrb[0].mxu0
        %v4034 = vadd.f32 %v737, %v4033
        %v4035 = vpop.f32.mrb[0].mxu0
        %v4036 = vadd.f32 %v737, %v4035
        %4037 = vdwg.mxu0
        %vm4038 = vcmp.gt.f32.partialorder %v3963, 0.0
        %vm4039 = vcmp.gt.f32.partialorder %v3965, 0.0
        %vm4040 = vcmp.gt.f32.partialorder %v4034, 0.0
        %vm4041 = vcmp.gt.f32.partialorder %v4036, 0.0
        %v4042 = vmul.f32 %v741, %v3963
        %v4043 = vmul.f32 %v741, %v3965
        %v4044 = vmul.f32 %v741, %v4034
        %v4045 = vmul.f32 %v741, %v4036
        %v4046 = vsel %vm4038, %v3963, %v4042
        %v4047 = vsel %vm4039, %v3965, %v4043
        %v4048 = vsel %vm4040, %v4034, %v4044
        %v4049 = vsel %vm4041, %v4036, %v4045
        %s4050 = scalar_lea.vmem %s700, 96 [#allocation4]
        %4051 = vst [vmem:[%s4050] sm:$0xff] %v4046
        %4052 = vst [vmem:[%s4050 + $0x8] sm:$0xff] %v4047
        %4053 = vst [vmem:[%s4050 + $0x10] sm:$0xff] %v4048
        %4054 = vst [vmem:[%s4050 + $0x18] sm:$0xff] %v4049
        %s4055 = sand.u32 %s124, 1
        %s4056 = scalar_lea.sflag [#allocation5], %s4055
        %s4057 = sand.u32 %s124, 1
        %s4058 = smul.addr %s4057, 128
        %s4059 = scalar_lea.vmem [#allocation4], %s4058
        // Predicated region
        $region141: #{temporal_block.1} parent=131 // pred_check
          %p4060 = pneg %p134
        $region142: #{temporal_block.1} parent=131 // pred_check_branch
          %4062 = sbr.rel (%p4060) target = $region144
        $region143: #{temporal_block.1} parent=131 // pred_region
          %s4063 = smul.u32 4, %s18
          %s4065 = ssub.s32 2048, 2048
          %4066 = vsyncadd %s4056, %s4065
          %s4067 = smul.addr %s4063, 128
          %s4068 = scalar_lea.hbm %s4, %s4067
          %s4069 = sshll.u32 %s4059, 4
          %s4070 = int_to_ptr.vmem [resolvable:$true] %s4069
          %4075 = dma.vmem_to_hbm [thread:$0]  %s4070, 2048, %s4068, %s4056, 512, 1024, 32
        $region144: #{temporal_block.1} parent=131 // pred_fallthru
          _
      $region132: #{temporal_block.1} parent=5 // pred_fallthru
        _
      %p4076 = scmp.le.s32.totalorder 2, %s13
      // Predicated region
      $region145: #{temporal_block.1} parent=5 // pred_check
        %p4077 = pneg %p4076
      $region146: #{temporal_block.1} parent=5 // pred_check_branch
        %4079 = sbr.rel (%p4077) target = $region148
      $region147: #{temporal_block.1} parent=5 // pred_region
        %s4080 = ssub.s32 %s13, 2
        // Predicated region
        $region149: #{temporal_block.1} parent=147 // pred_check
          %p4081 = pneg %p140
        $region150: #{temporal_block.1} parent=147 // pred_check_branch
          %4083 = sbr.rel (%p4081) target = $region152
        $region151: #{temporal_block.1} parent=147 // pred_region
          %s4084 = sand.u32 %s125, 1
          %s4085 = scalar_lea.sflag [#allocation5], %s4084
          %s4086 = sand.u32 %s125, 1
          %s4087 = smul.addr %s4086, 128
          %s4088 = scalar_lea.vmem [#allocation4], %s4087
          %4089 = dma.done %s4085, 2048
        $region152: #{temporal_block.1} parent=147 // pred_fallthru
          _
      $region148: #{temporal_block.1} parent=5 // pred_fallthru
        _
    $region6: #{temporal_block.1} parent=1 // loop_footer
      %s17 = sadd.s32 1, %s13
    $region7: #{temporal_block.1} parent=1 // loop_footer_branch
      %12 = sbr.rel target = $region3
    $region8: #{temporal_block.1} parent=1 // loop_exit
      _
    %4090 = vsyncpa [#allocation5], 1
    %s4091 = scalar_lea.sflag [#allocation5], 1
    %4092 = vsyncpa %s4091, 1

</llo_original>
